<compile_context>
chip_gen: v7x
topology: tpu7x:2x2x1
jax: 0.10.0
libtpu: 0.0.40
codegen_flags: <defaults>
</compile_context>

<pallas_src>
import jax
import jax.numpy as jnp
import numpy as np
from jax.experimental import pallas as pl
from jax.experimental.pallas import tpu as pltpu

LORDER = 20                    # fixed by ComplexUniDeepFsmn.__init__
PAD = 24                       # LORDER-1 = 19 rounded up to a sublane multiple
MATMUL_DTYPE = jnp.bfloat16    # MXU operand dtype; accumulation stays float32


# ------------------------------ Pallas kernel ------------------------------ #
def _complex_fsmn_kernel(x_ref,
                         w1a_ref, b1a_ref, w2ra_ref, w2ia_ref, cwa_ref,
                         w1b_ref, b1b_ref, w2rb_ref, w2ib_ref, cwb_ref,
                         out_ref, pad_ref):
    """Fused ComplexUniDeepFsmn forward for a block of BB batch elements.

    x_ref   : (BB, S, 2D)        lane-packed input  [x_re | x_im]
    w1*_ref : (D, 2H)            packed layer-1 weights [w1r | w1i] (bf16)
    b1*_ref : (1, 2H)            packed layer-1 bias  [b1r | b1i]   (f32)
    w2*_ref : (H, D)             projection weights (bf16), re / im separately
    cw*_ref : (LORDER, 4D)       causal FIR taps, identity tap folded in (f32)
    out_ref : (BB, S, 2D)        lane-packed output [real | imag]
    pad_ref : (BB, PAD+S, 4D)    f32 scratch: zero head + p1 body per element
    """
    BB, S, D2 = x_ref.shape
    D = D2 // 2
    D4 = 4 * D

    # Zero the causal-pad heads once per grid step (one store, all elements).
    pad_ref[:, 0:PAD, :] = jnp.zeros((BB, PAD, D4), jnp.float32)

    def fsmn_quad(a, b, w1_ref, b1_ref, w2r_ref, w2i_ref, cw_ref, pad):
        """a, b: (S, D) f32.  Returns (S, 4D) =
        [F'_R(a) | F'_I(a) | F'_R(b) | F'_I(b)], F'(z) = p1(z) + conv(p1(z))
        (the "+ p1" residual is folded into tap LORDER-1)."""
        H = w2r_ref.shape[0]
        w1 = w1_ref[...]                       # (D, 2H) bf16, zero-free
        b1 = b1_ref[...]                       # (1, 2H) f32
        fa = jnp.maximum(jnp.dot(a.astype(MATMUL_DTYPE), w1,
                                 preferred_element_type=jnp.float32) + b1, 0.0)
        fb = jnp.maximum(jnp.dot(b.astype(MATMUL_DTYPE), w1,
                                 preferred_element_type=jnp.float32) + b1, 0.0)
        w2r = w2r_ref[...]                     # (H, D) bf16
        w2i = w2i_ref[...]
        # Four zero-free projections stored straight into the lane-packed pad
        # slab (no concatenate, no block-diagonal zero MACs).
        pad[PAD:PAD + S, 0 * D:1 * D] = jnp.dot(
            fa[:, :H].astype(MATMUL_DTYPE), w2r, preferred_element_type=jnp.float32)
        pad[PAD:PAD + S, 1 * D:2 * D] = jnp.dot(
            fa[:, H:].astype(MATMUL_DTYPE), w2i, preferred_element_type=jnp.float32)
        pad[PAD:PAD + S, 2 * D:3 * D] = jnp.dot(
            fb[:, :H].astype(MATMUL_DTYPE), w2r, preferred_element_type=jnp.float32)
        pad[PAD:PAD + S, 3 * D:4 * D] = jnp.dot(
            fb[:, H:].astype(MATMUL_DTYPE), w2i, preferred_element_type=jnp.float32)

        # 20-tap causal FIR on the (S, 4D) slab: 4 interleaved partial
        # accumulators (breaks the serial add chain), each initialized with its
        # first term instead of zeros + add; taps loaded once.
        cw = cw_ref[...]                       # (LORDER, 4D) f32
        n_groups = 4
        partial = []
        for g in range(n_groups):
            acc_g = None
            for k in range(g, LORDER, n_groups):
                start = PAD - (LORDER - 1) + k
                term = cw[k:k + 1, :] * pad[start:start + S, :]
                acc_g = term if acc_g is None else acc_g + term
            partial.append(acc_g)
        return (partial[0] + partial[1]) + (partial[2] + partial[3])

    # Static unrolled loop over the BB elements of this block.  The elements'
    # chains are independent (separate pad slabs / input / output slices), so
    # the scheduler can hide one element's matmuls under the other's FIR.
    for bb in range(BB):
        pad = pad_ref.at[bb]                   # (PAD+S, 4D) ref view
        x_re = x_ref[bb, :, 0:D]               # (S, D) f32
        x_im = x_ref[bb, :, D:D2]

        # ---- layer 1: fsmn_re_L1 / fsmn_im_L1 on both complex parts ----
        c1 = fsmn_quad(x_re, x_im, w1a_ref, b1a_ref, w2ra_ref, w2ia_ref,
                       cwa_ref, pad)
        real_l1 = (x_re - x_im) + c1[:, 0:D] - c1[:, 3 * D:4 * D]
        imag_l1 = (x_re + x_im) + c1[:, 2 * D:3 * D] + c1[:, D:2 * D]

        # ---- layer 2: fsmn_re_L2 / fsmn_im_L2 on (real_L1, imag_L1) ----
        c2 = fsmn_quad(real_l1, imag_l1, w1b_ref, b1b_ref, w2rb_ref, w2ib_ref,
                       cwb_ref, pad)
        real = (real_l1 - imag_l1) + c2[:, 0:D] - c2[:, 3 * D:4 * D]
        imag = (real_l1 + imag_l1) + c2[:, 2 * D:3 * D] + c2[:, D:2 * D]

        # Two slab stores instead of concat + store.
        out_ref[bb, :, 0:D] = real.astype(out_ref.dtype)
        out_ref[bb, :, D:D2] = imag.astype(out_ref.dtype)


# -------------------------- Host-side weight packing ------------------------ #
def _pack_pair(p_re, p_im):
    """Pack an (re, im) pair of UniDeepFsmn params, zero-free."""
    w1r, b1r, w2r, cwr = p_re
    w1i, b1i, w2i, cwi = p_im
    w1p = jnp.concatenate([w1r, w1i], axis=1).astype(MATMUL_DTYPE)    # (D, 2H)
    b1p = jnp.concatenate([b1r, b1i], axis=1)                         # (1, 2H)
    cwq = jnp.concatenate([cwr, cwi, cwr, cwi], axis=1)               # (LORDER, 4D)
    cwq = cwq.at[LORDER - 1, :].add(1.0)       # fold "+ p1" into the current tap
    return (w1p, b1p, w2r.astype(MATMUL_DTYPE), w2i.astype(MATMUL_DTYPE), cwq)


def _const_spec(shape):
    zeros = (0,) * len(shape)
    return pl.BlockSpec(shape, lambda i, _z=zeros: _z)


def _fused_call(xt, q1, q2):
    B, S, D2 = xt.shape
    D = D2 // 2
    BB = 2 if B % 2 == 0 else 1                # two elements per body if possible

    # Size the scoped VMEM limit from the actual buffers (v7x: 64 MiB physical).
    weight_bytes = sum(int(np.prod(a.shape)) * a.dtype.itemsize
                       for a in (*q1, *q2))
    io_block_bytes = BB * S * D2 * 4
    scratch_bytes = BB * (PAD + S) * 4 * D * 4
    needed = 4 * io_block_bytes + 2 * weight_bytes + scratch_bytes
    vmem_limit = int(min(max(2 * needed, 32 * 1024 * 1024), 56 * 1024 * 1024))

    return pl.pallas_call(
        _complex_fsmn_kernel,
        out_shape=jax.ShapeDtypeStruct((B, S, D2), xt.dtype),
        grid_spec=pltpu.PrefetchScalarGridSpec(
            num_scalar_prefetch=0,
            grid=(B // BB,),
            in_specs=[pl.BlockSpec((BB, S, D2), lambda i: (i, 0, 0))]
                     + [_const_spec(a.shape) for a in (*q1, *q2)],
            out_specs=pl.BlockSpec((BB, S, D2), lambda i: (i, 0, 0)),
            scratch_shapes=[pltpu.VMEM((BB, PAD + S, 4 * D), jnp.float32)],
        ),
        compiler_params=pltpu.CompilerParams(
            dimension_semantics=("parallel",),
            vmem_limit_bytes=vmem_limit),
    )(xt, *q1, *q2)


# ------------------------------ Public wrapper ------------------------------ #
def complex_uni_deep_fsmn(x, params):
    """x: (b, c, h, T, 2) -> (b, c, h, T, 2), matching the torch module."""
    b, c, h, T, _ = x.shape
    D = c * h
    q1 = _pack_pair(params["re_L1"], params["im_L1"])
    q2 = _pack_pair(params["re_L2"], params["im_L2"])
    # single input transpose: (b, c*h, T, 2) -> (b, T, [re | im] * (c*h))
    xt = x.reshape(b, D, T, 2).transpose(0, 2, 3, 1).reshape(b, T, 2 * D)
    out = _fused_call(xt, q1, q2)                            # (b, T, 2D)
    # single output transpose back to (b, c, h, T, 2)
    out = out.reshape(b, T, 2, D).transpose(0, 3, 1, 2)      # (b, c*h, T, 2)
    return out.reshape(b, c, h, T, 2)


# ---------------------------- Pure-JAX reference ---------------------------- #
def _fsmn_ref(x, params):
    w1, b1, w2, cw = params
    f1 = jax.nn.relu(jnp.dot(x.astype(MATMUL_DTYPE), w1.astype(MATMUL_DTYPE),
                             preferred_element_type=jnp.float32) + b1)
    p1 = jnp.dot(f1.astype(MATMUL_DTYPE), w2.astype(MATMUL_DTYPE),
                 preferred_element_type=jnp.float32)
    B, S, Dd = p1.shape
    pad = jnp.concatenate([jnp.zeros((B, LORDER - 1, Dd), jnp.float32), p1], axis=1)
    conv = jnp.zeros_like(p1)
    for k in range(LORDER):
        conv = conv + cw[k][None, None, :] * pad[:, k:k + S, :]
    return x + p1 + conv


def complex_ref(x, params):
    b, c, h, T, d = x.shape
    xr = x.reshape(b, c * h, T, d).transpose(0, 2, 1, 3)
    x_re, x_im = xr[..., 0], xr[..., 1]
    R1, I1 = params["re_L1"], params["im_L1"]
    R2, I2 = params["re_L2"], params["im_L2"]
    real_L1 = _fsmn_ref(x_re, R1) - _fsmn_ref(x_im, I1)
    imag_L1 = _fsmn_ref(x_im, R1) + _fsmn_ref(x_re, I1)
    real = _fsmn_ref(real_L1, R2) - _fsmn_ref(imag_L1, I2)
    imag = _fsmn_ref(imag_L1, R2) + _fsmn_ref(real_L1, I2)
    out = jnp.stack([real, imag], axis=-1).transpose(0, 2, 1, 3)
    return out.reshape(b, c, h, T, d)


# --------------------------------- Param init -------------------------------- #
def init_fsmn_params(key, d_in, hidden, d_out):
    k1, k2, k3, k4 = jax.random.split(key, 4)
    w1 = jax.random.normal(k1, (d_in, hidden), jnp.float32) / np.sqrt(d_in)
    b1 = jax.random.normal(k2, (1, hidden), jnp.float32) * 0.01
    w2 = jax.random.normal(k3, (hidden, d_out), jnp.float32) / np.sqrt(hidden)
    cw = jax.random.normal(k4, (LORDER, d_out), jnp.float32) / np.sqrt(LORDER)
    return (w1, b1, w2, cw)


if __name__ == "__main__":
    # Residual inside UniDeepFsmn requires nIn == nHidden == nOut.
    b, c, h, T = 2, 4, 8, 8
    nIn = c * h          # 32 features seen by the FSMN layers
    nHidden = nIn        # 32

    key = jax.random.PRNGKey(0)
    kx, kp = jax.random.split(key)
    x = jax.random.normal(kx, (b, c, h, T, 2), jnp.float32)

    ks = jax.random.split(kp, 4)
    params = {
        "re_L1": init_fsmn_params(ks[0], nIn, nHidden, nHidden),
        "im_L1": init_fsmn_params(ks[1], nIn, nHidden, nHidden),
        "re_L2": init_fsmn_params(ks[2], nHidden, nHidden, nHidden),
        "im_L2": init_fsmn_params(ks[3], nHidden, nHidden, nHidden),
    }

    fwd = jax.jit(complex_uni_deep_fsmn)
    out = jax.block_until_ready(fwd(x, params))
    ref = jax.block_until_ready(complex_ref(x, params))

    assert out.shape == x.shape
    np.testing.assert_allclose(np.asarray(out), np.asarray(ref),
                               atol=5e-3, rtol=5e-3)
    print("KERNEL_OK")
</pallas_src>

<mosaic_0001>
module attributes {stable_mosaic.version = 11 : i64} {
  func.func @_complex_fsmn_kernel(%arg0: i32, %arg1: memref<2x8x64xf32, #tpu.memory_space<vmem>>, %arg2: memref<32x64xbf16, #tpu.memory_space<vmem>>, %arg3: memref<1x64xf32, #tpu.memory_space<vmem>>, %arg4: memref<32x32xbf16, #tpu.memory_space<vmem>>, %arg5: memref<32x32xbf16, #tpu.memory_space<vmem>>, %arg6: memref<20x128xf32, #tpu.memory_space<vmem>>, %arg7: memref<32x64xbf16, #tpu.memory_space<vmem>>, %arg8: memref<1x64xf32, #tpu.memory_space<vmem>>, %arg9: memref<32x32xbf16, #tpu.memory_space<vmem>>, %arg10: memref<32x32xbf16, #tpu.memory_space<vmem>>, %arg11: memref<20x128xf32, #tpu.memory_space<vmem>>, %arg12: memref<2x8x64xf32, #tpu.memory_space<vmem>>, %arg13: memref<2x32x128xf32, #tpu.memory_space<vmem>>) attributes {dimension_semantics = [#tpu.dimension_semantics<parallel>], iteration_bounds = array<i64: 1>, scalar_prefetch = 0 : i64, scratch_operands = 1 : i64, tpu.core_type = #tpu.core_type<tc>, window_params = [{transform_indices = @transform_0, window_bounds = array<i64: 2, 8, 64>}, {pipeline_mode = #tpu.pipeline_mode<synchronous>, transform_indices = @transform_1, window_bounds = array<i64: 32, 64>}, {pipeline_mode = #tpu.pipeline_mode<synchronous>, transform_indices = @transform_2, window_bounds = array<i64: 1, 64>}, {pipeline_mode = #tpu.pipeline_mode<synchronous>, transform_indices = @transform_3, window_bounds = array<i64: 32, 32>}, {pipeline_mode = #tpu.pipeline_mode<synchronous>, transform_indices = @transform_4, window_bounds = array<i64: 32, 32>}, {pipeline_mode = #tpu.pipeline_mode<synchronous>, transform_indices = @transform_5, window_bounds = array<i64: 20, 128>}, {pipeline_mode = #tpu.pipeline_mode<synchronous>, transform_indices = @transform_6, window_bounds = array<i64: 32, 64>}, {pipeline_mode = #tpu.pipeline_mode<synchronous>, transform_indices = @transform_7, window_bounds = array<i64: 1, 64>}, {pipeline_mode = #tpu.pipeline_mode<synchronous>, transform_indices = @transform_8, window_bounds = array<i64: 32, 32>}, {pipeline_mode = #tpu.pipeline_mode<synchronous>, transform_indices = @transform_9, window_bounds = array<i64: 32, 32>}, {pipeline_mode = #tpu.pipeline_mode<synchronous>, transform_indices = @transform_10, window_bounds = array<i64: 20, 128>}, {transform_indices = @transform_11, window_bounds = array<i64: 2, 8, 64>}]} {
    %cst = arith.constant 0.000000e+00 : f32
    %0 = vector.broadcast %cst : f32 to vector<2x24x128xf32>
    %c0 = arith.constant 0 : index
    %c0_0 = arith.constant 0 : index
    %c0_1 = arith.constant 0 : index
    %1 = vector.load %arg13[%c0, %c0_0, %c0_1] : memref<2x32x128xf32, #tpu.memory_space<vmem>>, vector<2x24x128xf32>
    tpu.vector_store %arg13[%c0, %c0_0, %c0_1], %0 {strides = array<i32>} : memref<2x32x128xf32, #tpu.memory_space<vmem>>, vector<2x24x128xf32>,
    %c0_2 = arith.constant 0 : index
    %c0_3 = arith.constant 0 : index
    %c0_4 = arith.constant 0 : index
    %2 = vector.load %arg1[%c0_2, %c0_3, %c0_4] : memref<2x8x64xf32, #tpu.memory_space<vmem>>, vector<1x8x32xf32>
    %3 = vector.shape_cast %2 : vector<1x8x32xf32> to vector<8x32xf32>
    %c0_5 = arith.constant 0 : index
    %c0_6 = arith.constant 0 : index
    %c32 = arith.constant 32 : index
    %4 = vector.load %arg1[%c0_5, %c0_6, %c32] : memref<2x8x64xf32, #tpu.memory_space<vmem>>, vector<1x8x32xf32>
    %5 = vector.shape_cast %4 : vector<1x8x32xf32> to vector<8x32xf32>
    %c0_7 = arith.constant 0 : index
    %c0_8 = arith.constant 0 : index
    %6 = vector.load %arg2[%c0_7, %c0_8] : memref<32x64xbf16, #tpu.memory_space<vmem>>, vector<32x64xbf16>
    %c0_9 = arith.constant 0 : index
    %c0_10 = arith.constant 0 : index
    %7 = vector.load %arg3[%c0_9, %c0_10] : memref<1x64xf32, #tpu.memory_space<vmem>>, vector<1x64xf32>
    %8 = arith.truncf %3 : vector<8x32xf32> to vector<8x32xbf16>
    %cst_11 = arith.constant dense<0.000000e+00> : vector<8x64xf32>
    %9 = tpu.matmul %8, %6, %cst_11 {dimension_numbers = #tpu.dot_dimension_numbers<[1], [0], [0], [1], [0, 0, 1, 1], [], []>} : vector<8x32xbf16>, vector<32x64xbf16>, vector<8x64xf32> -> vector<8x64xf32>
    %10 = vector.broadcast %7 : vector<1x64xf32> to vector<8x64xf32>
    %11 = arith.addf %9, %10 : vector<8x64xf32>
    %cst_12 = arith.constant 0.000000e+00 : f32
    %12 = vector.broadcast %cst_12 : f32 to vector<8x64xf32>
    %13 = arith.maximumf %11, %12 : vector<8x64xf32>
    %14 = arith.truncf %5 : vector<8x32xf32> to vector<8x32xbf16>
    %cst_13 = arith.constant dense<0.000000e+00> : vector<8x64xf32>
    %15 = tpu.matmul %14, %6, %cst_13 {dimension_numbers = #tpu.dot_dimension_numbers<[1], [0], [0], [1], [0, 0, 1, 1], [], []>} : vector<8x32xbf16>, vector<32x64xbf16>, vector<8x64xf32> -> vector<8x64xf32>
    %16 = vector.broadcast %7 : vector<1x64xf32> to vector<8x64xf32>
    %17 = arith.addf %15, %16 : vector<8x64xf32>
    %cst_14 = arith.constant 0.000000e+00 : f32
    %18 = vector.broadcast %cst_14 : f32 to vector<8x64xf32>
    %19 = arith.maximumf %17, %18 : vector<8x64xf32>
    %c0_15 = arith.constant 0 : index
    %c0_16 = arith.constant 0 : index
    %20 = vector.load %arg4[%c0_15, %c0_16] : memref<32x32xbf16, #tpu.memory_space<vmem>>, vector<32x32xbf16>
    %c0_17 = arith.constant 0 : index
    %c0_18 = arith.constant 0 : index
    %21 = vector.load %arg5[%c0_17, %c0_18] : memref<32x32xbf16, #tpu.memory_space<vmem>>, vector<32x32xbf16>
    %22 = vector.extract_strided_slice %13 {offsets = [0, 0], sizes = [8, 32], strides = [1, 1]} : vector<8x64xf32> to vector<8x32xf32>
    %23 = arith.truncf %22 : vector<8x32xf32> to vector<8x32xbf16>
    %cst_19 = arith.constant dense<0.000000e+00> : vector<8x32xf32>
    %24 = tpu.matmul %23, %20, %cst_19 {dimension_numbers = #tpu.dot_dimension_numbers<[1], [0], [0], [1], [0, 0, 1, 1], [], []>} : vector<8x32xbf16>, vector<32x32xbf16>, vector<8x32xf32> -> vector<8x32xf32>
    %c0_i32 = arith.constant 0 : i32
    %c0_i32_20 = arith.constant 0 : i32
    %c0_i32_21 = arith.constant 0 : i32
    %25 = tpu.memref_slice %arg13[%c0_i32, %c0_i32_20, %c0_i32_21] : memref<2x32x128xf32, #tpu.memory_space<vmem>> -> memref<1x32x128xf32, #tpu.memory_space<vmem>>
    %26 = tpu.memref_squeeze %25 : memref<1x32x128xf32, #tpu.memory_space<vmem>> -> memref<32x128xf32, #tpu.memory_space<vmem>>
    %c24 = arith.constant 24 : index
    %c0_22 = arith.constant 0 : index
    %27 = vector.load %26[%c24, %c0_22] : memref<32x128xf32, #tpu.memory_space<vmem>>, vector<8x32xf32>
    tpu.vector_store %26[%c24, %c0_22], %24 {strides = array<i32>} : memref<32x128xf32, #tpu.memory_space<vmem>>, vector<8x32xf32>,
    %28 = vector.extract_strided_slice %13 {offsets = [0, 32], sizes = [8, 32], strides = [1, 1]} : vector<8x64xf32> to vector<8x32xf32>
    %29 = arith.truncf %28 : vector<8x32xf32> to vector<8x32xbf16>
    %cst_23 = arith.constant dense<0.000000e+00> : vector<8x32xf32>
    %30 = tpu.matmul %29, %21, %cst_23 {dimension_numbers = #tpu.dot_dimension_numbers<[1], [0], [0], [1], [0, 0, 1, 1], [], []>} : vector<8x32xbf16>, vector<32x32xbf16>, vector<8x32xf32> -> vector<8x32xf32>
    %c0_i32_24 = arith.constant 0 : i32
    %c0_i32_25 = arith.constant 0 : i32
    %c0_i32_26 = arith.constant 0 : i32
    %31 = tpu.memref_slice %arg13[%c0_i32_24, %c0_i32_25, %c0_i32_26] : memref<2x32x128xf32, #tpu.memory_space<vmem>> -> memref<1x32x128xf32, #tpu.memory_space<vmem>>
    %32 = tpu.memref_squeeze %31 : memref<1x32x128xf32, #tpu.memory_space<vmem>> -> memref<32x128xf32, #tpu.memory_space<vmem>>
    %c24_27 = arith.constant 24 : index
    %c32_28 = arith.constant 32 : index
    %33 = vector.load %32[%c24_27, %c32_28] : memref<32x128xf32, #tpu.memory_space<vmem>>, vector<8x32xf32>
    tpu.vector_store %32[%c24_27, %c32_28], %30 {strides = array<i32>} : memref<32x128xf32, #tpu.memory_space<vmem>>, vector<8x32xf32>,
    %34 = vector.extract_strided_slice %19 {offsets = [0, 0], sizes = [8, 32], strides = [1, 1]} : vector<8x64xf32> to vector<8x32xf32>
    %35 = arith.truncf %34 : vector<8x32xf32> to vector<8x32xbf16>
    %cst_29 = arith.constant dense<0.000000e+00> : vector<8x32xf32>
    %36 = tpu.matmul %35, %20, %cst_29 {dimension_numbers = #tpu.dot_dimension_numbers<[1], [0], [0], [1], [0, 0, 1, 1], [], []>} : vector<8x32xbf16>, vector<32x32xbf16>, vector<8x32xf32> -> vector<8x32xf32>
    %c0_i32_30 = arith.constant 0 : i32
    %c0_i32_31 = arith.constant 0 : i32
    %c0_i32_32 = arith.constant 0 : i32
    %37 = tpu.memref_slice %arg13[%c0_i32_30, %c0_i32_31, %c0_i32_32] : memref<2x32x128xf32, #tpu.memory_space<vmem>> -> memref<1x32x128xf32, #tpu.memory_space<vmem>>
    %38 = tpu.memref_squeeze %37 : memref<1x32x128xf32, #tpu.memory_space<vmem>> -> memref<32x128xf32, #tpu.memory_space<vmem>>
    %c24_33 = arith.constant 24 : index
    %c64 = arith.constant 64 : index
    %39 = vector.load %38[%c24_33, %c64] : memref<32x128xf32, #tpu.memory_space<vmem>>, vector<8x32xf32>
    tpu.vector_store %38[%c24_33, %c64], %36 {strides = array<i32>} : memref<32x128xf32, #tpu.memory_space<vmem>>, vector<8x32xf32>,
    %40 = vector.extract_strided_slice %19 {offsets = [0, 32], sizes = [8, 32], strides = [1, 1]} : vector<8x64xf32> to vector<8x32xf32>
    %41 = arith.truncf %40 : vector<8x32xf32> to vector<8x32xbf16>
    %cst_34 = arith.constant dense<0.000000e+00> : vector<8x32xf32>
    %42 = tpu.matmul %41, %21, %cst_34 {dimension_numbers = #tpu.dot_dimension_numbers<[1], [0], [0], [1], [0, 0, 1, 1], [], []>} : vector<8x32xbf16>, vector<32x32xbf16>, vector<8x32xf32> -> vector<8x32xf32>
    %c0_i32_35 = arith.constant 0 : i32
    %c0_i32_36 = arith.constant 0 : i32
    %c0_i32_37 = arith.constant 0 : i32
    %43 = tpu.memref_slice %arg13[%c0_i32_35, %c0_i32_36, %c0_i32_37] : memref<2x32x128xf32, #tpu.memory_space<vmem>> -> memref<1x32x128xf32, #tpu.memory_space<vmem>>
    %44 = tpu.memref_squeeze %43 : memref<1x32x128xf32, #tpu.memory_space<vmem>> -> memref<32x128xf32, #tpu.memory_space<vmem>>
    %c24_38 = arith.constant 24 : index
    %c96 = arith.constant 96 : index
    %45 = vector.load %44[%c24_38, %c96] : memref<32x128xf32, #tpu.memory_space<vmem>>, vector<8x32xf32>
    tpu.vector_store %44[%c24_38, %c96], %42 {strides = array<i32>} : memref<32x128xf32, #tpu.memory_space<vmem>>, vector<8x32xf32>,
    %c0_39 = arith.constant 0 : index
    %c0_40 = arith.constant 0 : index
    %46 = vector.load %arg6[%c0_39, %c0_40] : memref<20x128xf32, #tpu.memory_space<vmem>>, vector<20x128xf32>
    %47 = vector.extract_strided_slice %46 {offsets = [0, 0], sizes = [1, 128], strides = [1, 1]} : vector<20x128xf32> to vector<1x128xf32>
    %c0_i32_41 = arith.constant 0 : i32
    %c0_i32_42 = arith.constant 0 : i32
    %c0_i32_43 = arith.constant 0 : i32
    %48 = tpu.memref_slice %arg13[%c0_i32_41, %c0_i32_42, %c0_i32_43] : memref<2x32x128xf32, #tpu.memory_space<vmem>> -> memref<1x32x128xf32, #tpu.memory_space<vmem>>
    %49 = tpu.memref_squeeze %48 : memref<1x32x128xf32, #tpu.memory_space<vmem>> -> memref<32x128xf32, #tpu.memory_space<vmem>>
    %c5 = arith.constant 5 : index
    %c0_44 = arith.constant 0 : index
    %50 = vector.load %49[%c5, %c0_44] : memref<32x128xf32, #tpu.memory_space<vmem>>, vector<8x128xf32>
    %51 = vector.broadcast %47 : vector<1x128xf32> to vector<8x128xf32>
    %52 = arith.mulf %51, %50 : vector<8x128xf32>
    %53 = vector.extract_strided_slice %46 {offsets = [4, 0], sizes = [1, 128], strides = [1, 1]} : vector<20x128xf32> to vector<1x128xf32>
    %c0_i32_45 = arith.constant 0 : i32
    %c0_i32_46 = arith.constant 0 : i32
    %c0_i32_47 = arith.constant 0 : i32
    %54 = tpu.memref_slice %arg13[%c0_i32_45, %c0_i32_46, %c0_i32_47] : memref<2x32x128xf32, #tpu.memory_space<vmem>> -> memref<1x32x128xf32, #tpu.memory_space<vmem>>
    %55 = tpu.memref_squeeze %54 : memref<1x32x128xf32, #tpu.memory_space<vmem>> -> memref<32x128xf32, #tpu.memory_space<vmem>>
    %c9 = arith.constant 9 : index
    %c0_48 = arith.constant 0 : index
    %56 = vector.load %55[%c9, %c0_48] : memref<32x128xf32, #tpu.memory_space<vmem>>, vector<8x128xf32>
    %57 = vector.broadcast %53 : vector<1x128xf32> to vector<8x128xf32>
    %58 = arith.mulf %57, %56 : vector<8x128xf32>
    %59 = arith.addf %52, %58 : vector<8x128xf32>
    %60 = vector.extract_strided_slice %46 {offsets = [8, 0], sizes = [1, 128], strides = [1, 1]} : vector<20x128xf32> to vector<1x128xf32>
    %c0_i32_49 = arith.constant 0 : i32
    %c0_i32_50 = arith.constant 0 : i32
    %c0_i32_51 = arith.constant 0 : i32
    %61 = tpu.memref_slice %arg13[%c0_i32_49, %c0_i32_50, %c0_i32_51] : memref<2x32x128xf32, #tpu.memory_space<vmem>> -> memref<1x32x128xf32, #tpu.memory_space<vmem>>
    %62 = tpu.memref_squeeze %61 : memref<1x32x128xf32, #tpu.memory_space<vmem>> -> memref<32x128xf32, #tpu.memory_space<vmem>>
    %c13 = arith.constant 13 : index
    %c0_52 = arith.constant 0 : index
    %63 = vector.load %62[%c13, %c0_52] : memref<32x128xf32, #tpu.memory_space<vmem>>, vector<8x128xf32>
    %64 = vector.broadcast %60 : vector<1x128xf32> to vector<8x128xf32>
    %65 = arith.mulf %64, %63 : vector<8x128xf32>
    %66 = arith.addf %59, %65 : vector<8x128xf32>
    %67 = vector.extract_strided_slice %46 {offsets = [12, 0], sizes = [1, 128], strides = [1, 1]} : vector<20x128xf32> to vector<1x128xf32>
    %c0_i32_53 = arith.constant 0 : i32
    %c0_i32_54 = arith.constant 0 : i32
    %c0_i32_55 = arith.constant 0 : i32
    %68 = tpu.memref_slice %arg13[%c0_i32_53, %c0_i32_54, %c0_i32_55] : memref<2x32x128xf32, #tpu.memory_space<vmem>> -> memref<1x32x128xf32, #tpu.memory_space<vmem>>
    %69 = tpu.memref_squeeze %68 : memref<1x32x128xf32, #tpu.memory_space<vmem>> -> memref<32x128xf32, #tpu.memory_space<vmem>>
    %c17 = arith.constant 17 : index
    %c0_56 = arith.constant 0 : index
    %70 = vector.load %69[%c17, %c0_56] : memref<32x128xf32, #tpu.memory_space<vmem>>, vector<8x128xf32>
    %71 = vector.broadcast %67 : vector<1x128xf32> to vector<8x128xf32>
    %72 = arith.mulf %71, %70 : vector<8x128xf32>
    %73 = arith.addf %66, %72 : vector<8x128xf32>
    %74 = vector.extract_strided_slice %46 {offsets = [16, 0], sizes = [1, 128], strides = [1, 1]} : vector<20x128xf32> to vector<1x128xf32>
    %c0_i32_57 = arith.constant 0 : i32
    %c0_i32_58 = arith.constant 0 : i32
    %c0_i32_59 = arith.constant 0 : i32
    %75 = tpu.memref_slice %arg13[%c0_i32_57, %c0_i32_58, %c0_i32_59] : memref<2x32x128xf32, #tpu.memory_space<vmem>> -> memref<1x32x128xf32, #tpu.memory_space<vmem>>
    %76 = tpu.memref_squeeze %75 : memref<1x32x128xf32, #tpu.memory_space<vmem>> -> memref<32x128xf32, #tpu.memory_space<vmem>>
    %c21 = arith.constant 21 : index
    %c0_60 = arith.constant 0 : index
    %77 = vector.load %76[%c21, %c0_60] : memref<32x128xf32, #tpu.memory_space<vmem>>, vector<8x128xf32>
    %78 = vector.broadcast %74 : vector<1x128xf32> to vector<8x128xf32>
    %79 = arith.mulf %78, %77 : vector<8x128xf32>
    %80 = arith.addf %73, %79 : vector<8x128xf32>
    %81 = vector.extract_strided_slice %46 {offsets = [1, 0], sizes = [1, 128], strides = [1, 1]} : vector<20x128xf32> to vector<1x128xf32>
    %c0_i32_61 = arith.constant 0 : i32
    %c0_i32_62 = arith.constant 0 : i32
    %c0_i32_63 = arith.constant 0 : i32
    %82 = tpu.memref_slice %arg13[%c0_i32_61, %c0_i32_62, %c0_i32_63] : memref<2x32x128xf32, #tpu.memory_space<vmem>> -> memref<1x32x128xf32, #tpu.memory_space<vmem>>
    %83 = tpu.memref_squeeze %82 : memref<1x32x128xf32, #tpu.memory_space<vmem>> -> memref<32x128xf32, #tpu.memory_space<vmem>>
    %c6 = arith.constant 6 : index
    %c0_64 = arith.constant 0 : index
    %84 = vector.load %83[%c6, %c0_64] : memref<32x128xf32, #tpu.memory_space<vmem>>, vector<8x128xf32>
    %85 = vector.broadcast %81 : vector<1x128xf32> to vector<8x128xf32>
    %86 = arith.mulf %85, %84 : vector<8x128xf32>
    %87 = vector.extract_strided_slice %46 {offsets = [5, 0], sizes = [1, 128], strides = [1, 1]} : vector<20x128xf32> to vector<1x128xf32>
    %c0_i32_65 = arith.constant 0 : i32
    %c0_i32_66 = arith.constant 0 : i32
    %c0_i32_67 = arith.constant 0 : i32
    %88 = tpu.memref_slice %arg13[%c0_i32_65, %c0_i32_66, %c0_i32_67] : memref<2x32x128xf32, #tpu.memory_space<vmem>> -> memref<1x32x128xf32, #tpu.memory_space<vmem>>
    %89 = tpu.memref_squeeze %88 : memref<1x32x128xf32, #tpu.memory_space<vmem>> -> memref<32x128xf32, #tpu.memory_space<vmem>>
    %c10 = arith.constant 10 : index
    %c0_68 = arith.constant 0 : index
    %90 = vector.load %89[%c10, %c0_68] : memref<32x128xf32, #tpu.memory_space<vmem>>, vector<8x128xf32>
    %91 = vector.broadcast %87 : vector<1x128xf32> to vector<8x128xf32>
    %92 = arith.mulf %91, %90 : vector<8x128xf32>
    %93 = arith.addf %86, %92 : vector<8x128xf32>
    %94 = vector.extract_strided_slice %46 {offsets = [9, 0], sizes = [1, 128], strides = [1, 1]} : vector<20x128xf32> to vector<1x128xf32>
    %c0_i32_69 = arith.constant 0 : i32
    %c0_i32_70 = arith.constant 0 : i32
    %c0_i32_71 = arith.constant 0 : i32
    %95 = tpu.memref_slice %arg13[%c0_i32_69, %c0_i32_70, %c0_i32_71] : memref<2x32x128xf32, #tpu.memory_space<vmem>> -> memref<1x32x128xf32, #tpu.memory_space<vmem>>
    %96 = tpu.memref_squeeze %95 : memref<1x32x128xf32, #tpu.memory_space<vmem>> -> memref<32x128xf32, #tpu.memory_space<vmem>>
    %c14 = arith.constant 14 : index
    %c0_72 = arith.constant 0 : index
    %97 = vector.load %96[%c14, %c0_72] : memref<32x128xf32, #tpu.memory_space<vmem>>, vector<8x128xf32>
    %98 = vector.broadcast %94 : vector<1x128xf32> to vector<8x128xf32>
    %99 = arith.mulf %98, %97 : vector<8x128xf32>
    %100 = arith.addf %93, %99 : vector<8x128xf32>
    %101 = vector.extract_strided_slice %46 {offsets = [13, 0], sizes = [1, 128], strides = [1, 1]} : vector<20x128xf32> to vector<1x128xf32>
    %c0_i32_73 = arith.constant 0 : i32
    %c0_i32_74 = arith.constant 0 : i32
    %c0_i32_75 = arith.constant 0 : i32
    %102 = tpu.memref_slice %arg13[%c0_i32_73, %c0_i32_74, %c0_i32_75] : memref<2x32x128xf32, #tpu.memory_space<vmem>> -> memref<1x32x128xf32, #tpu.memory_space<vmem>>
    %103 = tpu.memref_squeeze %102 : memref<1x32x128xf32, #tpu.memory_space<vmem>> -> memref<32x128xf32, #tpu.memory_space<vmem>>
    %c18 = arith.constant 18 : index
    %c0_76 = arith.constant 0 : index
    %104 = vector.load %103[%c18, %c0_76] : memref<32x128xf32, #tpu.memory_space<vmem>>, vector<8x128xf32>
    %105 = vector.broadcast %101 : vector<1x128xf32> to vector<8x128xf32>
    %106 = arith.mulf %105, %104 : vector<8x128xf32>
    %107 = arith.addf %100, %106 : vector<8x128xf32>
    %108 = vector.extract_strided_slice %46 {offsets = [17, 0], sizes = [1, 128], strides = [1, 1]} : vector<20x128xf32> to vector<1x128xf32>
    %c0_i32_77 = arith.constant 0 : i32
    %c0_i32_78 = arith.constant 0 : i32
    %c0_i32_79 = arith.constant 0 : i32
    %109 = tpu.memref_slice %arg13[%c0_i32_77, %c0_i32_78, %c0_i32_79] : memref<2x32x128xf32, #tpu.memory_space<vmem>> -> memref<1x32x128xf32, #tpu.memory_space<vmem>>
    %110 = tpu.memref_squeeze %109 : memref<1x32x128xf32, #tpu.memory_space<vmem>> -> memref<32x128xf32, #tpu.memory_space<vmem>>
    %c22 = arith.constant 22 : index
    %c0_80 = arith.constant 0 : index
    %111 = vector.load %110[%c22, %c0_80] : memref<32x128xf32, #tpu.memory_space<vmem>>, vector<8x128xf32>
    %112 = vector.broadcast %108 : vector<1x128xf32> to vector<8x128xf32>
    %113 = arith.mulf %112, %111 : vector<8x128xf32>
    %114 = arith.addf %107, %113 : vector<8x128xf32>
    %115 = vector.extract_strided_slice %46 {offsets = [2, 0], sizes = [1, 128], strides = [1, 1]} : vector<20x128xf32> to vector<1x128xf32>
    %c0_i32_81 = arith.constant 0 : i32
    %c0_i32_82 = arith.constant 0 : i32
    %c0_i32_83 = arith.constant 0 : i32
    %116 = tpu.memref_slice %arg13[%c0_i32_81, %c0_i32_82, %c0_i32_83] : memref<2x32x128xf32, #tpu.memory_space<vmem>> -> memref<1x32x128xf32, #tpu.memory_space<vmem>>
    %117 = tpu.memref_squeeze %116 : memref<1x32x128xf32, #tpu.memory_space<vmem>> -> memref<32x128xf32, #tpu.memory_space<vmem>>
    %c7 = arith.constant 7 : index
    %c0_84 = arith.constant 0 : index
    %118 = vector.load %117[%c7, %c0_84] : memref<32x128xf32, #tpu.memory_space<vmem>>, vector<8x128xf32>
    %119 = vector.broadcast %115 : vector<1x128xf32> to vector<8x128xf32>
    %120 = arith.mulf %119, %118 : vector<8x128xf32>
    %121 = vector.extract_strided_slice %46 {offsets = [6, 0], sizes = [1, 128], strides = [1, 1]} : vector<20x128xf32> to vector<1x128xf32>
    %c0_i32_85 = arith.constant 0 : i32
    %c0_i32_86 = arith.constant 0 : i32
    %c0_i32_87 = arith.constant 0 : i32
    %122 = tpu.memref_slice %arg13[%c0_i32_85, %c0_i32_86, %c0_i32_87] : memref<2x32x128xf32, #tpu.memory_space<vmem>> -> memref<1x32x128xf32, #tpu.memory_space<vmem>>
    %123 = tpu.memref_squeeze %122 : memref<1x32x128xf32, #tpu.memory_space<vmem>> -> memref<32x128xf32, #tpu.memory_space<vmem>>
    %c11 = arith.constant 11 : index
    %c0_88 = arith.constant 0 : index
    %124 = vector.load %123[%c11, %c0_88] : memref<32x128xf32, #tpu.memory_space<vmem>>, vector<8x128xf32>
    %125 = vector.broadcast %121 : vector<1x128xf32> to vector<8x128xf32>
    %126 = arith.mulf %125, %124 : vector<8x128xf32>
    %127 = arith.addf %120, %126 : vector<8x128xf32>
    %128 = vector.extract_strided_slice %46 {offsets = [10, 0], sizes = [1, 128], strides = [1, 1]} : vector<20x128xf32> to vector<1x128xf32>
    %c0_i32_89 = arith.constant 0 : i32
    %c0_i32_90 = arith.constant 0 : i32
    %c0_i32_91 = arith.constant 0 : i32
    %129 = tpu.memref_slice %arg13[%c0_i32_89, %c0_i32_90, %c0_i32_91] : memref<2x32x128xf32, #tpu.memory_space<vmem>> -> memref<1x32x128xf32, #tpu.memory_space<vmem>>
    %130 = tpu.memref_squeeze %129 : memref<1x32x128xf32, #tpu.memory_space<vmem>> -> memref<32x128xf32, #tpu.memory_space<vmem>>
    %c15 = arith.constant 15 : index
    %c0_92 = arith.constant 0 : index
    %131 = vector.load %130[%c15, %c0_92] : memref<32x128xf32, #tpu.memory_space<vmem>>, vector<8x128xf32>
    %132 = vector.broadcast %128 : vector<1x128xf32> to vector<8x128xf32>
    %133 = arith.mulf %132, %131 : vector<8x128xf32>
    %134 = arith.addf %127, %133 : vector<8x128xf32>
    %135 = vector.extract_strided_slice %46 {offsets = [14, 0], sizes = [1, 128], strides = [1, 1]} : vector<20x128xf32> to vector<1x128xf32>
    %c0_i32_93 = arith.constant 0 : i32
    %c0_i32_94 = arith.constant 0 : i32
    %c0_i32_95 = arith.constant 0 : i32
    %136 = tpu.memref_slice %arg13[%c0_i32_93, %c0_i32_94, %c0_i32_95] : memref<2x32x128xf32, #tpu.memory_space<vmem>> -> memref<1x32x128xf32, #tpu.memory_space<vmem>>
    %137 = tpu.memref_squeeze %136 : memref<1x32x128xf32, #tpu.memory_space<vmem>> -> memref<32x128xf32, #tpu.memory_space<vmem>>
    %c19 = arith.constant 19 : index
    %c0_96 = arith.constant 0 : index
    %138 = vector.load %137[%c19, %c0_96] : memref<32x128xf32, #tpu.memory_space<vmem>>, vector<8x128xf32>
    %139 = vector.broadcast %135 : vector<1x128xf32> to vector<8x128xf32>
    %140 = arith.mulf %139, %138 : vector<8x128xf32>
    %141 = arith.addf %134, %140 : vector<8x128xf32>
    %142 = vector.extract_strided_slice %46 {offsets = [18, 0], sizes = [1, 128], strides = [1, 1]} : vector<20x128xf32> to vector<1x128xf32>
    %c0_i32_97 = arith.constant 0 : i32
    %c0_i32_98 = arith.constant 0 : i32
    %c0_i32_99 = arith.constant 0 : i32
    %143 = tpu.memref_slice %arg13[%c0_i32_97, %c0_i32_98, %c0_i32_99] : memref<2x32x128xf32, #tpu.memory_space<vmem>> -> memref<1x32x128xf32, #tpu.memory_space<vmem>>
    %144 = tpu.memref_squeeze %143 : memref<1x32x128xf32, #tpu.memory_space<vmem>> -> memref<32x128xf32, #tpu.memory_space<vmem>>
    %c23 = arith.constant 23 : index
    %c0_100 = arith.constant 0 : index
    %145 = vector.load %144[%c23, %c0_100] : memref<32x128xf32, #tpu.memory_space<vmem>>, vector<8x128xf32>
    %146 = vector.broadcast %142 : vector<1x128xf32> to vector<8x128xf32>
    %147 = arith.mulf %146, %145 : vector<8x128xf32>
    %148 = arith.addf %141, %147 : vector<8x128xf32>
    %149 = vector.extract_strided_slice %46 {offsets = [3, 0], sizes = [1, 128], strides = [1, 1]} : vector<20x128xf32> to vector<1x128xf32>
    %c0_i32_101 = arith.constant 0 : i32
    %c0_i32_102 = arith.constant 0 : i32
    %c0_i32_103 = arith.constant 0 : i32
    %150 = tpu.memref_slice %arg13[%c0_i32_101, %c0_i32_102, %c0_i32_103] : memref<2x32x128xf32, #tpu.memory_space<vmem>> -> memref<1x32x128xf32, #tpu.memory_space<vmem>>
    %151 = tpu.memref_squeeze %150 : memref<1x32x128xf32, #tpu.memory_space<vmem>> -> memref<32x128xf32, #tpu.memory_space<vmem>>
    %c8 = arith.constant 8 : index
    %c0_104 = arith.constant 0 : index
    %152 = vector.load %151[%c8, %c0_104] : memref<32x128xf32, #tpu.memory_space<vmem>>, vector<8x128xf32>
    %153 = vector.broadcast %149 : vector<1x128xf32> to vector<8x128xf32>
    %154 = arith.mulf %153, %152 : vector<8x128xf32>
    %155 = vector.extract_strided_slice %46 {offsets = [7, 0], sizes = [1, 128], strides = [1, 1]} : vector<20x128xf32> to vector<1x128xf32>
    %c0_i32_105 = arith.constant 0 : i32
    %c0_i32_106 = arith.constant 0 : i32
    %c0_i32_107 = arith.constant 0 : i32
    %156 = tpu.memref_slice %arg13[%c0_i32_105, %c0_i32_106, %c0_i32_107] : memref<2x32x128xf32, #tpu.memory_space<vmem>> -> memref<1x32x128xf32, #tpu.memory_space<vmem>>
    %157 = tpu.memref_squeeze %156 : memref<1x32x128xf32, #tpu.memory_space<vmem>> -> memref<32x128xf32, #tpu.memory_space<vmem>>
    %c12 = arith.constant 12 : index
    %c0_108 = arith.constant 0 : index
    %158 = vector.load %157[%c12, %c0_108] : memref<32x128xf32, #tpu.memory_space<vmem>>, vector<8x128xf32>
    %159 = vector.broadcast %155 : vector<1x128xf32> to vector<8x128xf32>
    %160 = arith.mulf %159, %158 : vector<8x128xf32>
    %161 = arith.addf %154, %160 : vector<8x128xf32>
    %162 = vector.extract_strided_slice %46 {offsets = [11, 0], sizes = [1, 128], strides = [1, 1]} : vector<20x128xf32> to vector<1x128xf32>
    %c0_i32_109 = arith.constant 0 : i32
    %c0_i32_110 = arith.constant 0 : i32
    %c0_i32_111 = arith.constant 0 : i32
    %163 = tpu.memref_slice %arg13[%c0_i32_109, %c0_i32_110, %c0_i32_111] : memref<2x32x128xf32, #tpu.memory_space<vmem>> -> memref<1x32x128xf32, #tpu.memory_space<vmem>>
    %164 = tpu.memref_squeeze %163 : memref<1x32x128xf32, #tpu.memory_space<vmem>> -> memref<32x128xf32, #tpu.memory_space<vmem>>
    %c16 = arith.constant 16 : index
    %c0_112 = arith.constant 0 : index
    %165 = vector.load %164[%c16, %c0_112] : memref<32x128xf32, #tpu.memory_space<vmem>>, vector<8x128xf32>
    %166 = vector.broadcast %162 : vector<1x128xf32> to vector<8x128xf32>
    %167 = arith.mulf %166, %165 : vector<8x128xf32>
    %168 = arith.addf %161, %167 : vector<8x128xf32>
    %169 = vector.extract_strided_slice %46 {offsets = [15, 0], sizes = [1, 128], strides = [1, 1]} : vector<20x128xf32> to vector<1x128xf32>
    %c0_i32_113 = arith.constant 0 : i32
    %c0_i32_114 = arith.constant 0 : i32
    %c0_i32_115 = arith.constant 0 : i32
    %170 = tpu.memref_slice %arg13[%c0_i32_113, %c0_i32_114, %c0_i32_115] : memref<2x32x128xf32, #tpu.memory_space<vmem>> -> memref<1x32x128xf32, #tpu.memory_space<vmem>>
    %171 = tpu.memref_squeeze %170 : memref<1x32x128xf32, #tpu.memory_space<vmem>> -> memref<32x128xf32, #tpu.memory_space<vmem>>
    %c20 = arith.constant 20 : index
    %c0_116 = arith.constant 0 : index
    %172 = vector.load %171[%c20, %c0_116] : memref<32x128xf32, #tpu.memory_space<vmem>>, vector<8x128xf32>
    %173 = vector.broadcast %169 : vector<1x128xf32> to vector<8x128xf32>
    %174 = arith.mulf %173, %172 : vector<8x128xf32>
    %175 = arith.addf %168, %174 : vector<8x128xf32>
    %176 = vector.extract_strided_slice %46 {offsets = [19, 0], sizes = [1, 128], strides = [1, 1]} : vector<20x128xf32> to vector<1x128xf32>
    %c0_i32_117 = arith.constant 0 : i32
    %c0_i32_118 = arith.constant 0 : i32
    %c0_i32_119 = arith.constant 0 : i32
    %177 = tpu.memref_slice %arg13[%c0_i32_117, %c0_i32_118, %c0_i32_119] : memref<2x32x128xf32, #tpu.memory_space<vmem>> -> memref<1x32x128xf32, #tpu.memory_space<vmem>>
    %178 = tpu.memref_squeeze %177 : memref<1x32x128xf32, #tpu.memory_space<vmem>> -> memref<32x128xf32, #tpu.memory_space<vmem>>
    %c24_120 = arith.constant 24 : index
    %c0_121 = arith.constant 0 : index
    %179 = vector.load %178[%c24_120, %c0_121] : memref<32x128xf32, #tpu.memory_space<vmem>>, vector<8x128xf32>
    %180 = vector.broadcast %176 : vector<1x128xf32> to vector<8x128xf32>
    %181 = arith.mulf %180, %179 : vector<8x128xf32>
    %182 = arith.addf %175, %181 : vector<8x128xf32>
    %183 = arith.addf %80, %114 : vector<8x128xf32>
    %184 = arith.addf %148, %182 : vector<8x128xf32>
    %185 = arith.addf %183, %184 : vector<8x128xf32>
    %186 = arith.subf %3, %5 : vector<8x32xf32>
    %187 = vector.extract_strided_slice %185 {offsets = [0, 0], sizes = [8, 32], strides = [1, 1]} : vector<8x128xf32> to vector<8x32xf32>
    %188 = arith.addf %186, %187 : vector<8x32xf32>
    %189 = vector.extract_strided_slice %185 {offsets = [0, 96], sizes = [8, 32], strides = [1, 1]} : vector<8x128xf32> to vector<8x32xf32>
    %190 = arith.subf %188, %189 : vector<8x32xf32>
    %191 = arith.addf %3, %5 : vector<8x32xf32>
    %192 = vector.extract_strided_slice %185 {offsets = [0, 64], sizes = [8, 32], strides = [1, 1]} : vector<8x128xf32> to vector<8x32xf32>
    %193 = arith.addf %191, %192 : vector<8x32xf32>
    %194 = vector.extract_strided_slice %185 {offsets = [0, 32], sizes = [8, 32], strides = [1, 1]} : vector<8x128xf32> to vector<8x32xf32>
    %195 = arith.addf %193, %194 : vector<8x32xf32>
    %c0_122 = arith.constant 0 : index
    %c0_123 = arith.constant 0 : index
    %196 = vector.load %arg7[%c0_122, %c0_123] : memref<32x64xbf16, #tpu.memory_space<vmem>>, vector<32x64xbf16>
    %c0_124 = arith.constant 0 : index
    %c0_125 = arith.constant 0 : index
    %197 = vector.load %arg8[%c0_124, %c0_125] : memref<1x64xf32, #tpu.memory_space<vmem>>, vector<1x64xf32>
    %198 = arith.truncf %190 : vector<8x32xf32> to vector<8x32xbf16>
    %cst_126 = arith.constant dense<0.000000e+00> : vector<8x64xf32>
    %199 = tpu.matmul %198, %196, %cst_126 {dimension_numbers = #tpu.dot_dimension_numbers<[1], [0], [0], [1], [0, 0, 1, 1], [], []>} : vector<8x32xbf16>, vector<32x64xbf16>, vector<8x64xf32> -> vector<8x64xf32>
    %200 = vector.broadcast %197 : vector<1x64xf32> to vector<8x64xf32>
    %201 = arith.addf %199, %200 : vector<8x64xf32>
    %cst_127 = arith.constant 0.000000e+00 : f32
    %202 = vector.broadcast %cst_127 : f32 to vector<8x64xf32>
    %203 = arith.maximumf %201, %202 : vector<8x64xf32>
    %204 = arith.truncf %195 : vector<8x32xf32> to vector<8x32xbf16>
    %cst_128 = arith.constant dense<0.000000e+00> : vector<8x64xf32>
    %205 = tpu.matmul %204, %196, %cst_128 {dimension_numbers = #tpu.dot_dimension_numbers<[1], [0], [0], [1], [0, 0, 1, 1], [], []>} : vector<8x32xbf16>, vector<32x64xbf16>, vector<8x64xf32> -> vector<8x64xf32>
    %206 = vector.broadcast %197 : vector<1x64xf32> to vector<8x64xf32>
    %207 = arith.addf %205, %206 : vector<8x64xf32>
    %cst_129 = arith.constant 0.000000e+00 : f32
    %208 = vector.broadcast %cst_129 : f32 to vector<8x64xf32>
    %209 = arith.maximumf %207, %208 : vector<8x64xf32>
    %c0_130 = arith.constant 0 : index
    %c0_131 = arith.constant 0 : index
    %210 = vector.load %arg9[%c0_130, %c0_131] : memref<32x32xbf16, #tpu.memory_space<vmem>>, vector<32x32xbf16>
    %c0_132 = arith.constant 0 : index
    %c0_133 = arith.constant 0 : index
    %211 = vector.load %arg10[%c0_132, %c0_133] : memref<32x32xbf16, #tpu.memory_space<vmem>>, vector<32x32xbf16>
    %212 = vector.extract_strided_slice %203 {offsets = [0, 0], sizes = [8, 32], strides = [1, 1]} : vector<8x64xf32> to vector<8x32xf32>
    %213 = arith.truncf %212 : vector<8x32xf32> to vector<8x32xbf16>
    %cst_134 = arith.constant dense<0.000000e+00> : vector<8x32xf32>
    %214 = tpu.matmul %213, %210, %cst_134 {dimension_numbers = #tpu.dot_dimension_numbers<[1], [0], [0], [1], [0, 0, 1, 1], [], []>} : vector<8x32xbf16>, vector<32x32xbf16>, vector<8x32xf32> -> vector<8x32xf32>
    %c0_i32_135 = arith.constant 0 : i32
    %c0_i32_136 = arith.constant 0 : i32
    %c0_i32_137 = arith.constant 0 : i32
    %215 = tpu.memref_slice %arg13[%c0_i32_135, %c0_i32_136, %c0_i32_137] : memref<2x32x128xf32, #tpu.memory_space<vmem>> -> memref<1x32x128xf32, #tpu.memory_space<vmem>>
    %216 = tpu.memref_squeeze %215 : memref<1x32x128xf32, #tpu.memory_space<vmem>> -> memref<32x128xf32, #tpu.memory_space<vmem>>
    %c24_138 = arith.constant 24 : index
    %c0_139 = arith.constant 0 : index
    %217 = vector.load %216[%c24_138, %c0_139] : memref<32x128xf32, #tpu.memory_space<vmem>>, vector<8x32xf32>
    tpu.vector_store %216[%c24_138, %c0_139], %214 {strides = array<i32>} : memref<32x128xf32, #tpu.memory_space<vmem>>, vector<8x32xf32>,
    %218 = vector.extract_strided_slice %203 {offsets = [0, 32], sizes = [8, 32], strides = [1, 1]} : vector<8x64xf32> to vector<8x32xf32>
    %219 = arith.truncf %218 : vector<8x32xf32> to vector<8x32xbf16>
    %cst_140 = arith.constant dense<0.000000e+00> : vector<8x32xf32>
    %220 = tpu.matmul %219, %211, %cst_140 {dimension_numbers = #tpu.dot_dimension_numbers<[1], [0], [0], [1], [0, 0, 1, 1], [], []>} : vector<8x32xbf16>, vector<32x32xbf16>, vector<8x32xf32> -> vector<8x32xf32>
    %c0_i32_141 = arith.constant 0 : i32
    %c0_i32_142 = arith.constant 0 : i32
    %c0_i32_143 = arith.constant 0 : i32
    %221 = tpu.memref_slice %arg13[%c0_i32_141, %c0_i32_142, %c0_i32_143] : memref<2x32x128xf32, #tpu.memory_space<vmem>> -> memref<1x32x128xf32, #tpu.memory_space<vmem>>
    %222 = tpu.memref_squeeze %221 : memref<1x32x128xf32, #tpu.memory_space<vmem>> -> memref<32x128xf32, #tpu.memory_space<vmem>>
    %c24_144 = arith.constant 24 : index
    %c32_145 = arith.constant 32 : index
    %223 = vector.load %222[%c24_144, %c32_145] : memref<32x128xf32, #tpu.memory_space<vmem>>, vector<8x32xf32>
    tpu.vector_store %222[%c24_144, %c32_145], %220 {strides = array<i32>} : memref<32x128xf32, #tpu.memory_space<vmem>>, vector<8x32xf32>,
    %224 = vector.extract_strided_slice %209 {offsets = [0, 0], sizes = [8, 32], strides = [1, 1]} : vector<8x64xf32> to vector<8x32xf32>
    %225 = arith.truncf %224 : vector<8x32xf32> to vector<8x32xbf16>
    %cst_146 = arith.constant dense<0.000000e+00> : vector<8x32xf32>
    %226 = tpu.matmul %225, %210, %cst_146 {dimension_numbers = #tpu.dot_dimension_numbers<[1], [0], [0], [1], [0, 0, 1, 1], [], []>} : vector<8x32xbf16>, vector<32x32xbf16>, vector<8x32xf32> -> vector<8x32xf32>
    %c0_i32_147 = arith.constant 0 : i32
    %c0_i32_148 = arith.constant 0 : i32
    %c0_i32_149 = arith.constant 0 : i32
    %227 = tpu.memref_slice %arg13[%c0_i32_147, %c0_i32_148, %c0_i32_149] : memref<2x32x128xf32, #tpu.memory_space<vmem>> -> memref<1x32x128xf32, #tpu.memory_space<vmem>>
    %228 = tpu.memref_squeeze %227 : memref<1x32x128xf32, #tpu.memory_space<vmem>> -> memref<32x128xf32, #tpu.memory_space<vmem>>
    %c24_150 = arith.constant 24 : index
    %c64_151 = arith.constant 64 : index
    %229 = vector.load %228[%c24_150, %c64_151] : memref<32x128xf32, #tpu.memory_space<vmem>>, vector<8x32xf32>
    tpu.vector_store %228[%c24_150, %c64_151], %226 {strides = array<i32>} : memref<32x128xf32, #tpu.memory_space<vmem>>, vector<8x32xf32>,
    %230 = vector.extract_strided_slice %209 {offsets = [0, 32], sizes = [8, 32], strides = [1, 1]} : vector<8x64xf32> to vector<8x32xf32>
    %231 = arith.truncf %230 : vector<8x32xf32> to vector<8x32xbf16>
    %cst_152 = arith.constant dense<0.000000e+00> : vector<8x32xf32>
    %232 = tpu.matmul %231, %211, %cst_152 {dimension_numbers = #tpu.dot_dimension_numbers<[1], [0], [0], [1], [0, 0, 1, 1], [], []>} : vector<8x32xbf16>, vector<32x32xbf16>, vector<8x32xf32> -> vector<8x32xf32>
    %c0_i32_153 = arith.constant 0 : i32
    %c0_i32_154 = arith.constant 0 : i32
    %c0_i32_155 = arith.constant 0 : i32
    %233 = tpu.memref_slice %arg13[%c0_i32_153, %c0_i32_154, %c0_i32_155] : memref<2x32x128xf32, #tpu.memory_space<vmem>> -> memref<1x32x128xf32, #tpu.memory_space<vmem>>
    %234 = tpu.memref_squeeze %233 : memref<1x32x128xf32, #tpu.memory_space<vmem>> -> memref<32x128xf32, #tpu.memory_space<vmem>>
    %c24_156 = arith.constant 24 : index
    %c96_157 = arith.constant 96 : index
    %235 = vector.load %234[%c24_156, %c96_157] : memref<32x128xf32, #tpu.memory_space<vmem>>, vector<8x32xf32>
    tpu.vector_store %234[%c24_156, %c96_157], %232 {strides = array<i32>} : memref<32x128xf32, #tpu.memory_space<vmem>>, vector<8x32xf32>,
    %c0_158 = arith.constant 0 : index
    %c0_159 = arith.constant 0 : index
    %236 = vector.load %arg11[%c0_158, %c0_159] : memref<20x128xf32, #tpu.memory_space<vmem>>, vector<20x128xf32>
    %237 = vector.extract_strided_slice %236 {offsets = [0, 0], sizes = [1, 128], strides = [1, 1]} : vector<20x128xf32> to vector<1x128xf32>
    %c0_i32_160 = arith.constant 0 : i32
    %c0_i32_161 = arith.constant 0 : i32
    %c0_i32_162 = arith.constant 0 : i32
    %238 = tpu.memref_slice %arg13[%c0_i32_160, %c0_i32_161, %c0_i32_162] : memref<2x32x128xf32, #tpu.memory_space<vmem>> -> memref<1x32x128xf32, #tpu.memory_space<vmem>>
    %239 = tpu.memref_squeeze %238 : memref<1x32x128xf32, #tpu.memory_space<vmem>> -> memref<32x128xf32, #tpu.memory_space<vmem>>
    %c5_163 = arith.constant 5 : index
    %c0_164 = arith.constant 0 : index
    %240 = vector.load %239[%c5_163, %c0_164] : memref<32x128xf32, #tpu.memory_space<vmem>>, vector<8x128xf32>
    %241 = vector.broadcast %237 : vector<1x128xf32> to vector<8x128xf32>
    %242 = arith.mulf %241, %240 : vector<8x128xf32>
    %243 = vector.extract_strided_slice %236 {offsets = [4, 0], sizes = [1, 128], strides = [1, 1]} : vector<20x128xf32> to vector<1x128xf32>
    %c0_i32_165 = arith.constant 0 : i32
    %c0_i32_166 = arith.constant 0 : i32
    %c0_i32_167 = arith.constant 0 : i32
    %244 = tpu.memref_slice %arg13[%c0_i32_165, %c0_i32_166, %c0_i32_167] : memref<2x32x128xf32, #tpu.memory_space<vmem>> -> memref<1x32x128xf32, #tpu.memory_space<vmem>>
    %245 = tpu.memref_squeeze %244 : memref<1x32x128xf32, #tpu.memory_space<vmem>> -> memref<32x128xf32, #tpu.memory_space<vmem>>
    %c9_168 = arith.constant 9 : index
    %c0_169 = arith.constant 0 : index
    %246 = vector.load %245[%c9_168, %c0_169] : memref<32x128xf32, #tpu.memory_space<vmem>>, vector<8x128xf32>
    %247 = vector.broadcast %243 : vector<1x128xf32> to vector<8x128xf32>
    %248 = arith.mulf %247, %246 : vector<8x128xf32>
    %249 = arith.addf %242, %248 : vector<8x128xf32>
    %250 = vector.extract_strided_slice %236 {offsets = [8, 0], sizes = [1, 128], strides = [1, 1]} : vector<20x128xf32> to vector<1x128xf32>
    %c0_i32_170 = arith.constant 0 : i32
    %c0_i32_171 = arith.constant 0 : i32
    %c0_i32_172 = arith.constant 0 : i32
    %251 = tpu.memref_slice %arg13[%c0_i32_170, %c0_i32_171, %c0_i32_172] : memref<2x32x128xf32, #tpu.memory_space<vmem>> -> memref<1x32x128xf32, #tpu.memory_space<vmem>>
    %252 = tpu.memref_squeeze %251 : memref<1x32x128xf32, #tpu.memory_space<vmem>> -> memref<32x128xf32, #tpu.memory_space<vmem>>
    %c13_173 = arith.constant 13 : index
    %c0_174 = arith.constant 0 : index
    %253 = vector.load %252[%c13_173, %c0_174] : memref<32x128xf32, #tpu.memory_space<vmem>>, vector<8x128xf32>
    %254 = vector.broadcast %250 : vector<1x128xf32> to vector<8x128xf32>
    %255 = arith.mulf %254, %253 : vector<8x128xf32>
    %256 = arith.addf %249, %255 : vector<8x128xf32>
    %257 = vector.extract_strided_slice %236 {offsets = [12, 0], sizes = [1, 128], strides = [1, 1]} : vector<20x128xf32> to vector<1x128xf32>
    %c0_i32_175 = arith.constant 0 : i32
    %c0_i32_176 = arith.constant 0 : i32
    %c0_i32_177 = arith.constant 0 : i32
    %258 = tpu.memref_slice %arg13[%c0_i32_175, %c0_i32_176, %c0_i32_177] : memref<2x32x128xf32, #tpu.memory_space<vmem>> -> memref<1x32x128xf32, #tpu.memory_space<vmem>>
    %259 = tpu.memref_squeeze %258 : memref<1x32x128xf32, #tpu.memory_space<vmem>> -> memref<32x128xf32, #tpu.memory_space<vmem>>
    %c17_178 = arith.constant 17 : index
    %c0_179 = arith.constant 0 : index
    %260 = vector.load %259[%c17_178, %c0_179] : memref<32x128xf32, #tpu.memory_space<vmem>>, vector<8x128xf32>
    %261 = vector.broadcast %257 : vector<1x128xf32> to vector<8x128xf32>
    %262 = arith.mulf %261, %260 : vector<8x128xf32>
    %263 = arith.addf %256, %262 : vector<8x128xf32>
    %264 = vector.extract_strided_slice %236 {offsets = [16, 0], sizes = [1, 128], strides = [1, 1]} : vector<20x128xf32> to vector<1x128xf32>
    %c0_i32_180 = arith.constant 0 : i32
    %c0_i32_181 = arith.constant 0 : i32
    %c0_i32_182 = arith.constant 0 : i32
    %265 = tpu.memref_slice %arg13[%c0_i32_180, %c0_i32_181, %c0_i32_182] : memref<2x32x128xf32, #tpu.memory_space<vmem>> -> memref<1x32x128xf32, #tpu.memory_space<vmem>>
    %266 = tpu.memref_squeeze %265 : memref<1x32x128xf32, #tpu.memory_space<vmem>> -> memref<32x128xf32, #tpu.memory_space<vmem>>
    %c21_183 = arith.constant 21 : index
    %c0_184 = arith.constant 0 : index
    %267 = vector.load %266[%c21_183, %c0_184] : memref<32x128xf32, #tpu.memory_space<vmem>>, vector<8x128xf32>
    %268 = vector.broadcast %264 : vector<1x128xf32> to vector<8x128xf32>
    %269 = arith.mulf %268, %267 : vector<8x128xf32>
    %270 = arith.addf %263, %269 : vector<8x128xf32>
    %271 = vector.extract_strided_slice %236 {offsets = [1, 0], sizes = [1, 128], strides = [1, 1]} : vector<20x128xf32> to vector<1x128xf32>
    %c0_i32_185 = arith.constant 0 : i32
    %c0_i32_186 = arith.constant 0 : i32
    %c0_i32_187 = arith.constant 0 : i32
    %272 = tpu.memref_slice %arg13[%c0_i32_185, %c0_i32_186, %c0_i32_187] : memref<2x32x128xf32, #tpu.memory_space<vmem>> -> memref<1x32x128xf32, #tpu.memory_space<vmem>>
    %273 = tpu.memref_squeeze %272 : memref<1x32x128xf32, #tpu.memory_space<vmem>> -> memref<32x128xf32, #tpu.memory_space<vmem>>
    %c6_188 = arith.constant 6 : index
    %c0_189 = arith.constant 0 : index
    %274 = vector.load %273[%c6_188, %c0_189] : memref<32x128xf32, #tpu.memory_space<vmem>>, vector<8x128xf32>
    %275 = vector.broadcast %271 : vector<1x128xf32> to vector<8x128xf32>
    %276 = arith.mulf %275, %274 : vector<8x128xf32>
    %277 = vector.extract_strided_slice %236 {offsets = [5, 0], sizes = [1, 128], strides = [1, 1]} : vector<20x128xf32> to vector<1x128xf32>
    %c0_i32_190 = arith.constant 0 : i32
    %c0_i32_191 = arith.constant 0 : i32
    %c0_i32_192 = arith.constant 0 : i32
    %278 = tpu.memref_slice %arg13[%c0_i32_190, %c0_i32_191, %c0_i32_192] : memref<2x32x128xf32, #tpu.memory_space<vmem>> -> memref<1x32x128xf32, #tpu.memory_space<vmem>>
    %279 = tpu.memref_squeeze %278 : memref<1x32x128xf32, #tpu.memory_space<vmem>> -> memref<32x128xf32, #tpu.memory_space<vmem>>
    %c10_193 = arith.constant 10 : index
    %c0_194 = arith.constant 0 : index
    %280 = vector.load %279[%c10_193, %c0_194] : memref<32x128xf32, #tpu.memory_space<vmem>>, vector<8x128xf32>
    %281 = vector.broadcast %277 : vector<1x128xf32> to vector<8x128xf32>
    %282 = arith.mulf %281, %280 : vector<8x128xf32>
    %283 = arith.addf %276, %282 : vector<8x128xf32>
    %284 = vector.extract_strided_slice %236 {offsets = [9, 0], sizes = [1, 128], strides = [1, 1]} : vector<20x128xf32> to vector<1x128xf32>
    %c0_i32_195 = arith.constant 0 : i32
    %c0_i32_196 = arith.constant 0 : i32
    %c0_i32_197 = arith.constant 0 : i32
    %285 = tpu.memref_slice %arg13[%c0_i32_195, %c0_i32_196, %c0_i32_197] : memref<2x32x128xf32, #tpu.memory_space<vmem>> -> memref<1x32x128xf32, #tpu.memory_space<vmem>>
    %286 = tpu.memref_squeeze %285 : memref<1x32x128xf32, #tpu.memory_space<vmem>> -> memref<32x128xf32, #tpu.memory_space<vmem>>
    %c14_198 = arith.constant 14 : index
    %c0_199 = arith.constant 0 : index
    %287 = vector.load %286[%c14_198, %c0_199] : memref<32x128xf32, #tpu.memory_space<vmem>>, vector<8x128xf32>
    %288 = vector.broadcast %284 : vector<1x128xf32> to vector<8x128xf32>
    %289 = arith.mulf %288, %287 : vector<8x128xf32>
    %290 = arith.addf %283, %289 : vector<8x128xf32>
    %291 = vector.extract_strided_slice %236 {offsets = [13, 0], sizes = [1, 128], strides = [1, 1]} : vector<20x128xf32> to vector<1x128xf32>
    %c0_i32_200 = arith.constant 0 : i32
    %c0_i32_201 = arith.constant 0 : i32
    %c0_i32_202 = arith.constant 0 : i32
    %292 = tpu.memref_slice %arg13[%c0_i32_200, %c0_i32_201, %c0_i32_202] : memref<2x32x128xf32, #tpu.memory_space<vmem>> -> memref<1x32x128xf32, #tpu.memory_space<vmem>>
    %293 = tpu.memref_squeeze %292 : memref<1x32x128xf32, #tpu.memory_space<vmem>> -> memref<32x128xf32, #tpu.memory_space<vmem>>
    %c18_203 = arith.constant 18 : index
    %c0_204 = arith.constant 0 : index
    %294 = vector.load %293[%c18_203, %c0_204] : memref<32x128xf32, #tpu.memory_space<vmem>>, vector<8x128xf32>
    %295 = vector.broadcast %291 : vector<1x128xf32> to vector<8x128xf32>
    %296 = arith.mulf %295, %294 : vector<8x128xf32>
    %297 = arith.addf %290, %296 : vector<8x128xf32>
    %298 = vector.extract_strided_slice %236 {offsets = [17, 0], sizes = [1, 128], strides = [1, 1]} : vector<20x128xf32> to vector<1x128xf32>
    %c0_i32_205 = arith.constant 0 : i32
    %c0_i32_206 = arith.constant 0 : i32
    %c0_i32_207 = arith.constant 0 : i32
    %299 = tpu.memref_slice %arg13[%c0_i32_205, %c0_i32_206, %c0_i32_207] : memref<2x32x128xf32, #tpu.memory_space<vmem>> -> memref<1x32x128xf32, #tpu.memory_space<vmem>>
    %300 = tpu.memref_squeeze %299 : memref<1x32x128xf32, #tpu.memory_space<vmem>> -> memref<32x128xf32, #tpu.memory_space<vmem>>
    %c22_208 = arith.constant 22 : index
    %c0_209 = arith.constant 0 : index
    %301 = vector.load %300[%c22_208, %c0_209] : memref<32x128xf32, #tpu.memory_space<vmem>>, vector<8x128xf32>
    %302 = vector.broadcast %298 : vector<1x128xf32> to vector<8x128xf32>
    %303 = arith.mulf %302, %301 : vector<8x128xf32>
    %304 = arith.addf %297, %303 : vector<8x128xf32>
    %305 = vector.extract_strided_slice %236 {offsets = [2, 0], sizes = [1, 128], strides = [1, 1]} : vector<20x128xf32> to vector<1x128xf32>
    %c0_i32_210 = arith.constant 0 : i32
    %c0_i32_211 = arith.constant 0 : i32
    %c0_i32_212 = arith.constant 0 : i32
    %306 = tpu.memref_slice %arg13[%c0_i32_210, %c0_i32_211, %c0_i32_212] : memref<2x32x128xf32, #tpu.memory_space<vmem>> -> memref<1x32x128xf32, #tpu.memory_space<vmem>>
    %307 = tpu.memref_squeeze %306 : memref<1x32x128xf32, #tpu.memory_space<vmem>> -> memref<32x128xf32, #tpu.memory_space<vmem>>
    %c7_213 = arith.constant 7 : index
    %c0_214 = arith.constant 0 : index
    %308 = vector.load %307[%c7_213, %c0_214] : memref<32x128xf32, #tpu.memory_space<vmem>>, vector<8x128xf32>
    %309 = vector.broadcast %305 : vector<1x128xf32> to vector<8x128xf32>
    %310 = arith.mulf %309, %308 : vector<8x128xf32>
    %311 = vector.extract_strided_slice %236 {offsets = [6, 0], sizes = [1, 128], strides = [1, 1]} : vector<20x128xf32> to vector<1x128xf32>
    %c0_i32_215 = arith.constant 0 : i32
    %c0_i32_216 = arith.constant 0 : i32
    %c0_i32_217 = arith.constant 0 : i32
    %312 = tpu.memref_slice %arg13[%c0_i32_215, %c0_i32_216, %c0_i32_217] : memref<2x32x128xf32, #tpu.memory_space<vmem>> -> memref<1x32x128xf32, #tpu.memory_space<vmem>>
    %313 = tpu.memref_squeeze %312 : memref<1x32x128xf32, #tpu.memory_space<vmem>> -> memref<32x128xf32, #tpu.memory_space<vmem>>
    %c11_218 = arith.constant 11 : index
    %c0_219 = arith.constant 0 : index
    %314 = vector.load %313[%c11_218, %c0_219] : memref<32x128xf32, #tpu.memory_space<vmem>>, vector<8x128xf32>
    %315 = vector.broadcast %311 : vector<1x128xf32> to vector<8x128xf32>
    %316 = arith.mulf %315, %314 : vector<8x128xf32>
    %317 = arith.addf %310, %316 : vector<8x128xf32>
    %318 = vector.extract_strided_slice %236 {offsets = [10, 0], sizes = [1, 128], strides = [1, 1]} : vector<20x128xf32> to vector<1x128xf32>
    %c0_i32_220 = arith.constant 0 : i32
    %c0_i32_221 = arith.constant 0 : i32
    %c0_i32_222 = arith.constant 0 : i32
    %319 = tpu.memref_slice %arg13[%c0_i32_220, %c0_i32_221, %c0_i32_222] : memref<2x32x128xf32, #tpu.memory_space<vmem>> -> memref<1x32x128xf32, #tpu.memory_space<vmem>>
    %320 = tpu.memref_squeeze %319 : memref<1x32x128xf32, #tpu.memory_space<vmem>> -> memref<32x128xf32, #tpu.memory_space<vmem>>
    %c15_223 = arith.constant 15 : index
    %c0_224 = arith.constant 0 : index
    %321 = vector.load %320[%c15_223, %c0_224] : memref<32x128xf32, #tpu.memory_space<vmem>>, vector<8x128xf32>
    %322 = vector.broadcast %318 : vector<1x128xf32> to vector<8x128xf32>
    %323 = arith.mulf %322, %321 : vector<8x128xf32>
    %324 = arith.addf %317, %323 : vector<8x128xf32>
    %325 = vector.extract_strided_slice %236 {offsets = [14, 0], sizes = [1, 128], strides = [1, 1]} : vector<20x128xf32> to vector<1x128xf32>
    %c0_i32_225 = arith.constant 0 : i32
    %c0_i32_226 = arith.constant 0 : i32
    %c0_i32_227 = arith.constant 0 : i32
    %326 = tpu.memref_slice %arg13[%c0_i32_225, %c0_i32_226, %c0_i32_227] : memref<2x32x128xf32, #tpu.memory_space<vmem>> -> memref<1x32x128xf32, #tpu.memory_space<vmem>>
    %327 = tpu.memref_squeeze %326 : memref<1x32x128xf32, #tpu.memory_space<vmem>> -> memref<32x128xf32, #tpu.memory_space<vmem>>
    %c19_228 = arith.constant 19 : index
    %c0_229 = arith.constant 0 : index
    %328 = vector.load %327[%c19_228, %c0_229] : memref<32x128xf32, #tpu.memory_space<vmem>>, vector<8x128xf32>
    %329 = vector.broadcast %325 : vector<1x128xf32> to vector<8x128xf32>
    %330 = arith.mulf %329, %328 : vector<8x128xf32>
    %331 = arith.addf %324, %330 : vector<8x128xf32>
    %332 = vector.extract_strided_slice %236 {offsets = [18, 0], sizes = [1, 128], strides = [1, 1]} : vector<20x128xf32> to vector<1x128xf32>
    %c0_i32_230 = arith.constant 0 : i32
    %c0_i32_231 = arith.constant 0 : i32
    %c0_i32_232 = arith.constant 0 : i32
    %333 = tpu.memref_slice %arg13[%c0_i32_230, %c0_i32_231, %c0_i32_232] : memref<2x32x128xf32, #tpu.memory_space<vmem>> -> memref<1x32x128xf32, #tpu.memory_space<vmem>>
    %334 = tpu.memref_squeeze %333 : memref<1x32x128xf32, #tpu.memory_space<vmem>> -> memref<32x128xf32, #tpu.memory_space<vmem>>
    %c23_233 = arith.constant 23 : index
    %c0_234 = arith.constant 0 : index
    %335 = vector.load %334[%c23_233, %c0_234] : memref<32x128xf32, #tpu.memory_space<vmem>>, vector<8x128xf32>
    %336 = vector.broadcast %332 : vector<1x128xf32> to vector<8x128xf32>
    %337 = arith.mulf %336, %335 : vector<8x128xf32>
    %338 = arith.addf %331, %337 : vector<8x128xf32>
    %339 = vector.extract_strided_slice %236 {offsets = [3, 0], sizes = [1, 128], strides = [1, 1]} : vector<20x128xf32> to vector<1x128xf32>
    %c0_i32_235 = arith.constant 0 : i32
    %c0_i32_236 = arith.constant 0 : i32
    %c0_i32_237 = arith.constant 0 : i32
    %340 = tpu.memref_slice %arg13[%c0_i32_235, %c0_i32_236, %c0_i32_237] : memref<2x32x128xf32, #tpu.memory_space<vmem>> -> memref<1x32x128xf32, #tpu.memory_space<vmem>>
    %341 = tpu.memref_squeeze %340 : memref<1x32x128xf32, #tpu.memory_space<vmem>> -> memref<32x128xf32, #tpu.memory_space<vmem>>
    %c8_238 = arith.constant 8 : index
    %c0_239 = arith.constant 0 : index
    %342 = vector.load %341[%c8_238, %c0_239] : memref<32x128xf32, #tpu.memory_space<vmem>>, vector<8x128xf32>
    %343 = vector.broadcast %339 : vector<1x128xf32> to vector<8x128xf32>
    %344 = arith.mulf %343, %342 : vector<8x128xf32>
    %345 = vector.extract_strided_slice %236 {offsets = [7, 0], sizes = [1, 128], strides = [1, 1]} : vector<20x128xf32> to vector<1x128xf32>
    %c0_i32_240 = arith.constant 0 : i32
    %c0_i32_241 = arith.constant 0 : i32
    %c0_i32_242 = arith.constant 0 : i32
    %346 = tpu.memref_slice %arg13[%c0_i32_240, %c0_i32_241, %c0_i32_242] : memref<2x32x128xf32, #tpu.memory_space<vmem>> -> memref<1x32x128xf32, #tpu.memory_space<vmem>>
    %347 = tpu.memref_squeeze %346 : memref<1x32x128xf32, #tpu.memory_space<vmem>> -> memref<32x128xf32, #tpu.memory_space<vmem>>
    %c12_243 = arith.constant 12 : index
    %c0_244 = arith.constant 0 : index
    %348 = vector.load %347[%c12_243, %c0_244] : memref<32x128xf32, #tpu.memory_space<vmem>>, vector<8x128xf32>
    %349 = vector.broadcast %345 : vector<1x128xf32> to vector<8x128xf32>
    %350 = arith.mulf %349, %348 : vector<8x128xf32>
    %351 = arith.addf %344, %350 : vector<8x128xf32>
    %352 = vector.extract_strided_slice %236 {offsets = [11, 0], sizes = [1, 128], strides = [1, 1]} : vector<20x128xf32> to vector<1x128xf32>
    %c0_i32_245 = arith.constant 0 : i32
    %c0_i32_246 = arith.constant 0 : i32
    %c0_i32_247 = arith.constant 0 : i32
    %353 = tpu.memref_slice %arg13[%c0_i32_245, %c0_i32_246, %c0_i32_247] : memref<2x32x128xf32, #tpu.memory_space<vmem>> -> memref<1x32x128xf32, #tpu.memory_space<vmem>>
    %354 = tpu.memref_squeeze %353 : memref<1x32x128xf32, #tpu.memory_space<vmem>> -> memref<32x128xf32, #tpu.memory_space<vmem>>
    %c16_248 = arith.constant 16 : index
    %c0_249 = arith.constant 0 : index
    %355 = vector.load %354[%c16_248, %c0_249] : memref<32x128xf32, #tpu.memory_space<vmem>>, vector<8x128xf32>
    %356 = vector.broadcast %352 : vector<1x128xf32> to vector<8x128xf32>
    %357 = arith.mulf %356, %355 : vector<8x128xf32>
    %358 = arith.addf %351, %357 : vector<8x128xf32>
    %359 = vector.extract_strided_slice %236 {offsets = [15, 0], sizes = [1, 128], strides = [1, 1]} : vector<20x128xf32> to vector<1x128xf32>
    %c0_i32_250 = arith.constant 0 : i32
    %c0_i32_251 = arith.constant 0 : i32
    %c0_i32_252 = arith.constant 0 : i32
    %360 = tpu.memref_slice %arg13[%c0_i32_250, %c0_i32_251, %c0_i32_252] : memref<2x32x128xf32, #tpu.memory_space<vmem>> -> memref<1x32x128xf32, #tpu.memory_space<vmem>>
    %361 = tpu.memref_squeeze %360 : memref<1x32x128xf32, #tpu.memory_space<vmem>> -> memref<32x128xf32, #tpu.memory_space<vmem>>
    %c20_253 = arith.constant 20 : index
    %c0_254 = arith.constant 0 : index
    %362 = vector.load %361[%c20_253, %c0_254] : memref<32x128xf32, #tpu.memory_space<vmem>>, vector<8x128xf32>
    %363 = vector.broadcast %359 : vector<1x128xf32> to vector<8x128xf32>
    %364 = arith.mulf %363, %362 : vector<8x128xf32>
    %365 = arith.addf %358, %364 : vector<8x128xf32>
    %366 = vector.extract_strided_slice %236 {offsets = [19, 0], sizes = [1, 128], strides = [1, 1]} : vector<20x128xf32> to vector<1x128xf32>
    %c0_i32_255 = arith.constant 0 : i32
    %c0_i32_256 = arith.constant 0 : i32
    %c0_i32_257 = arith.constant 0 : i32
    %367 = tpu.memref_slice %arg13[%c0_i32_255, %c0_i32_256, %c0_i32_257] : memref<2x32x128xf32, #tpu.memory_space<vmem>> -> memref<1x32x128xf32, #tpu.memory_space<vmem>>
    %368 = tpu.memref_squeeze %367 : memref<1x32x128xf32, #tpu.memory_space<vmem>> -> memref<32x128xf32, #tpu.memory_space<vmem>>
    %c24_258 = arith.constant 24 : index
    %c0_259 = arith.constant 0 : index
    %369 = vector.load %368[%c24_258, %c0_259] : memref<32x128xf32, #tpu.memory_space<vmem>>, vector<8x128xf32>
    %370 = vector.broadcast %366 : vector<1x128xf32> to vector<8x128xf32>
    %371 = arith.mulf %370, %369 : vector<8x128xf32>
    %372 = arith.addf %365, %371 : vector<8x128xf32>
    %373 = arith.addf %270, %304 : vector<8x128xf32>
    %374 = arith.addf %338, %372 : vector<8x128xf32>
    %375 = arith.addf %373, %374 : vector<8x128xf32>
    %376 = arith.subf %190, %195 : vector<8x32xf32>
    %377 = vector.extract_strided_slice %375 {offsets = [0, 0], sizes = [8, 32], strides = [1, 1]} : vector<8x128xf32> to vector<8x32xf32>
    %378 = arith.addf %376, %377 : vector<8x32xf32>
    %379 = vector.extract_strided_slice %375 {offsets = [0, 96], sizes = [8, 32], strides = [1, 1]} : vector<8x128xf32> to vector<8x32xf32>
    %380 = arith.subf %378, %379 : vector<8x32xf32>
    %381 = arith.addf %190, %195 : vector<8x32xf32>
    %382 = vector.extract_strided_slice %375 {offsets = [0, 64], sizes = [8, 32], strides = [1, 1]} : vector<8x128xf32> to vector<8x32xf32>
    %383 = arith.addf %381, %382 : vector<8x32xf32>
    %384 = vector.extract_strided_slice %375 {offsets = [0, 32], sizes = [8, 32], strides = [1, 1]} : vector<8x128xf32> to vector<8x32xf32>
    %385 = arith.addf %383, %384 : vector<8x32xf32>
    %c0_260 = arith.constant 0 : index
    %c0_261 = arith.constant 0 : index
    %c0_262 = arith.constant 0 : index
    %386 = vector.load %arg12[%c0_260, %c0_261, %c0_262] : memref<2x8x64xf32, #tpu.memory_space<vmem>>, vector<1x8x32xf32>
    %387 = vector.shape_cast %386 : vector<1x8x32xf32> to vector<8x32xf32>
    %388 = vector.shape_cast %380 : vector<8x32xf32> to vector<1x8x32xf32>
    tpu.vector_store %arg12[%c0_260, %c0_261, %c0_262], %388 {strides = array<i32>} : memref<2x8x64xf32, #tpu.memory_space<vmem>>, vector<1x8x32xf32>,
    %c0_263 = arith.constant 0 : index
    %c0_264 = arith.constant 0 : index
    %c32_265 = arith.constant 32 : index
    %389 = vector.load %arg12[%c0_263, %c0_264, %c32_265] : memref<2x8x64xf32, #tpu.memory_space<vmem>>, vector<1x8x32xf32>
    %390 = vector.shape_cast %389 : vector<1x8x32xf32> to vector<8x32xf32>
    %391 = vector.shape_cast %385 : vector<8x32xf32> to vector<1x8x32xf32>
    tpu.vector_store %arg12[%c0_263, %c0_264, %c32_265], %391 {strides = array<i32>} : memref<2x8x64xf32, #tpu.memory_space<vmem>>, vector<1x8x32xf32>,
    %c1 = arith.constant 1 : index
    %c0_266 = arith.constant 0 : index
    %c0_267 = arith.constant 0 : index
    %392 = vector.load %arg1[%c1, %c0_266, %c0_267] : memref<2x8x64xf32, #tpu.memory_space<vmem>>, vector<1x8x32xf32>
    %393 = vector.shape_cast %392 : vector<1x8x32xf32> to vector<8x32xf32>
    %c1_268 = arith.constant 1 : index
    %c0_269 = arith.constant 0 : index
    %c32_270 = arith.constant 32 : index
    %394 = vector.load %arg1[%c1_268, %c0_269, %c32_270] : memref<2x8x64xf32, #tpu.memory_space<vmem>>, vector<1x8x32xf32>
    %395 = vector.shape_cast %394 : vector<1x8x32xf32> to vector<8x32xf32>
    %c0_271 = arith.constant 0 : index
    %c0_272 = arith.constant 0 : index
    %396 = vector.load %arg2[%c0_271, %c0_272] : memref<32x64xbf16, #tpu.memory_space<vmem>>, vector<32x64xbf16>
    %c0_273 = arith.constant 0 : index
    %c0_274 = arith.constant 0 : index
    %397 = vector.load %arg3[%c0_273, %c0_274] : memref<1x64xf32, #tpu.memory_space<vmem>>, vector<1x64xf32>
    %398 = arith.truncf %393 : vector<8x32xf32> to vector<8x32xbf16>
    %cst_275 = arith.constant dense<0.000000e+00> : vector<8x64xf32>
    %399 = tpu.matmul %398, %396, %cst_275 {dimension_numbers = #tpu.dot_dimension_numbers<[1], [0], [0], [1], [0, 0, 1, 1], [], []>} : vector<8x32xbf16>, vector<32x64xbf16>, vector<8x64xf32> -> vector<8x64xf32>
    %400 = vector.broadcast %397 : vector<1x64xf32> to vector<8x64xf32>
    %401 = arith.addf %399, %400 : vector<8x64xf32>
    %cst_276 = arith.constant 0.000000e+00 : f32
    %402 = vector.broadcast %cst_276 : f32 to vector<8x64xf32>
    %403 = arith.maximumf %401, %402 : vector<8x64xf32>
    %404 = arith.truncf %395 : vector<8x32xf32> to vector<8x32xbf16>
    %cst_277 = arith.constant dense<0.000000e+00> : vector<8x64xf32>
    %405 = tpu.matmul %404, %396, %cst_277 {dimension_numbers = #tpu.dot_dimension_numbers<[1], [0], [0], [1], [0, 0, 1, 1], [], []>} : vector<8x32xbf16>, vector<32x64xbf16>, vector<8x64xf32> -> vector<8x64xf32>
    %406 = vector.broadcast %397 : vector<1x64xf32> to vector<8x64xf32>
    %407 = arith.addf %405, %406 : vector<8x64xf32>
    %cst_278 = arith.constant 0.000000e+00 : f32
    %408 = vector.broadcast %cst_278 : f32 to vector<8x64xf32>
    %409 = arith.maximumf %407, %408 : vector<8x64xf32>
    %c0_279 = arith.constant 0 : index
    %c0_280 = arith.constant 0 : index
    %410 = vector.load %arg4[%c0_279, %c0_280] : memref<32x32xbf16, #tpu.memory_space<vmem>>, vector<32x32xbf16>
    %c0_281 = arith.constant 0 : index
    %c0_282 = arith.constant 0 : index
    %411 = vector.load %arg5[%c0_281, %c0_282] : memref<32x32xbf16, #tpu.memory_space<vmem>>, vector<32x32xbf16>
    %412 = vector.extract_strided_slice %403 {offsets = [0, 0], sizes = [8, 32], strides = [1, 1]} : vector<8x64xf32> to vector<8x32xf32>
    %413 = arith.truncf %412 : vector<8x32xf32> to vector<8x32xbf16>
    %cst_283 = arith.constant dense<0.000000e+00> : vector<8x32xf32>
    %414 = tpu.matmul %413, %410, %cst_283 {dimension_numbers = #tpu.dot_dimension_numbers<[1], [0], [0], [1], [0, 0, 1, 1], [], []>} : vector<8x32xbf16>, vector<32x32xbf16>, vector<8x32xf32> -> vector<8x32xf32>
    %c1_i32 = arith.constant 1 : i32
    %c0_i32_284 = arith.constant 0 : i32
    %c0_i32_285 = arith.constant 0 : i32
    %415 = tpu.memref_slice %arg13[%c1_i32, %c0_i32_284, %c0_i32_285] : memref<2x32x128xf32, #tpu.memory_space<vmem>> -> memref<1x32x128xf32, #tpu.memory_space<vmem>>
    %416 = tpu.memref_squeeze %415 : memref<1x32x128xf32, #tpu.memory_space<vmem>> -> memref<32x128xf32, #tpu.memory_space<vmem>>
    %c24_286 = arith.constant 24 : index
    %c0_287 = arith.constant 0 : index
    %417 = vector.load %416[%c24_286, %c0_287] : memref<32x128xf32, #tpu.memory_space<vmem>>, vector<8x32xf32>
    tpu.vector_store %416[%c24_286, %c0_287], %414 {strides = array<i32>} : memref<32x128xf32, #tpu.memory_space<vmem>>, vector<8x32xf32>,
    %418 = vector.extract_strided_slice %403 {offsets = [0, 32], sizes = [8, 32], strides = [1, 1]} : vector<8x64xf32> to vector<8x32xf32>
    %419 = arith.truncf %418 : vector<8x32xf32> to vector<8x32xbf16>
    %cst_288 = arith.constant dense<0.000000e+00> : vector<8x32xf32>
    %420 = tpu.matmul %419, %411, %cst_288 {dimension_numbers = #tpu.dot_dimension_numbers<[1], [0], [0], [1], [0, 0, 1, 1], [], []>} : vector<8x32xbf16>, vector<32x32xbf16>, vector<8x32xf32> -> vector<8x32xf32>
    %c1_i32_289 = arith.constant 1 : i32
    %c0_i32_290 = arith.constant 0 : i32
    %c0_i32_291 = arith.constant 0 : i32
    %421 = tpu.memref_slice %arg13[%c1_i32_289, %c0_i32_290, %c0_i32_291] : memref<2x32x128xf32, #tpu.memory_space<vmem>> -> memref<1x32x128xf32, #tpu.memory_space<vmem>>
    %422 = tpu.memref_squeeze %421 : memref<1x32x128xf32, #tpu.memory_space<vmem>> -> memref<32x128xf32, #tpu.memory_space<vmem>>
    %c24_292 = arith.constant 24 : index
    %c32_293 = arith.constant 32 : index
    %423 = vector.load %422[%c24_292, %c32_293] : memref<32x128xf32, #tpu.memory_space<vmem>>, vector<8x32xf32>
    tpu.vector_store %422[%c24_292, %c32_293], %420 {strides = array<i32>} : memref<32x128xf32, #tpu.memory_space<vmem>>, vector<8x32xf32>,
    %424 = vector.extract_strided_slice %409 {offsets = [0, 0], sizes = [8, 32], strides = [1, 1]} : vector<8x64xf32> to vector<8x32xf32>
    %425 = arith.truncf %424 : vector<8x32xf32> to vector<8x32xbf16>
    %cst_294 = arith.constant dense<0.000000e+00> : vector<8x32xf32>
    %426 = tpu.matmul %425, %410, %cst_294 {dimension_numbers = #tpu.dot_dimension_numbers<[1], [0], [0], [1], [0, 0, 1, 1], [], []>} : vector<8x32xbf16>, vector<32x32xbf16>, vector<8x32xf32> -> vector<8x32xf32>
    %c1_i32_295 = arith.constant 1 : i32
    %c0_i32_296 = arith.constant 0 : i32
    %c0_i32_297 = arith.constant 0 : i32
    %427 = tpu.memref_slice %arg13[%c1_i32_295, %c0_i32_296, %c0_i32_297] : memref<2x32x128xf32, #tpu.memory_space<vmem>> -> memref<1x32x128xf32, #tpu.memory_space<vmem>>
    %428 = tpu.memref_squeeze %427 : memref<1x32x128xf32, #tpu.memory_space<vmem>> -> memref<32x128xf32, #tpu.memory_space<vmem>>
    %c24_298 = arith.constant 24 : index
    %c64_299 = arith.constant 64 : index
    %429 = vector.load %428[%c24_298, %c64_299] : memref<32x128xf32, #tpu.memory_space<vmem>>, vector<8x32xf32>
    tpu.vector_store %428[%c24_298, %c64_299], %426 {strides = array<i32>} : memref<32x128xf32, #tpu.memory_space<vmem>>, vector<8x32xf32>,
    %430 = vector.extract_strided_slice %409 {offsets = [0, 32], sizes = [8, 32], strides = [1, 1]} : vector<8x64xf32> to vector<8x32xf32>
    %431 = arith.truncf %430 : vector<8x32xf32> to vector<8x32xbf16>
    %cst_300 = arith.constant dense<0.000000e+00> : vector<8x32xf32>
    %432 = tpu.matmul %431, %411, %cst_300 {dimension_numbers = #tpu.dot_dimension_numbers<[1], [0], [0], [1], [0, 0, 1, 1], [], []>} : vector<8x32xbf16>, vector<32x32xbf16>, vector<8x32xf32> -> vector<8x32xf32>
    %c1_i32_301 = arith.constant 1 : i32
    %c0_i32_302 = arith.constant 0 : i32
    %c0_i32_303 = arith.constant 0 : i32
    %433 = tpu.memref_slice %arg13[%c1_i32_301, %c0_i32_302, %c0_i32_303] : memref<2x32x128xf32, #tpu.memory_space<vmem>> -> memref<1x32x128xf32, #tpu.memory_space<vmem>>
    %434 = tpu.memref_squeeze %433 : memref<1x32x128xf32, #tpu.memory_space<vmem>> -> memref<32x128xf32, #tpu.memory_space<vmem>>
    %c24_304 = arith.constant 24 : index
    %c96_305 = arith.constant 96 : index
    %435 = vector.load %434[%c24_304, %c96_305] : memref<32x128xf32, #tpu.memory_space<vmem>>, vector<8x32xf32>
    tpu.vector_store %434[%c24_304, %c96_305], %432 {strides = array<i32>} : memref<32x128xf32, #tpu.memory_space<vmem>>, vector<8x32xf32>,
    %c0_306 = arith.constant 0 : index
    %c0_307 = arith.constant 0 : index
    %436 = vector.load %arg6[%c0_306, %c0_307] : memref<20x128xf32, #tpu.memory_space<vmem>>, vector<20x128xf32>
    %437 = vector.extract_strided_slice %436 {offsets = [0, 0], sizes = [1, 128], strides = [1, 1]} : vector<20x128xf32> to vector<1x128xf32>
    %c1_i32_308 = arith.constant 1 : i32
    %c0_i32_309 = arith.constant 0 : i32
    %c0_i32_310 = arith.constant 0 : i32
    %438 = tpu.memref_slice %arg13[%c1_i32_308, %c0_i32_309, %c0_i32_310] : memref<2x32x128xf32, #tpu.memory_space<vmem>> -> memref<1x32x128xf32, #tpu.memory_space<vmem>>
    %439 = tpu.memref_squeeze %438 : memref<1x32x128xf32, #tpu.memory_space<vmem>> -> memref<32x128xf32, #tpu.memory_space<vmem>>
    %c5_311 = arith.constant 5 : index
    %c0_312 = arith.constant 0 : index
    %440 = vector.load %439[%c5_311, %c0_312] : memref<32x128xf32, #tpu.memory_space<vmem>>, vector<8x128xf32>
    %441 = vector.broadcast %437 : vector<1x128xf32> to vector<8x128xf32>
    %442 = arith.mulf %441, %440 : vector<8x128xf32>
    %443 = vector.extract_strided_slice %436 {offsets = [4, 0], sizes = [1, 128], strides = [1, 1]} : vector<20x128xf32> to vector<1x128xf32>
    %c1_i32_313 = arith.constant 1 : i32
    %c0_i32_314 = arith.constant 0 : i32
    %c0_i32_315 = arith.constant 0 : i32
    %444 = tpu.memref_slice %arg13[%c1_i32_313, %c0_i32_314, %c0_i32_315] : memref<2x32x128xf32, #tpu.memory_space<vmem>> -> memref<1x32x128xf32, #tpu.memory_space<vmem>>
    %445 = tpu.memref_squeeze %444 : memref<1x32x128xf32, #tpu.memory_space<vmem>> -> memref<32x128xf32, #tpu.memory_space<vmem>>
    %c9_316 = arith.constant 9 : index
    %c0_317 = arith.constant 0 : index
    %446 = vector.load %445[%c9_316, %c0_317] : memref<32x128xf32, #tpu.memory_space<vmem>>, vector<8x128xf32>
    %447 = vector.broadcast %443 : vector<1x128xf32> to vector<8x128xf32>
    %448 = arith.mulf %447, %446 : vector<8x128xf32>
    %449 = arith.addf %442, %448 : vector<8x128xf32>
    %450 = vector.extract_strided_slice %436 {offsets = [8, 0], sizes = [1, 128], strides = [1, 1]} : vector<20x128xf32> to vector<1x128xf32>
    %c1_i32_318 = arith.constant 1 : i32
    %c0_i32_319 = arith.constant 0 : i32
    %c0_i32_320 = arith.constant 0 : i32
    %451 = tpu.memref_slice %arg13[%c1_i32_318, %c0_i32_319, %c0_i32_320] : memref<2x32x128xf32, #tpu.memory_space<vmem>> -> memref<1x32x128xf32, #tpu.memory_space<vmem>>
    %452 = tpu.memref_squeeze %451 : memref<1x32x128xf32, #tpu.memory_space<vmem>> -> memref<32x128xf32, #tpu.memory_space<vmem>>
    %c13_321 = arith.constant 13 : index
    %c0_322 = arith.constant 0 : index
    %453 = vector.load %452[%c13_321, %c0_322] : memref<32x128xf32, #tpu.memory_space<vmem>>, vector<8x128xf32>
    %454 = vector.broadcast %450 : vector<1x128xf32> to vector<8x128xf32>
    %455 = arith.mulf %454, %453 : vector<8x128xf32>
    %456 = arith.addf %449, %455 : vector<8x128xf32>
    %457 = vector.extract_strided_slice %436 {offsets = [12, 0], sizes = [1, 128], strides = [1, 1]} : vector<20x128xf32> to vector<1x128xf32>
    %c1_i32_323 = arith.constant 1 : i32
    %c0_i32_324 = arith.constant 0 : i32
    %c0_i32_325 = arith.constant 0 : i32
    %458 = tpu.memref_slice %arg13[%c1_i32_323, %c0_i32_324, %c0_i32_325] : memref<2x32x128xf32, #tpu.memory_space<vmem>> -> memref<1x32x128xf32, #tpu.memory_space<vmem>>
    %459 = tpu.memref_squeeze %458 : memref<1x32x128xf32, #tpu.memory_space<vmem>> -> memref<32x128xf32, #tpu.memory_space<vmem>>
    %c17_326 = arith.constant 17 : index
    %c0_327 = arith.constant 0 : index
    %460 = vector.load %459[%c17_326, %c0_327] : memref<32x128xf32, #tpu.memory_space<vmem>>, vector<8x128xf32>
    %461 = vector.broadcast %457 : vector<1x128xf32> to vector<8x128xf32>
    %462 = arith.mulf %461, %460 : vector<8x128xf32>
    %463 = arith.addf %456, %462 : vector<8x128xf32>
    %464 = vector.extract_strided_slice %436 {offsets = [16, 0], sizes = [1, 128], strides = [1, 1]} : vector<20x128xf32> to vector<1x128xf32>
    %c1_i32_328 = arith.constant 1 : i32
    %c0_i32_329 = arith.constant 0 : i32
    %c0_i32_330 = arith.constant 0 : i32
    %465 = tpu.memref_slice %arg13[%c1_i32_328, %c0_i32_329, %c0_i32_330] : memref<2x32x128xf32, #tpu.memory_space<vmem>> -> memref<1x32x128xf32, #tpu.memory_space<vmem>>
    %466 = tpu.memref_squeeze %465 : memref<1x32x128xf32, #tpu.memory_space<vmem>> -> memref<32x128xf32, #tpu.memory_space<vmem>>
    %c21_331 = arith.constant 21 : index
    %c0_332 = arith.constant 0 : index
    %467 = vector.load %466[%c21_331, %c0_332] : memref<32x128xf32, #tpu.memory_space<vmem>>, vector<8x128xf32>
    %468 = vector.broadcast %464 : vector<1x128xf32> to vector<8x128xf32>
    %469 = arith.mulf %468, %467 : vector<8x128xf32>
    %470 = arith.addf %463, %469 : vector<8x128xf32>
    %471 = vector.extract_strided_slice %436 {offsets = [1, 0], sizes = [1, 128], strides = [1, 1]} : vector<20x128xf32> to vector<1x128xf32>
    %c1_i32_333 = arith.constant 1 : i32
    %c0_i32_334 = arith.constant 0 : i32
    %c0_i32_335 = arith.constant 0 : i32
    %472 = tpu.memref_slice %arg13[%c1_i32_333, %c0_i32_334, %c0_i32_335] : memref<2x32x128xf32, #tpu.memory_space<vmem>> -> memref<1x32x128xf32, #tpu.memory_space<vmem>>
    %473 = tpu.memref_squeeze %472 : memref<1x32x128xf32, #tpu.memory_space<vmem>> -> memref<32x128xf32, #tpu.memory_space<vmem>>
    %c6_336 = arith.constant 6 : index
    %c0_337 = arith.constant 0 : index
    %474 = vector.load %473[%c6_336, %c0_337] : memref<32x128xf32, #tpu.memory_space<vmem>>, vector<8x128xf32>
    %475 = vector.broadcast %471 : vector<1x128xf32> to vector<8x128xf32>
    %476 = arith.mulf %475, %474 : vector<8x128xf32>
    %477 = vector.extract_strided_slice %436 {offsets = [5, 0], sizes = [1, 128], strides = [1, 1]} : vector<20x128xf32> to vector<1x128xf32>
    %c1_i32_338 = arith.constant 1 : i32
    %c0_i32_339 = arith.constant 0 : i32
    %c0_i32_340 = arith.constant 0 : i32
    %478 = tpu.memref_slice %arg13[%c1_i32_338, %c0_i32_339, %c0_i32_340] : memref<2x32x128xf32, #tpu.memory_space<vmem>> -> memref<1x32x128xf32, #tpu.memory_space<vmem>>
    %479 = tpu.memref_squeeze %478 : memref<1x32x128xf32, #tpu.memory_space<vmem>> -> memref<32x128xf32, #tpu.memory_space<vmem>>
    %c10_341 = arith.constant 10 : index
    %c0_342 = arith.constant 0 : index
    %480 = vector.load %479[%c10_341, %c0_342] : memref<32x128xf32, #tpu.memory_space<vmem>>, vector<8x128xf32>
    %481 = vector.broadcast %477 : vector<1x128xf32> to vector<8x128xf32>
    %482 = arith.mulf %481, %480 : vector<8x128xf32>
    %483 = arith.addf %476, %482 : vector<8x128xf32>
    %484 = vector.extract_strided_slice %436 {offsets = [9, 0], sizes = [1, 128], strides = [1, 1]} : vector<20x128xf32> to vector<1x128xf32>
    %c1_i32_343 = arith.constant 1 : i32
    %c0_i32_344 = arith.constant 0 : i32
    %c0_i32_345 = arith.constant 0 : i32
    %485 = tpu.memref_slice %arg13[%c1_i32_343, %c0_i32_344, %c0_i32_345] : memref<2x32x128xf32, #tpu.memory_space<vmem>> -> memref<1x32x128xf32, #tpu.memory_space<vmem>>
    %486 = tpu.memref_squeeze %485 : memref<1x32x128xf32, #tpu.memory_space<vmem>> -> memref<32x128xf32, #tpu.memory_space<vmem>>
    %c14_346 = arith.constant 14 : index
    %c0_347 = arith.constant 0 : index
    %487 = vector.load %486[%c14_346, %c0_347] : memref<32x128xf32, #tpu.memory_space<vmem>>, vector<8x128xf32>
    %488 = vector.broadcast %484 : vector<1x128xf32> to vector<8x128xf32>
    %489 = arith.mulf %488, %487 : vector<8x128xf32>
    %490 = arith.addf %483, %489 : vector<8x128xf32>
    %491 = vector.extract_strided_slice %436 {offsets = [13, 0], sizes = [1, 128], strides = [1, 1]} : vector<20x128xf32> to vector<1x128xf32>
    %c1_i32_348 = arith.constant 1 : i32
    %c0_i32_349 = arith.constant 0 : i32
    %c0_i32_350 = arith.constant 0 : i32
    %492 = tpu.memref_slice %arg13[%c1_i32_348, %c0_i32_349, %c0_i32_350] : memref<2x32x128xf32, #tpu.memory_space<vmem>> -> memref<1x32x128xf32, #tpu.memory_space<vmem>>
    %493 = tpu.memref_squeeze %492 : memref<1x32x128xf32, #tpu.memory_space<vmem>> -> memref<32x128xf32, #tpu.memory_space<vmem>>
    %c18_351 = arith.constant 18 : index
    %c0_352 = arith.constant 0 : index
    %494 = vector.load %493[%c18_351, %c0_352] : memref<32x128xf32, #tpu.memory_space<vmem>>, vector<8x128xf32>
    %495 = vector.broadcast %491 : vector<1x128xf32> to vector<8x128xf32>
    %496 = arith.mulf %495, %494 : vector<8x128xf32>
    %497 = arith.addf %490, %496 : vector<8x128xf32>
    %498 = vector.extract_strided_slice %436 {offsets = [17, 0], sizes = [1, 128], strides = [1, 1]} : vector<20x128xf32> to vector<1x128xf32>
    %c1_i32_353 = arith.constant 1 : i32
    %c0_i32_354 = arith.constant 0 : i32
    %c0_i32_355 = arith.constant 0 : i32
    %499 = tpu.memref_slice %arg13[%c1_i32_353, %c0_i32_354, %c0_i32_355] : memref<2x32x128xf32, #tpu.memory_space<vmem>> -> memref<1x32x128xf32, #tpu.memory_space<vmem>>
    %500 = tpu.memref_squeeze %499 : memref<1x32x128xf32, #tpu.memory_space<vmem>> -> memref<32x128xf32, #tpu.memory_space<vmem>>
    %c22_356 = arith.constant 22 : index
    %c0_357 = arith.constant 0 : index
    %501 = vector.load %500[%c22_356, %c0_357] : memref<32x128xf32, #tpu.memory_space<vmem>>, vector<8x128xf32>
    %502 = vector.broadcast %498 : vector<1x128xf32> to vector<8x128xf32>
    %503 = arith.mulf %502, %501 : vector<8x128xf32>
    %504 = arith.addf %497, %503 : vector<8x128xf32>
    %505 = vector.extract_strided_slice %436 {offsets = [2, 0], sizes = [1, 128], strides = [1, 1]} : vector<20x128xf32> to vector<1x128xf32>
    %c1_i32_358 = arith.constant 1 : i32
    %c0_i32_359 = arith.constant 0 : i32
    %c0_i32_360 = arith.constant 0 : i32
    %506 = tpu.memref_slice %arg13[%c1_i32_358, %c0_i32_359, %c0_i32_360] : memref<2x32x128xf32, #tpu.memory_space<vmem>> -> memref<1x32x128xf32, #tpu.memory_space<vmem>>
    %507 = tpu.memref_squeeze %506 : memref<1x32x128xf32, #tpu.memory_space<vmem>> -> memref<32x128xf32, #tpu.memory_space<vmem>>
    %c7_361 = arith.constant 7 : index
    %c0_362 = arith.constant 0 : index
    %508 = vector.load %507[%c7_361, %c0_362] : memref<32x128xf32, #tpu.memory_space<vmem>>, vector<8x128xf32>
    %509 = vector.broadcast %505 : vector<1x128xf32> to vector<8x128xf32>
    %510 = arith.mulf %509, %508 : vector<8x128xf32>
    %511 = vector.extract_strided_slice %436 {offsets = [6, 0], sizes = [1, 128], strides = [1, 1]} : vector<20x128xf32> to vector<1x128xf32>
    %c1_i32_363 = arith.constant 1 : i32
    %c0_i32_364 = arith.constant 0 : i32
    %c0_i32_365 = arith.constant 0 : i32
    %512 = tpu.memref_slice %arg13[%c1_i32_363, %c0_i32_364, %c0_i32_365] : memref<2x32x128xf32, #tpu.memory_space<vmem>> -> memref<1x32x128xf32, #tpu.memory_space<vmem>>
    %513 = tpu.memref_squeeze %512 : memref<1x32x128xf32, #tpu.memory_space<vmem>> -> memref<32x128xf32, #tpu.memory_space<vmem>>
    %c11_366 = arith.constant 11 : index
    %c0_367 = arith.constant 0 : index
    %514 = vector.load %513[%c11_366, %c0_367] : memref<32x128xf32, #tpu.memory_space<vmem>>, vector<8x128xf32>
    %515 = vector.broadcast %511 : vector<1x128xf32> to vector<8x128xf32>
    %516 = arith.mulf %515, %514 : vector<8x128xf32>
    %517 = arith.addf %510, %516 : vector<8x128xf32>
    %518 = vector.extract_strided_slice %436 {offsets = [10, 0], sizes = [1, 128], strides = [1, 1]} : vector<20x128xf32> to vector<1x128xf32>
    %c1_i32_368 = arith.constant 1 : i32
    %c0_i32_369 = arith.constant 0 : i32
    %c0_i32_370 = arith.constant 0 : i32
    %519 = tpu.memref_slice %arg13[%c1_i32_368, %c0_i32_369, %c0_i32_370] : memref<2x32x128xf32, #tpu.memory_space<vmem>> -> memref<1x32x128xf32, #tpu.memory_space<vmem>>
    %520 = tpu.memref_squeeze %519 : memref<1x32x128xf32, #tpu.memory_space<vmem>> -> memref<32x128xf32, #tpu.memory_space<vmem>>
    %c15_371 = arith.constant 15 : index
    %c0_372 = arith.constant 0 : index
    %521 = vector.load %520[%c15_371, %c0_372] : memref<32x128xf32, #tpu.memory_space<vmem>>, vector<8x128xf32>
    %522 = vector.broadcast %518 : vector<1x128xf32> to vector<8x128xf32>
    %523 = arith.mulf %522, %521 : vector<8x128xf32>
    %524 = arith.addf %517, %523 : vector<8x128xf32>
    %525 = vector.extract_strided_slice %436 {offsets = [14, 0], sizes = [1, 128], strides = [1, 1]} : vector<20x128xf32> to vector<1x128xf32>
    %c1_i32_373 = arith.constant 1 : i32
    %c0_i32_374 = arith.constant 0 : i32
    %c0_i32_375 = arith.constant 0 : i32
    %526 = tpu.memref_slice %arg13[%c1_i32_373, %c0_i32_374, %c0_i32_375] : memref<2x32x128xf32, #tpu.memory_space<vmem>> -> memref<1x32x128xf32, #tpu.memory_space<vmem>>
    %527 = tpu.memref_squeeze %526 : memref<1x32x128xf32, #tpu.memory_space<vmem>> -> memref<32x128xf32, #tpu.memory_space<vmem>>
    %c19_376 = arith.constant 19 : index
    %c0_377 = arith.constant 0 : index
    %528 = vector.load %527[%c19_376, %c0_377] : memref<32x128xf32, #tpu.memory_space<vmem>>, vector<8x128xf32>
    %529 = vector.broadcast %525 : vector<1x128xf32> to vector<8x128xf32>
    %530 = arith.mulf %529, %528 : vector<8x128xf32>
    %531 = arith.addf %524, %530 : vector<8x128xf32>
    %532 = vector.extract_strided_slice %436 {offsets = [18, 0], sizes = [1, 128], strides = [1, 1]} : vector<20x128xf32> to vector<1x128xf32>
    %c1_i32_378 = arith.constant 1 : i32
    %c0_i32_379 = arith.constant 0 : i32
    %c0_i32_380 = arith.constant 0 : i32
    %533 = tpu.memref_slice %arg13[%c1_i32_378, %c0_i32_379, %c0_i32_380] : memref<2x32x128xf32, #tpu.memory_space<vmem>> -> memref<1x32x128xf32, #tpu.memory_space<vmem>>
    %534 = tpu.memref_squeeze %533 : memref<1x32x128xf32, #tpu.memory_space<vmem>> -> memref<32x128xf32, #tpu.memory_space<vmem>>
    %c23_381 = arith.constant 23 : index
    %c0_382 = arith.constant 0 : index
    %535 = vector.load %534[%c23_381, %c0_382] : memref<32x128xf32, #tpu.memory_space<vmem>>, vector<8x128xf32>
    %536 = vector.broadcast %532 : vector<1x128xf32> to vector<8x128xf32>
    %537 = arith.mulf %536, %535 : vector<8x128xf32>
    %538 = arith.addf %531, %537 : vector<8x128xf32>
    %539 = vector.extract_strided_slice %436 {offsets = [3, 0], sizes = [1, 128], strides = [1, 1]} : vector<20x128xf32> to vector<1x128xf32>
    %c1_i32_383 = arith.constant 1 : i32
    %c0_i32_384 = arith.constant 0 : i32
    %c0_i32_385 = arith.constant 0 : i32
    %540 = tpu.memref_slice %arg13[%c1_i32_383, %c0_i32_384, %c0_i32_385] : memref<2x32x128xf32, #tpu.memory_space<vmem>> -> memref<1x32x128xf32, #tpu.memory_space<vmem>>
    %541 = tpu.memref_squeeze %540 : memref<1x32x128xf32, #tpu.memory_space<vmem>> -> memref<32x128xf32, #tpu.memory_space<vmem>>
    %c8_386 = arith.constant 8 : index
    %c0_387 = arith.constant 0 : index
    %542 = vector.load %541[%c8_386, %c0_387] : memref<32x128xf32, #tpu.memory_space<vmem>>, vector<8x128xf32>
    %543 = vector.broadcast %539 : vector<1x128xf32> to vector<8x128xf32>
    %544 = arith.mulf %543, %542 : vector<8x128xf32>
    %545 = vector.extract_strided_slice %436 {offsets = [7, 0], sizes = [1, 128], strides = [1, 1]} : vector<20x128xf32> to vector<1x128xf32>
    %c1_i32_388 = arith.constant 1 : i32
    %c0_i32_389 = arith.constant 0 : i32
    %c0_i32_390 = arith.constant 0 : i32
    %546 = tpu.memref_slice %arg13[%c1_i32_388, %c0_i32_389, %c0_i32_390] : memref<2x32x128xf32, #tpu.memory_space<vmem>> -> memref<1x32x128xf32, #tpu.memory_space<vmem>>
    %547 = tpu.memref_squeeze %546 : memref<1x32x128xf32, #tpu.memory_space<vmem>> -> memref<32x128xf32, #tpu.memory_space<vmem>>
    %c12_391 = arith.constant 12 : index
    %c0_392 = arith.constant 0 : index
    %548 = vector.load %547[%c12_391, %c0_392] : memref<32x128xf32, #tpu.memory_space<vmem>>, vector<8x128xf32>
    %549 = vector.broadcast %545 : vector<1x128xf32> to vector<8x128xf32>
    %550 = arith.mulf %549, %548 : vector<8x128xf32>
    %551 = arith.addf %544, %550 : vector<8x128xf32>
    %552 = vector.extract_strided_slice %436 {offsets = [11, 0], sizes = [1, 128], strides = [1, 1]} : vector<20x128xf32> to vector<1x128xf32>
    %c1_i32_393 = arith.constant 1 : i32
    %c0_i32_394 = arith.constant 0 : i32
    %c0_i32_395 = arith.constant 0 : i32
    %553 = tpu.memref_slice %arg13[%c1_i32_393, %c0_i32_394, %c0_i32_395] : memref<2x32x128xf32, #tpu.memory_space<vmem>> -> memref<1x32x128xf32, #tpu.memory_space<vmem>>
    %554 = tpu.memref_squeeze %553 : memref<1x32x128xf32, #tpu.memory_space<vmem>> -> memref<32x128xf32, #tpu.memory_space<vmem>>
    %c16_396 = arith.constant 16 : index
    %c0_397 = arith.constant 0 : index
    %555 = vector.load %554[%c16_396, %c0_397] : memref<32x128xf32, #tpu.memory_space<vmem>>, vector<8x128xf32>
    %556 = vector.broadcast %552 : vector<1x128xf32> to vector<8x128xf32>
    %557 = arith.mulf %556, %555 : vector<8x128xf32>
    %558 = arith.addf %551, %557 : vector<8x128xf32>
    %559 = vector.extract_strided_slice %436 {offsets = [15, 0], sizes = [1, 128], strides = [1, 1]} : vector<20x128xf32> to vector<1x128xf32>
    %c1_i32_398 = arith.constant 1 : i32
    %c0_i32_399 = arith.constant 0 : i32
    %c0_i32_400 = arith.constant 0 : i32
    %560 = tpu.memref_slice %arg13[%c1_i32_398, %c0_i32_399, %c0_i32_400] : memref<2x32x128xf32, #tpu.memory_space<vmem>> -> memref<1x32x128xf32, #tpu.memory_space<vmem>>
    %561 = tpu.memref_squeeze %560 : memref<1x32x128xf32, #tpu.memory_space<vmem>> -> memref<32x128xf32, #tpu.memory_space<vmem>>
    %c20_401 = arith.constant 20 : index
    %c0_402 = arith.constant 0 : index
    %562 = vector.load %561[%c20_401, %c0_402] : memref<32x128xf32, #tpu.memory_space<vmem>>, vector<8x128xf32>
    %563 = vector.broadcast %559 : vector<1x128xf32> to vector<8x128xf32>
    %564 = arith.mulf %563, %562 : vector<8x128xf32>
    %565 = arith.addf %558, %564 : vector<8x128xf32>
    %566 = vector.extract_strided_slice %436 {offsets = [19, 0], sizes = [1, 128], strides = [1, 1]} : vector<20x128xf32> to vector<1x128xf32>
    %c1_i32_403 = arith.constant 1 : i32
    %c0_i32_404 = arith.constant 0 : i32
    %c0_i32_405 = arith.constant 0 : i32
    %567 = tpu.memref_slice %arg13[%c1_i32_403, %c0_i32_404, %c0_i32_405] : memref<2x32x128xf32, #tpu.memory_space<vmem>> -> memref<1x32x128xf32, #tpu.memory_space<vmem>>
    %568 = tpu.memref_squeeze %567 : memref<1x32x128xf32, #tpu.memory_space<vmem>> -> memref<32x128xf32, #tpu.memory_space<vmem>>
    %c24_406 = arith.constant 24 : index
    %c0_407 = arith.constant 0 : index
    %569 = vector.load %568[%c24_406, %c0_407] : memref<32x128xf32, #tpu.memory_space<vmem>>, vector<8x128xf32>
    %570 = vector.broadcast %566 : vector<1x128xf32> to vector<8x128xf32>
    %571 = arith.mulf %570, %569 : vector<8x128xf32>
    %572 = arith.addf %565, %571 : vector<8x128xf32>
    %573 = arith.addf %470, %504 : vector<8x128xf32>
    %574 = arith.addf %538, %572 : vector<8x128xf32>
    %575 = arith.addf %573, %574 : vector<8x128xf32>
    %576 = arith.subf %393, %395 : vector<8x32xf32>
    %577 = vector.extract_strided_slice %575 {offsets = [0, 0], sizes = [8, 32], strides = [1, 1]} : vector<8x128xf32> to vector<8x32xf32>
    %578 = arith.addf %576, %577 : vector<8x32xf32>
    %579 = vector.extract_strided_slice %575 {offsets = [0, 96], sizes = [8, 32], strides = [1, 1]} : vector<8x128xf32> to vector<8x32xf32>
    %580 = arith.subf %578, %579 : vector<8x32xf32>
    %581 = arith.addf %393, %395 : vector<8x32xf32>
    %582 = vector.extract_strided_slice %575 {offsets = [0, 64], sizes = [8, 32], strides = [1, 1]} : vector<8x128xf32> to vector<8x32xf32>
    %583 = arith.addf %581, %582 : vector<8x32xf32>
    %584 = vector.extract_strided_slice %575 {offsets = [0, 32], sizes = [8, 32], strides = [1, 1]} : vector<8x128xf32> to vector<8x32xf32>
    %585 = arith.addf %583, %584 : vector<8x32xf32>
    %c0_408 = arith.constant 0 : index
    %c0_409 = arith.constant 0 : index
    %586 = vector.load %arg7[%c0_408, %c0_409] : memref<32x64xbf16, #tpu.memory_space<vmem>>, vector<32x64xbf16>
    %c0_410 = arith.constant 0 : index
    %c0_411 = arith.constant 0 : index
    %587 = vector.load %arg8[%c0_410, %c0_411] : memref<1x64xf32, #tpu.memory_space<vmem>>, vector<1x64xf32>
    %588 = arith.truncf %580 : vector<8x32xf32> to vector<8x32xbf16>
    %cst_412 = arith.constant dense<0.000000e+00> : vector<8x64xf32>
    %589 = tpu.matmul %588, %586, %cst_412 {dimension_numbers = #tpu.dot_dimension_numbers<[1], [0], [0], [1], [0, 0, 1, 1], [], []>} : vector<8x32xbf16>, vector<32x64xbf16>, vector<8x64xf32> -> vector<8x64xf32>
    %590 = vector.broadcast %587 : vector<1x64xf32> to vector<8x64xf32>
    %591 = arith.addf %589, %590 : vector<8x64xf32>
    %cst_413 = arith.constant 0.000000e+00 : f32
    %592 = vector.broadcast %cst_413 : f32 to vector<8x64xf32>
    %593 = arith.maximumf %591, %592 : vector<8x64xf32>
    %594 = arith.truncf %585 : vector<8x32xf32> to vector<8x32xbf16>
    %cst_414 = arith.constant dense<0.000000e+00> : vector<8x64xf32>
    %595 = tpu.matmul %594, %586, %cst_414 {dimension_numbers = #tpu.dot_dimension_numbers<[1], [0], [0], [1], [0, 0, 1, 1], [], []>} : vector<8x32xbf16>, vector<32x64xbf16>, vector<8x64xf32> -> vector<8x64xf32>
    %596 = vector.broadcast %587 : vector<1x64xf32> to vector<8x64xf32>
    %597 = arith.addf %595, %596 : vector<8x64xf32>
    %cst_415 = arith.constant 0.000000e+00 : f32
    %598 = vector.broadcast %cst_415 : f32 to vector<8x64xf32>
    %599 = arith.maximumf %597, %598 : vector<8x64xf32>
    %c0_416 = arith.constant 0 : index
    %c0_417 = arith.constant 0 : index
    %600 = vector.load %arg9[%c0_416, %c0_417] : memref<32x32xbf16, #tpu.memory_space<vmem>>, vector<32x32xbf16>
    %c0_418 = arith.constant 0 : index
    %c0_419 = arith.constant 0 : index
    %601 = vector.load %arg10[%c0_418, %c0_419] : memref<32x32xbf16, #tpu.memory_space<vmem>>, vector<32x32xbf16>
    %602 = vector.extract_strided_slice %593 {offsets = [0, 0], sizes = [8, 32], strides = [1, 1]} : vector<8x64xf32> to vector<8x32xf32>
    %603 = arith.truncf %602 : vector<8x32xf32> to vector<8x32xbf16>
    %cst_420 = arith.constant dense<0.000000e+00> : vector<8x32xf32>
    %604 = tpu.matmul %603, %600, %cst_420 {dimension_numbers = #tpu.dot_dimension_numbers<[1], [0], [0], [1], [0, 0, 1, 1], [], []>} : vector<8x32xbf16>, vector<32x32xbf16>, vector<8x32xf32> -> vector<8x32xf32>
    %c1_i32_421 = arith.constant 1 : i32
    %c0_i32_422 = arith.constant 0 : i32
    %c0_i32_423 = arith.constant 0 : i32
    %605 = tpu.memref_slice %arg13[%c1_i32_421, %c0_i32_422, %c0_i32_423] : memref<2x32x128xf32, #tpu.memory_space<vmem>> -> memref<1x32x128xf32, #tpu.memory_space<vmem>>
    %606 = tpu.memref_squeeze %605 : memref<1x32x128xf32, #tpu.memory_space<vmem>> -> memref<32x128xf32, #tpu.memory_space<vmem>>
    %c24_424 = arith.constant 24 : index
    %c0_425 = arith.constant 0 : index
    %607 = vector.load %606[%c24_424, %c0_425] : memref<32x128xf32, #tpu.memory_space<vmem>>, vector<8x32xf32>
    tpu.vector_store %606[%c24_424, %c0_425], %604 {strides = array<i32>} : memref<32x128xf32, #tpu.memory_space<vmem>>, vector<8x32xf32>,
    %608 = vector.extract_strided_slice %593 {offsets = [0, 32], sizes = [8, 32], strides = [1, 1]} : vector<8x64xf32> to vector<8x32xf32>
    %609 = arith.truncf %608 : vector<8x32xf32> to vector<8x32xbf16>
    %cst_426 = arith.constant dense<0.000000e+00> : vector<8x32xf32>
    %610 = tpu.matmul %609, %601, %cst_426 {dimension_numbers = #tpu.dot_dimension_numbers<[1], [0], [0], [1], [0, 0, 1, 1], [], []>} : vector<8x32xbf16>, vector<32x32xbf16>, vector<8x32xf32> -> vector<8x32xf32>
    %c1_i32_427 = arith.constant 1 : i32
    %c0_i32_428 = arith.constant 0 : i32
    %c0_i32_429 = arith.constant 0 : i32
    %611 = tpu.memref_slice %arg13[%c1_i32_427, %c0_i32_428, %c0_i32_429] : memref<2x32x128xf32, #tpu.memory_space<vmem>> -> memref<1x32x128xf32, #tpu.memory_space<vmem>>
    %612 = tpu.memref_squeeze %611 : memref<1x32x128xf32, #tpu.memory_space<vmem>> -> memref<32x128xf32, #tpu.memory_space<vmem>>
    %c24_430 = arith.constant 24 : index
    %c32_431 = arith.constant 32 : index
    %613 = vector.load %612[%c24_430, %c32_431] : memref<32x128xf32, #tpu.memory_space<vmem>>, vector<8x32xf32>
    tpu.vector_store %612[%c24_430, %c32_431], %610 {strides = array<i32>} : memref<32x128xf32, #tpu.memory_space<vmem>>, vector<8x32xf32>,
    %614 = vector.extract_strided_slice %599 {offsets = [0, 0], sizes = [8, 32], strides = [1, 1]} : vector<8x64xf32> to vector<8x32xf32>
    %615 = arith.truncf %614 : vector<8x32xf32> to vector<8x32xbf16>
    %cst_432 = arith.constant dense<0.000000e+00> : vector<8x32xf32>
    %616 = tpu.matmul %615, %600, %cst_432 {dimension_numbers = #tpu.dot_dimension_numbers<[1], [0], [0], [1], [0, 0, 1, 1], [], []>} : vector<8x32xbf16>, vector<32x32xbf16>, vector<8x32xf32> -> vector<8x32xf32>
    %c1_i32_433 = arith.constant 1 : i32
    %c0_i32_434 = arith.constant 0 : i32
    %c0_i32_435 = arith.constant 0 : i32
    %617 = tpu.memref_slice %arg13[%c1_i32_433, %c0_i32_434, %c0_i32_435] : memref<2x32x128xf32, #tpu.memory_space<vmem>> -> memref<1x32x128xf32, #tpu.memory_space<vmem>>
    %618 = tpu.memref_squeeze %617 : memref<1x32x128xf32, #tpu.memory_space<vmem>> -> memref<32x128xf32, #tpu.memory_space<vmem>>
    %c24_436 = arith.constant 24 : index
    %c64_437 = arith.constant 64 : index
    %619 = vector.load %618[%c24_436, %c64_437] : memref<32x128xf32, #tpu.memory_space<vmem>>, vector<8x32xf32>
    tpu.vector_store %618[%c24_436, %c64_437], %616 {strides = array<i32>} : memref<32x128xf32, #tpu.memory_space<vmem>>, vector<8x32xf32>,
    %620 = vector.extract_strided_slice %599 {offsets = [0, 32], sizes = [8, 32], strides = [1, 1]} : vector<8x64xf32> to vector<8x32xf32>
    %621 = arith.truncf %620 : vector<8x32xf32> to vector<8x32xbf16>
    %cst_438 = arith.constant dense<0.000000e+00> : vector<8x32xf32>
    %622 = tpu.matmul %621, %601, %cst_438 {dimension_numbers = #tpu.dot_dimension_numbers<[1], [0], [0], [1], [0, 0, 1, 1], [], []>} : vector<8x32xbf16>, vector<32x32xbf16>, vector<8x32xf32> -> vector<8x32xf32>
    %c1_i32_439 = arith.constant 1 : i32
    %c0_i32_440 = arith.constant 0 : i32
    %c0_i32_441 = arith.constant 0 : i32
    %623 = tpu.memref_slice %arg13[%c1_i32_439, %c0_i32_440, %c0_i32_441] : memref<2x32x128xf32, #tpu.memory_space<vmem>> -> memref<1x32x128xf32, #tpu.memory_space<vmem>>
    %624 = tpu.memref_squeeze %623 : memref<1x32x128xf32, #tpu.memory_space<vmem>> -> memref<32x128xf32, #tpu.memory_space<vmem>>
    %c24_442 = arith.constant 24 : index
    %c96_443 = arith.constant 96 : index
    %625 = vector.load %624[%c24_442, %c96_443] : memref<32x128xf32, #tpu.memory_space<vmem>>, vector<8x32xf32>
    tpu.vector_store %624[%c24_442, %c96_443], %622 {strides = array<i32>} : memref<32x128xf32, #tpu.memory_space<vmem>>, vector<8x32xf32>,
    %c0_444 = arith.constant 0 : index
    %c0_445 = arith.constant 0 : index
    %626 = vector.load %arg11[%c0_444, %c0_445] : memref<20x128xf32, #tpu.memory_space<vmem>>, vector<20x128xf32>
    %627 = vector.extract_strided_slice %626 {offsets = [0, 0], sizes = [1, 128], strides = [1, 1]} : vector<20x128xf32> to vector<1x128xf32>
    %c1_i32_446 = arith.constant 1 : i32
    %c0_i32_447 = arith.constant 0 : i32
    %c0_i32_448 = arith.constant 0 : i32
    %628 = tpu.memref_slice %arg13[%c1_i32_446, %c0_i32_447, %c0_i32_448] : memref<2x32x128xf32, #tpu.memory_space<vmem>> -> memref<1x32x128xf32, #tpu.memory_space<vmem>>
    %629 = tpu.memref_squeeze %628 : memref<1x32x128xf32, #tpu.memory_space<vmem>> -> memref<32x128xf32, #tpu.memory_space<vmem>>
    %c5_449 = arith.constant 5 : index
    %c0_450 = arith.constant 0 : index
    %630 = vector.load %629[%c5_449, %c0_450] : memref<32x128xf32, #tpu.memory_space<vmem>>, vector<8x128xf32>
    %631 = vector.broadcast %627 : vector<1x128xf32> to vector<8x128xf32>
    %632 = arith.mulf %631, %630 : vector<8x128xf32>
    %633 = vector.extract_strided_slice %626 {offsets = [4, 0], sizes = [1, 128], strides = [1, 1]} : vector<20x128xf32> to vector<1x128xf32>
    %c1_i32_451 = arith.constant 1 : i32
    %c0_i32_452 = arith.constant 0 : i32
    %c0_i32_453 = arith.constant 0 : i32
    %634 = tpu.memref_slice %arg13[%c1_i32_451, %c0_i32_452, %c0_i32_453] : memref<2x32x128xf32, #tpu.memory_space<vmem>> -> memref<1x32x128xf32, #tpu.memory_space<vmem>>
    %635 = tpu.memref_squeeze %634 : memref<1x32x128xf32, #tpu.memory_space<vmem>> -> memref<32x128xf32, #tpu.memory_space<vmem>>
    %c9_454 = arith.constant 9 : index
    %c0_455 = arith.constant 0 : index
    %636 = vector.load %635[%c9_454, %c0_455] : memref<32x128xf32, #tpu.memory_space<vmem>>, vector<8x128xf32>
    %637 = vector.broadcast %633 : vector<1x128xf32> to vector<8x128xf32>
    %638 = arith.mulf %637, %636 : vector<8x128xf32>
    %639 = arith.addf %632, %638 : vector<8x128xf32>
    %640 = vector.extract_strided_slice %626 {offsets = [8, 0], sizes = [1, 128], strides = [1, 1]} : vector<20x128xf32> to vector<1x128xf32>
    %c1_i32_456 = arith.constant 1 : i32
    %c0_i32_457 = arith.constant 0 : i32
    %c0_i32_458 = arith.constant 0 : i32
    %641 = tpu.memref_slice %arg13[%c1_i32_456, %c0_i32_457, %c0_i32_458] : memref<2x32x128xf32, #tpu.memory_space<vmem>> -> memref<1x32x128xf32, #tpu.memory_space<vmem>>
    %642 = tpu.memref_squeeze %641 : memref<1x32x128xf32, #tpu.memory_space<vmem>> -> memref<32x128xf32, #tpu.memory_space<vmem>>
    %c13_459 = arith.constant 13 : index
    %c0_460 = arith.constant 0 : index
    %643 = vector.load %642[%c13_459, %c0_460] : memref<32x128xf32, #tpu.memory_space<vmem>>, vector<8x128xf32>
    %644 = vector.broadcast %640 : vector<1x128xf32> to vector<8x128xf32>
    %645 = arith.mulf %644, %643 : vector<8x128xf32>
    %646 = arith.addf %639, %645 : vector<8x128xf32>
    %647 = vector.extract_strided_slice %626 {offsets = [12, 0], sizes = [1, 128], strides = [1, 1]} : vector<20x128xf32> to vector<1x128xf32>
    %c1_i32_461 = arith.constant 1 : i32
    %c0_i32_462 = arith.constant 0 : i32
    %c0_i32_463 = arith.constant 0 : i32
    %648 = tpu.memref_slice %arg13[%c1_i32_461, %c0_i32_462, %c0_i32_463] : memref<2x32x128xf32, #tpu.memory_space<vmem>> -> memref<1x32x128xf32, #tpu.memory_space<vmem>>
    %649 = tpu.memref_squeeze %648 : memref<1x32x128xf32, #tpu.memory_space<vmem>> -> memref<32x128xf32, #tpu.memory_space<vmem>>
    %c17_464 = arith.constant 17 : index
    %c0_465 = arith.constant 0 : index
    %650 = vector.load %649[%c17_464, %c0_465] : memref<32x128xf32, #tpu.memory_space<vmem>>, vector<8x128xf32>
    %651 = vector.broadcast %647 : vector<1x128xf32> to vector<8x128xf32>
    %652 = arith.mulf %651, %650 : vector<8x128xf32>
    %653 = arith.addf %646, %652 : vector<8x128xf32>
    %654 = vector.extract_strided_slice %626 {offsets = [16, 0], sizes = [1, 128], strides = [1, 1]} : vector<20x128xf32> to vector<1x128xf32>
    %c1_i32_466 = arith.constant 1 : i32
    %c0_i32_467 = arith.constant 0 : i32
    %c0_i32_468 = arith.constant 0 : i32
    %655 = tpu.memref_slice %arg13[%c1_i32_466, %c0_i32_467, %c0_i32_468] : memref<2x32x128xf32, #tpu.memory_space<vmem>> -> memref<1x32x128xf32, #tpu.memory_space<vmem>>
    %656 = tpu.memref_squeeze %655 : memref<1x32x128xf32, #tpu.memory_space<vmem>> -> memref<32x128xf32, #tpu.memory_space<vmem>>
    %c21_469 = arith.constant 21 : index
    %c0_470 = arith.constant 0 : index
    %657 = vector.load %656[%c21_469, %c0_470] : memref<32x128xf32, #tpu.memory_space<vmem>>, vector<8x128xf32>
    %658 = vector.broadcast %654 : vector<1x128xf32> to vector<8x128xf32>
    %659 = arith.mulf %658, %657 : vector<8x128xf32>
    %660 = arith.addf %653, %659 : vector<8x128xf32>
    %661 = vector.extract_strided_slice %626 {offsets = [1, 0], sizes = [1, 128], strides = [1, 1]} : vector<20x128xf32> to vector<1x128xf32>
    %c1_i32_471 = arith.constant 1 : i32
    %c0_i32_472 = arith.constant 0 : i32
    %c0_i32_473 = arith.constant 0 : i32
    %662 = tpu.memref_slice %arg13[%c1_i32_471, %c0_i32_472, %c0_i32_473] : memref<2x32x128xf32, #tpu.memory_space<vmem>> -> memref<1x32x128xf32, #tpu.memory_space<vmem>>
    %663 = tpu.memref_squeeze %662 : memref<1x32x128xf32, #tpu.memory_space<vmem>> -> memref<32x128xf32, #tpu.memory_space<vmem>>
    %c6_474 = arith.constant 6 : index
    %c0_475 = arith.constant 0 : index
    %664 = vector.load %663[%c6_474, %c0_475] : memref<32x128xf32, #tpu.memory_space<vmem>>, vector<8x128xf32>
    %665 = vector.broadcast %661 : vector<1x128xf32> to vector<8x128xf32>
    %666 = arith.mulf %665, %664 : vector<8x128xf32>
    %667 = vector.extract_strided_slice %626 {offsets = [5, 0], sizes = [1, 128], strides = [1, 1]} : vector<20x128xf32> to vector<1x128xf32>
    %c1_i32_476 = arith.constant 1 : i32
    %c0_i32_477 = arith.constant 0 : i32
    %c0_i32_478 = arith.constant 0 : i32
    %668 = tpu.memref_slice %arg13[%c1_i32_476, %c0_i32_477, %c0_i32_478] : memref<2x32x128xf32, #tpu.memory_space<vmem>> -> memref<1x32x128xf32, #tpu.memory_space<vmem>>
    %669 = tpu.memref_squeeze %668 : memref<1x32x128xf32, #tpu.memory_space<vmem>> -> memref<32x128xf32, #tpu.memory_space<vmem>>
    %c10_479 = arith.constant 10 : index
    %c0_480 = arith.constant 0 : index
    %670 = vector.load %669[%c10_479, %c0_480] : memref<32x128xf32, #tpu.memory_space<vmem>>, vector<8x128xf32>
    %671 = vector.broadcast %667 : vector<1x128xf32> to vector<8x128xf32>
    %672 = arith.mulf %671, %670 : vector<8x128xf32>
    %673 = arith.addf %666, %672 : vector<8x128xf32>
    %674 = vector.extract_strided_slice %626 {offsets = [9, 0], sizes = [1, 128], strides = [1, 1]} : vector<20x128xf32> to vector<1x128xf32>
    %c1_i32_481 = arith.constant 1 : i32
    %c0_i32_482 = arith.constant 0 : i32
    %c0_i32_483 = arith.constant 0 : i32
    %675 = tpu.memref_slice %arg13[%c1_i32_481, %c0_i32_482, %c0_i32_483] : memref<2x32x128xf32, #tpu.memory_space<vmem>> -> memref<1x32x128xf32, #tpu.memory_space<vmem>>
    %676 = tpu.memref_squeeze %675 : memref<1x32x128xf32, #tpu.memory_space<vmem>> -> memref<32x128xf32, #tpu.memory_space<vmem>>
    %c14_484 = arith.constant 14 : index
    %c0_485 = arith.constant 0 : index
    %677 = vector.load %676[%c14_484, %c0_485] : memref<32x128xf32, #tpu.memory_space<vmem>>, vector<8x128xf32>
    %678 = vector.broadcast %674 : vector<1x128xf32> to vector<8x128xf32>
    %679 = arith.mulf %678, %677 : vector<8x128xf32>
    %680 = arith.addf %673, %679 : vector<8x128xf32>
    %681 = vector.extract_strided_slice %626 {offsets = [13, 0], sizes = [1, 128], strides = [1, 1]} : vector<20x128xf32> to vector<1x128xf32>
    %c1_i32_486 = arith.constant 1 : i32
    %c0_i32_487 = arith.constant 0 : i32
    %c0_i32_488 = arith.constant 0 : i32
    %682 = tpu.memref_slice %arg13[%c1_i32_486, %c0_i32_487, %c0_i32_488] : memref<2x32x128xf32, #tpu.memory_space<vmem>> -> memref<1x32x128xf32, #tpu.memory_space<vmem>>
    %683 = tpu.memref_squeeze %682 : memref<1x32x128xf32, #tpu.memory_space<vmem>> -> memref<32x128xf32, #tpu.memory_space<vmem>>
    %c18_489 = arith.constant 18 : index
    %c0_490 = arith.constant 0 : index
    %684 = vector.load %683[%c18_489, %c0_490] : memref<32x128xf32, #tpu.memory_space<vmem>>, vector<8x128xf32>
    %685 = vector.broadcast %681 : vector<1x128xf32> to vector<8x128xf32>
    %686 = arith.mulf %685, %684 : vector<8x128xf32>
    %687 = arith.addf %680, %686 : vector<8x128xf32>
    %688 = vector.extract_strided_slice %626 {offsets = [17, 0], sizes = [1, 128], strides = [1, 1]} : vector<20x128xf32> to vector<1x128xf32>
    %c1_i32_491 = arith.constant 1 : i32
    %c0_i32_492 = arith.constant 0 : i32
    %c0_i32_493 = arith.constant 0 : i32
    %689 = tpu.memref_slice %arg13[%c1_i32_491, %c0_i32_492, %c0_i32_493] : memref<2x32x128xf32, #tpu.memory_space<vmem>> -> memref<1x32x128xf32, #tpu.memory_space<vmem>>
    %690 = tpu.memref_squeeze %689 : memref<1x32x128xf32, #tpu.memory_space<vmem>> -> memref<32x128xf32, #tpu.memory_space<vmem>>
    %c22_494 = arith.constant 22 : index
    %c0_495 = arith.constant 0 : index
    %691 = vector.load %690[%c22_494, %c0_495] : memref<32x128xf32, #tpu.memory_space<vmem>>, vector<8x128xf32>
    %692 = vector.broadcast %688 : vector<1x128xf32> to vector<8x128xf32>
    %693 = arith.mulf %692, %691 : vector<8x128xf32>
    %694 = arith.addf %687, %693 : vector<8x128xf32>
    %695 = vector.extract_strided_slice %626 {offsets = [2, 0], sizes = [1, 128], strides = [1, 1]} : vector<20x128xf32> to vector<1x128xf32>
    %c1_i32_496 = arith.constant 1 : i32
    %c0_i32_497 = arith.constant 0 : i32
    %c0_i32_498 = arith.constant 0 : i32
    %696 = tpu.memref_slice %arg13[%c1_i32_496, %c0_i32_497, %c0_i32_498] : memref<2x32x128xf32, #tpu.memory_space<vmem>> -> memref<1x32x128xf32, #tpu.memory_space<vmem>>
    %697 = tpu.memref_squeeze %696 : memref<1x32x128xf32, #tpu.memory_space<vmem>> -> memref<32x128xf32, #tpu.memory_space<vmem>>
    %c7_499 = arith.constant 7 : index
    %c0_500 = arith.constant 0 : index
    %698 = vector.load %697[%c7_499, %c0_500] : memref<32x128xf32, #tpu.memory_space<vmem>>, vector<8x128xf32>
    %699 = vector.broadcast %695 : vector<1x128xf32> to vector<8x128xf32>
    %700 = arith.mulf %699, %698 : vector<8x128xf32>
    %701 = vector.extract_strided_slice %626 {offsets = [6, 0], sizes = [1, 128], strides = [1, 1]} : vector<20x128xf32> to vector<1x128xf32>
    %c1_i32_501 = arith.constant 1 : i32
    %c0_i32_502 = arith.constant 0 : i32
    %c0_i32_503 = arith.constant 0 : i32
    %702 = tpu.memref_slice %arg13[%c1_i32_501, %c0_i32_502, %c0_i32_503] : memref<2x32x128xf32, #tpu.memory_space<vmem>> -> memref<1x32x128xf32, #tpu.memory_space<vmem>>
    %703 = tpu.memref_squeeze %702 : memref<1x32x128xf32, #tpu.memory_space<vmem>> -> memref<32x128xf32, #tpu.memory_space<vmem>>
    %c11_504 = arith.constant 11 : index
    %c0_505 = arith.constant 0 : index
    %704 = vector.load %703[%c11_504, %c0_505] : memref<32x128xf32, #tpu.memory_space<vmem>>, vector<8x128xf32>
    %705 = vector.broadcast %701 : vector<1x128xf32> to vector<8x128xf32>
    %706 = arith.mulf %705, %704 : vector<8x128xf32>
    %707 = arith.addf %700, %706 : vector<8x128xf32>
    %708 = vector.extract_strided_slice %626 {offsets = [10, 0], sizes = [1, 128], strides = [1, 1]} : vector<20x128xf32> to vector<1x128xf32>
    %c1_i32_506 = arith.constant 1 : i32
    %c0_i32_507 = arith.constant 0 : i32
    %c0_i32_508 = arith.constant 0 : i32
    %709 = tpu.memref_slice %arg13[%c1_i32_506, %c0_i32_507, %c0_i32_508] : memref<2x32x128xf32, #tpu.memory_space<vmem>> -> memref<1x32x128xf32, #tpu.memory_space<vmem>>
    %710 = tpu.memref_squeeze %709 : memref<1x32x128xf32, #tpu.memory_space<vmem>> -> memref<32x128xf32, #tpu.memory_space<vmem>>
    %c15_509 = arith.constant 15 : index
    %c0_510 = arith.constant 0 : index
    %711 = vector.load %710[%c15_509, %c0_510] : memref<32x128xf32, #tpu.memory_space<vmem>>, vector<8x128xf32>
    %712 = vector.broadcast %708 : vector<1x128xf32> to vector<8x128xf32>
    %713 = arith.mulf %712, %711 : vector<8x128xf32>
    %714 = arith.addf %707, %713 : vector<8x128xf32>
    %715 = vector.extract_strided_slice %626 {offsets = [14, 0], sizes = [1, 128], strides = [1, 1]} : vector<20x128xf32> to vector<1x128xf32>
    %c1_i32_511 = arith.constant 1 : i32
    %c0_i32_512 = arith.constant 0 : i32
    %c0_i32_513 = arith.constant 0 : i32
    %716 = tpu.memref_slice %arg13[%c1_i32_511, %c0_i32_512, %c0_i32_513] : memref<2x32x128xf32, #tpu.memory_space<vmem>> -> memref<1x32x128xf32, #tpu.memory_space<vmem>>
    %717 = tpu.memref_squeeze %716 : memref<1x32x128xf32, #tpu.memory_space<vmem>> -> memref<32x128xf32, #tpu.memory_space<vmem>>
    %c19_514 = arith.constant 19 : index
    %c0_515 = arith.constant 0 : index
    %718 = vector.load %717[%c19_514, %c0_515] : memref<32x128xf32, #tpu.memory_space<vmem>>, vector<8x128xf32>
    %719 = vector.broadcast %715 : vector<1x128xf32> to vector<8x128xf32>
    %720 = arith.mulf %719, %718 : vector<8x128xf32>
    %721 = arith.addf %714, %720 : vector<8x128xf32>
    %722 = vector.extract_strided_slice %626 {offsets = [18, 0], sizes = [1, 128], strides = [1, 1]} : vector<20x128xf32> to vector<1x128xf32>
    %c1_i32_516 = arith.constant 1 : i32
    %c0_i32_517 = arith.constant 0 : i32
    %c0_i32_518 = arith.constant 0 : i32
    %723 = tpu.memref_slice %arg13[%c1_i32_516, %c0_i32_517, %c0_i32_518] : memref<2x32x128xf32, #tpu.memory_space<vmem>> -> memref<1x32x128xf32, #tpu.memory_space<vmem>>
    %724 = tpu.memref_squeeze %723 : memref<1x32x128xf32, #tpu.memory_space<vmem>> -> memref<32x128xf32, #tpu.memory_space<vmem>>
    %c23_519 = arith.constant 23 : index
    %c0_520 = arith.constant 0 : index
    %725 = vector.load %724[%c23_519, %c0_520] : memref<32x128xf32, #tpu.memory_space<vmem>>, vector<8x128xf32>
    %726 = vector.broadcast %722 : vector<1x128xf32> to vector<8x128xf32>
    %727 = arith.mulf %726, %725 : vector<8x128xf32>
    %728 = arith.addf %721, %727 : vector<8x128xf32>
    %729 = vector.extract_strided_slice %626 {offsets = [3, 0], sizes = [1, 128], strides = [1, 1]} : vector<20x128xf32> to vector<1x128xf32>
    %c1_i32_521 = arith.constant 1 : i32
    %c0_i32_522 = arith.constant 0 : i32
    %c0_i32_523 = arith.constant 0 : i32
    %730 = tpu.memref_slice %arg13[%c1_i32_521, %c0_i32_522, %c0_i32_523] : memref<2x32x128xf32, #tpu.memory_space<vmem>> -> memref<1x32x128xf32, #tpu.memory_space<vmem>>
    %731 = tpu.memref_squeeze %730 : memref<1x32x128xf32, #tpu.memory_space<vmem>> -> memref<32x128xf32, #tpu.memory_space<vmem>>
    %c8_524 = arith.constant 8 : index
    %c0_525 = arith.constant 0 : index
    %732 = vector.load %731[%c8_524, %c0_525] : memref<32x128xf32, #tpu.memory_space<vmem>>, vector<8x128xf32>
    %733 = vector.broadcast %729 : vector<1x128xf32> to vector<8x128xf32>
    %734 = arith.mulf %733, %732 : vector<8x128xf32>
    %735 = vector.extract_strided_slice %626 {offsets = [7, 0], sizes = [1, 128], strides = [1, 1]} : vector<20x128xf32> to vector<1x128xf32>
    %c1_i32_526 = arith.constant 1 : i32
    %c0_i32_527 = arith.constant 0 : i32
    %c0_i32_528 = arith.constant 0 : i32
    %736 = tpu.memref_slice %arg13[%c1_i32_526, %c0_i32_527, %c0_i32_528] : memref<2x32x128xf32, #tpu.memory_space<vmem>> -> memref<1x32x128xf32, #tpu.memory_space<vmem>>
    %737 = tpu.memref_squeeze %736 : memref<1x32x128xf32, #tpu.memory_space<vmem>> -> memref<32x128xf32, #tpu.memory_space<vmem>>
    %c12_529 = arith.constant 12 : index
    %c0_530 = arith.constant 0 : index
    %738 = vector.load %737[%c12_529, %c0_530] : memref<32x128xf32, #tpu.memory_space<vmem>>, vector<8x128xf32>
    %739 = vector.broadcast %735 : vector<1x128xf32> to vector<8x128xf32>
    %740 = arith.mulf %739, %738 : vector<8x128xf32>
    %741 = arith.addf %734, %740 : vector<8x128xf32>
    %742 = vector.extract_strided_slice %626 {offsets = [11, 0], sizes = [1, 128], strides = [1, 1]} : vector<20x128xf32> to vector<1x128xf32>
    %c1_i32_531 = arith.constant 1 : i32
    %c0_i32_532 = arith.constant 0 : i32
    %c0_i32_533 = arith.constant 0 : i32
    %743 = tpu.memref_slice %arg13[%c1_i32_531, %c0_i32_532, %c0_i32_533] : memref<2x32x128xf32, #tpu.memory_space<vmem>> -> memref<1x32x128xf32, #tpu.memory_space<vmem>>
    %744 = tpu.memref_squeeze %743 : memref<1x32x128xf32, #tpu.memory_space<vmem>> -> memref<32x128xf32, #tpu.memory_space<vmem>>
    %c16_534 = arith.constant 16 : index
    %c0_535 = arith.constant 0 : index
    %745 = vector.load %744[%c16_534, %c0_535] : memref<32x128xf32, #tpu.memory_space<vmem>>, vector<8x128xf32>
    %746 = vector.broadcast %742 : vector<1x128xf32> to vector<8x128xf32>
    %747 = arith.mulf %746, %745 : vector<8x128xf32>
    %748 = arith.addf %741, %747 : vector<8x128xf32>
    %749 = vector.extract_strided_slice %626 {offsets = [15, 0], sizes = [1, 128], strides = [1, 1]} : vector<20x128xf32> to vector<1x128xf32>
    %c1_i32_536 = arith.constant 1 : i32
    %c0_i32_537 = arith.constant 0 : i32
    %c0_i32_538 = arith.constant 0 : i32
    %750 = tpu.memref_slice %arg13[%c1_i32_536, %c0_i32_537, %c0_i32_538] : memref<2x32x128xf32, #tpu.memory_space<vmem>> -> memref<1x32x128xf32, #tpu.memory_space<vmem>>
    %751 = tpu.memref_squeeze %750 : memref<1x32x128xf32, #tpu.memory_space<vmem>> -> memref<32x128xf32, #tpu.memory_space<vmem>>
    %c20_539 = arith.constant 20 : index
    %c0_540 = arith.constant 0 : index
    %752 = vector.load %751[%c20_539, %c0_540] : memref<32x128xf32, #tpu.memory_space<vmem>>, vector<8x128xf32>
    %753 = vector.broadcast %749 : vector<1x128xf32> to vector<8x128xf32>
    %754 = arith.mulf %753, %752 : vector<8x128xf32>
    %755 = arith.addf %748, %754 : vector<8x128xf32>
    %756 = vector.extract_strided_slice %626 {offsets = [19, 0], sizes = [1, 128], strides = [1, 1]} : vector<20x128xf32> to vector<1x128xf32>
    %c1_i32_541 = arith.constant 1 : i32
    %c0_i32_542 = arith.constant 0 : i32
    %c0_i32_543 = arith.constant 0 : i32
    %757 = tpu.memref_slice %arg13[%c1_i32_541, %c0_i32_542, %c0_i32_543] : memref<2x32x128xf32, #tpu.memory_space<vmem>> -> memref<1x32x128xf32, #tpu.memory_space<vmem>>
    %758 = tpu.memref_squeeze %757 : memref<1x32x128xf32, #tpu.memory_space<vmem>> -> memref<32x128xf32, #tpu.memory_space<vmem>>
    %c24_544 = arith.constant 24 : index
    %c0_545 = arith.constant 0 : index
    %759 = vector.load %758[%c24_544, %c0_545] : memref<32x128xf32, #tpu.memory_space<vmem>>, vector<8x128xf32>
    %760 = vector.broadcast %756 : vector<1x128xf32> to vector<8x128xf32>
    %761 = arith.mulf %760, %759 : vector<8x128xf32>
    %762 = arith.addf %755, %761 : vector<8x128xf32>
    %763 = arith.addf %660, %694 : vector<8x128xf32>
    %764 = arith.addf %728, %762 : vector<8x128xf32>
    %765 = arith.addf %763, %764 : vector<8x128xf32>
    %766 = arith.subf %580, %585 : vector<8x32xf32>
    %767 = vector.extract_strided_slice %765 {offsets = [0, 0], sizes = [8, 32], strides = [1, 1]} : vector<8x128xf32> to vector<8x32xf32>
    %768 = arith.addf %766, %767 : vector<8x32xf32>
    %769 = vector.extract_strided_slice %765 {offsets = [0, 96], sizes = [8, 32], strides = [1, 1]} : vector<8x128xf32> to vector<8x32xf32>
    %770 = arith.subf %768, %769 : vector<8x32xf32>
    %771 = arith.addf %580, %585 : vector<8x32xf32>
    %772 = vector.extract_strided_slice %765 {offsets = [0, 64], sizes = [8, 32], strides = [1, 1]} : vector<8x128xf32> to vector<8x32xf32>
    %773 = arith.addf %771, %772 : vector<8x32xf32>
    %774 = vector.extract_strided_slice %765 {offsets = [0, 32], sizes = [8, 32], strides = [1, 1]} : vector<8x128xf32> to vector<8x32xf32>
    %775 = arith.addf %773, %774 : vector<8x32xf32>
    %c1_546 = arith.constant 1 : index
    %c0_547 = arith.constant 0 : index
    %c0_548 = arith.constant 0 : index
    %776 = vector.load %arg12[%c1_546, %c0_547, %c0_548] : memref<2x8x64xf32, #tpu.memory_space<vmem>>, vector<1x8x32xf32>
    %777 = vector.shape_cast %776 : vector<1x8x32xf32> to vector<8x32xf32>
    %778 = vector.shape_cast %770 : vector<8x32xf32> to vector<1x8x32xf32>
    tpu.vector_store %arg12[%c1_546, %c0_547, %c0_548], %778 {strides = array<i32>} : memref<2x8x64xf32, #tpu.memory_space<vmem>>, vector<1x8x32xf32>,
    %c1_549 = arith.constant 1 : index
    %c0_550 = arith.constant 0 : index
    %c32_551 = arith.constant 32 : index
    %779 = vector.load %arg12[%c1_549, %c0_550, %c32_551] : memref<2x8x64xf32, #tpu.memory_space<vmem>>, vector<1x8x32xf32>
    %780 = vector.shape_cast %779 : vector<1x8x32xf32> to vector<8x32xf32>
    %781 = vector.shape_cast %775 : vector<8x32xf32> to vector<1x8x32xf32>
    tpu.vector_store %arg12[%c1_549, %c0_550, %c32_551], %781 {strides = array<i32>} : memref<2x8x64xf32, #tpu.memory_space<vmem>>, vector<1x8x32xf32>,
    return
  }
  func.func @transform_0(%arg0: i32) -> (i32, i32, i32) {
    %c0_i32 = arith.constant 0 : i32
    %c0_i32_0 = arith.constant 0 : i32
    %c0_i32_1 = arith.constant 0 : i32
    return %arg0, %c0_i32, %c0_i32_0 : i32, i32, i32
  }
  func.func @transform_1(%arg0: i32) -> (i32, i32) {
    %c0_i32 = arith.constant 0 : i32
    %c0_i32_0 = arith.constant 0 : i32
    %c0_i32_1 = arith.constant 0 : i32
    return %c0_i32, %c0_i32_0 : i32, i32
  }
  func.func @transform_2(%arg0: i32) -> (i32, i32) {
    %c0_i32 = arith.constant 0 : i32
    %c0_i32_0 = arith.constant 0 : i32
    %c0_i32_1 = arith.constant 0 : i32
    return %c0_i32, %c0_i32_0 : i32, i32
  }
  func.func @transform_3(%arg0: i32) -> (i32, i32) {
    %c0_i32 = arith.constant 0 : i32
    %c0_i32_0 = arith.constant 0 : i32
    %c0_i32_1 = arith.constant 0 : i32
    return %c0_i32, %c0_i32_0 : i32, i32
  }
  func.func @transform_4(%arg0: i32) -> (i32, i32) {
    %c0_i32 = arith.constant 0 : i32
    %c0_i32_0 = arith.constant 0 : i32
    %c0_i32_1 = arith.constant 0 : i32
    return %c0_i32, %c0_i32_0 : i32, i32
  }
  func.func @transform_5(%arg0: i32) -> (i32, i32) {
    %c0_i32 = arith.constant 0 : i32
    %c0_i32_0 = arith.constant 0 : i32
    %c0_i32_1 = arith.constant 0 : i32
    return %c0_i32, %c0_i32_0 : i32, i32
  }
  func.func @transform_6(%arg0: i32) -> (i32, i32) {
    %c0_i32 = arith.constant 0 : i32
    %c0_i32_0 = arith.constant 0 : i32
    %c0_i32_1 = arith.constant 0 : i32
    return %c0_i32, %c0_i32_0 : i32, i32
  }
  func.func @transform_7(%arg0: i32) -> (i32, i32) {
    %c0_i32 = arith.constant 0 : i32
    %c0_i32_0 = arith.constant 0 : i32
    %c0_i32_1 = arith.constant 0 : i32
    return %c0_i32, %c0_i32_0 : i32, i32
  }
  func.func @transform_8(%arg0: i32) -> (i32, i32) {
    %c0_i32 = arith.constant 0 : i32
    %c0_i32_0 = arith.constant 0 : i32
    %c0_i32_1 = arith.constant 0 : i32
    return %c0_i32, %c0_i32_0 : i32, i32
  }
  func.func @transform_9(%arg0: i32) -> (i32, i32) {
    %c0_i32 = arith.constant 0 : i32
    %c0_i32_0 = arith.constant 0 : i32
    %c0_i32_1 = arith.constant 0 : i32
    return %c0_i32, %c0_i32_0 : i32, i32
  }
  func.func @transform_10(%arg0: i32) -> (i32, i32) {
    %c0_i32 = arith.constant 0 : i32
    %c0_i32_0 = arith.constant 0 : i32
    %c0_i32_1 = arith.constant 0 : i32
    return %c0_i32, %c0_i32_0 : i32, i32
  }
  func.func @transform_11(%arg0: i32) -> (i32, i32, i32) {
    %c0_i32 = arith.constant 0 : i32
    %c0_i32_0 = arith.constant 0 : i32
    %c0_i32_1 = arith.constant 0 : i32
    return %arg0, %c0_i32, %c0_i32_0 : i32, i32, i32
  }
}

</mosaic_0001>

<llo_original>
// kernel: complex_uni_deep_fsmn.1
$region0: #{complex_uni_deep_fsmn.1}
  #allocation0 [shape = 'u32[]', space=smem, size = 0x4, offset = 0x4, fixed_abs, tag = 'smem constant byte address 0x4 - core index']
  #allocation1 [shape = 'u32[144,128]{1,0:T(1,128)}', space=vmem, size = 0x12000, scoped, tag = 'internal scratch']
  #allocation2 [shape = 'f32[2,32,128]{2,1,0:T(8,128)}', space=vmem, size = 0x8000, scoped, tag = 'scratch operand']
  %s0 = inlined_call_operand.vmem [shape: f32[2,8,64], index: 0, kind: input, shape index: {}]
  %s1 = inlined_call_operand.vmem [shape: bf16[32,64], index: 1, kind: input, shape index: {}]
  %s2 = inlined_call_operand.vmem [shape: f32[1,64], index: 2, kind: input, shape index: {}]
  %s3 = inlined_call_operand.vmem [shape: bf16[32,32], index: 3, kind: input, shape index: {}]
  %s4 = inlined_call_operand.vmem [shape: bf16[32,32], index: 4, kind: input, shape index: {}]
  %s5 = inlined_call_operand.vmem [shape: f32[20,128], index: 5, kind: input, shape index: {}]
  %s6 = inlined_call_operand.vmem [shape: bf16[32,64], index: 6, kind: input, shape index: {}]
  %s7 = inlined_call_operand.vmem [shape: f32[1,64], index: 7, kind: input, shape index: {}]
  %s8 = inlined_call_operand.vmem [shape: bf16[32,32], index: 8, kind: input, shape index: {}]
  %s9 = inlined_call_operand.vmem [shape: bf16[32,32], index: 9, kind: input, shape index: {}]
  %s10 = inlined_call_operand.vmem [shape: f32[20,128], index: 10, kind: input, shape index: {}]
  %s11 = inlined_call_operand.vmem [shape: f32[2,8,64], index: 11, kind: output, shape index: {}]
  %s12 = sld [smem:[#allocation0]]
  $region54: #{complex_uni_deep_fsmn.1} parent=0
    _
  %s14 = ssub.s32 1, %s12
  %s15 = scalar_select 0, %s14, %s12
  // Predicated region
  $region2: #{complex_uni_deep_fsmn.1} parent=0 // pred_check
    _
  $region3: #{complex_uni_deep_fsmn.1} parent=0 // pred_check_branch
    %17 = sbr.rel (0) target = $region5
  $region4: #{complex_uni_deep_fsmn.1} parent=0 // pred_region
    _
  $region5: #{complex_uni_deep_fsmn.1} parent=0 // pred_fallthru
    _
  // Predicated region
  $region6: #{complex_uni_deep_fsmn.1} parent=0 // pred_check
    _
  $region7: #{complex_uni_deep_fsmn.1} parent=0 // pred_check_branch
    %19 = sbr.rel (0) target = $region9
  $region8: #{complex_uni_deep_fsmn.1} parent=0 // pred_region
    _
  $region9: #{complex_uni_deep_fsmn.1} parent=0 // pred_fallthru
    _
  // Predicated region
  $region10: #{complex_uni_deep_fsmn.1} parent=0 // pred_check
    _
  $region11: #{complex_uni_deep_fsmn.1} parent=0 // pred_check_branch
    %21 = sbr.rel (0) target = $region13
  $region12: #{complex_uni_deep_fsmn.1} parent=0 // pred_region
    _
  $region13: #{complex_uni_deep_fsmn.1} parent=0 // pred_fallthru
    _
  // Predicated region
  $region14: #{complex_uni_deep_fsmn.1} parent=0 // pred_check
    _
  $region15: #{complex_uni_deep_fsmn.1} parent=0 // pred_check_branch
    %23 = sbr.rel (0) target = $region17
  $region16: #{complex_uni_deep_fsmn.1} parent=0 // pred_region
    _
  $region17: #{complex_uni_deep_fsmn.1} parent=0 // pred_fallthru
    _
  // Predicated region
  $region18: #{complex_uni_deep_fsmn.1} parent=0 // pred_check
    _
  $region19: #{complex_uni_deep_fsmn.1} parent=0 // pred_check_branch
    %25 = sbr.rel (0) target = $region21
  $region20: #{complex_uni_deep_fsmn.1} parent=0 // pred_region
    _
  $region21: #{complex_uni_deep_fsmn.1} parent=0 // pred_fallthru
    _
  // Predicated region
  $region22: #{complex_uni_deep_fsmn.1} parent=0 // pred_check
    _
  $region23: #{complex_uni_deep_fsmn.1} parent=0 // pred_check_branch
    %27 = sbr.rel (0) target = $region25
  $region24: #{complex_uni_deep_fsmn.1} parent=0 // pred_region
    _
  $region25: #{complex_uni_deep_fsmn.1} parent=0 // pred_fallthru
    _
  // Predicated region
  $region26: #{complex_uni_deep_fsmn.1} parent=0 // pred_check
    _
  $region27: #{complex_uni_deep_fsmn.1} parent=0 // pred_check_branch
    %29 = sbr.rel (0) target = $region29
  $region28: #{complex_uni_deep_fsmn.1} parent=0 // pred_region
    _
  $region29: #{complex_uni_deep_fsmn.1} parent=0 // pred_fallthru
    _
  // Predicated region
  $region30: #{complex_uni_deep_fsmn.1} parent=0 // pred_check
    _
  $region31: #{complex_uni_deep_fsmn.1} parent=0 // pred_check_branch
    %31 = sbr.rel (0) target = $region33
  $region32: #{complex_uni_deep_fsmn.1} parent=0 // pred_region
    _
  $region33: #{complex_uni_deep_fsmn.1} parent=0 // pred_fallthru
    _
  // Predicated region
  $region34: #{complex_uni_deep_fsmn.1} parent=0 // pred_check
    _
  $region35: #{complex_uni_deep_fsmn.1} parent=0 // pred_check_branch
    %33 = sbr.rel (0) target = $region37
  $region36: #{complex_uni_deep_fsmn.1} parent=0 // pred_region
    _
  $region37: #{complex_uni_deep_fsmn.1} parent=0 // pred_fallthru
    _
  // Predicated region
  $region38: #{complex_uni_deep_fsmn.1} parent=0 // pred_check
    _
  $region39: #{complex_uni_deep_fsmn.1} parent=0 // pred_check_branch
    %35 = sbr.rel (0) target = $region41
  $region40: #{complex_uni_deep_fsmn.1} parent=0 // pred_region
    _
  $region41: #{complex_uni_deep_fsmn.1} parent=0 // pred_fallthru
    _
  // Predicated region
  $region42: #{complex_uni_deep_fsmn.1} parent=0 // pred_check
    _
  $region43: #{complex_uni_deep_fsmn.1} parent=0 // pred_check_branch
    %37 = sbr.rel (0) target = $region45
  $region44: #{complex_uni_deep_fsmn.1} parent=0 // pred_region
    _
  $region45: #{complex_uni_deep_fsmn.1} parent=0 // pred_fallthru
    _
  %39 = vst [vmem:[#allocation2] sm:$0xff] 0.0
  %40 = vst [vmem:[#allocation2 + $0x8] sm:$0xff] 0.0
  %41 = vst [vmem:[#allocation2 + $0x10] sm:$0xff] 0.0
  %42 = vst [vmem:[#allocation2 + $0x20] sm:$0xff] 0.0
  %43 = vst [vmem:[#allocation2 + $0x28] sm:$0xff] 0.0
  %44 = vst [vmem:[#allocation2 + $0x30] sm:$0xff] 0.0
  %v45 = vld [vmem:[%s0] sm:$0xff]
  %v46 = vld [vmem:[%s1] sm:$0xf]
  %v47 = vld [vmem:[%s1 + $0x4] sm:$0xf]
  %v48 = vld [vmem:[%s1 + $0x8] sm:$0xf]
  %v49 = vld [vmem:[%s1 + $0xc] sm:$0xf]
  %v50 = vld [vmem:[%s2] sm:$0x1]
  %v51 = vpack.c.bf16 %v45, %v45
  %v53 = vlaneseq
  %v54 = vshrl.u32 %v53, 7
  %v55 = vsub.s32 0, %v54
  %v56 = vrot.slane %v50, %v55
  %v62 = vunpack.c.l.b16 %v46
  %v63 = vunpack.c.l.b16 %v47
  %v64 = vunpack.c.l.b16 %v48
  %v65 = vunpack.c.l.b16 %v49
  %v66 = vpack.c.b16 %v63, %v62
  %v67 = vpack.c.b16 %v65, %v64
  %vm70 = vcmask 261120
  %v72 = vsel %vm70, %v51, 0
  %74 = vmatprep.subr.bf16.mxu0 0
  %75 = vmatpush1.bf16.msra.mxu0 %v66
  %76 = vmatprep.subr.bf16.mxu0 0
  %77 = vmatpush1.bf16.msra.mxu0 %v67
  %78 = vmatprep.subr.bf16.mxu0 0
  %79 = vmatpush1.bf16.msra.mxu0 0
  %80 = vmatprep.subr.bf16.mxu0 0
  %81 = vmatpush1.bf16.msra.mxu0 0
  %82 = vmatprep.subr.bf16.mxu0 0
  %83 = vmatpush1.bf16.msra.mxu0 0
  %84 = vmatprep.subr.bf16.mxu0 0
  %85 = vmatpush1.bf16.msra.mxu0 0
  %86 = vmatprep.subr.bf16.mxu0 0
  %87 = vmatpush1.bf16.msra.mxu0 0
  %88 = vmatprep.subr.bf16.mxu0 0
  %89 = vmatpush1.bf16.msra.mxu0 0
  %90 = vmatprep.subr.bf16.mxu0 0
  %91 = vmatpush1.bf16.msra.mxu0 0
  %92 = vmatprep.subr.bf16.mxu0 0
  %93 = vmatpush1.bf16.msra.mxu0 0
  %94 = vmatprep.subr.bf16.mxu0 0
  %95 = vmatpush1.bf16.msra.mxu0 0
  %96 = vmatprep.subr.bf16.mxu0 0
  %97 = vmatpush1.bf16.msra.mxu0 0
  %98 = vmatprep.subr.bf16.mxu0 0
  %99 = vmatpush1.bf16.msra.mxu0 0
  %100 = vmatprep.subr.bf16.mxu0 0
  %101 = vmatpush1.bf16.msra.mxu0 0
  %102 = vmatprep.subr.bf16.mxu0 0
  %103 = vmatpush1.bf16.msra.mxu0 0
  %104 = vmatprep.subr.bf16.mxu0 0
  %105 = vmatpush1.bf16.msra.mxu0 0
  %106 = vmatprep.mubr.bf16.mxu0 0
  %107 = vmatmul.mubr.bf16.gmra.mrb[0].mxu0 %v72
  %v108 = vpop.f32.mrb[0].mxu0
  %v109 = vadd.f32 %v56, %v108
  %v110 = vpop.f32.mrb[0].mxu0
  %v111 = vpop.f32.mrb[0].mxu0
  %v112 = vpop.f32.mrb[0].mxu0
  %113 = vdwg.mxu0
  %v114 = vmax.f32 %v109, 0.0
  %116 = vrot.lane.b32.xlu0 %v51, 96
  %v117 = vpop.permute.xlu0 %116
  %v119 = vsel %vm70, %v117, 0
  %121 = vmatprep.subr.bf16.mxu0 0
  %122 = vmatpush1.bf16.msra.mxu0 %v66
  %123 = vmatprep.subr.bf16.mxu0 0
  %124 = vmatpush1.bf16.msra.mxu0 %v67
  %125 = vmatprep.subr.bf16.mxu0 0
  %126 = vmatpush1.bf16.msra.mxu0 0
  %127 = vmatprep.subr.bf16.mxu0 0
  %128 = vmatpush1.bf16.msra.mxu0 0
  %129 = vmatprep.subr.bf16.mxu0 0
  %130 = vmatpush1.bf16.msra.mxu0 0
  %131 = vmatprep.subr.bf16.mxu0 0
  %132 = vmatpush1.bf16.msra.mxu0 0
  %133 = vmatprep.subr.bf16.mxu0 0
  %134 = vmatpush1.bf16.msra.mxu0 0
  %135 = vmatprep.subr.bf16.mxu0 0
  %136 = vmatpush1.bf16.msra.mxu0 0
  %137 = vmatprep.subr.bf16.mxu0 0
  %138 = vmatpush1.bf16.msra.mxu0 0
  %139 = vmatprep.subr.bf16.mxu0 0
  %140 = vmatpush1.bf16.msra.mxu0 0
  %141 = vmatprep.subr.bf16.mxu0 0
  %142 = vmatpush1.bf16.msra.mxu0 0
  %143 = vmatprep.subr.bf16.mxu0 0
  %144 = vmatpush1.bf16.msra.mxu0 0
  %145 = vmatprep.subr.bf16.mxu0 0
  %146 = vmatpush1.bf16.msra.mxu0 0
  %147 = vmatprep.subr.bf16.mxu0 0
  %148 = vmatpush1.bf16.msra.mxu0 0
  %149 = vmatprep.subr.bf16.mxu0 0
  %150 = vmatpush1.bf16.msra.mxu0 0
  %151 = vmatprep.subr.bf16.mxu0 0
  %152 = vmatpush1.bf16.msra.mxu0 0
  %153 = vmatprep.mubr.bf16.mxu0 0
  %154 = vmatmul.mubr.bf16.gmra.mrb[0].mxu0 %v119
  %v155 = vpop.f32.mrb[0].mxu0
  %v156 = vadd.f32 %v56, %v155
  %v157 = vpop.f32.mrb[0].mxu0
  %v158 = vpop.f32.mrb[0].mxu0
  %v159 = vpop.f32.mrb[0].mxu0
  %160 = vdwg.mxu0
  %v161 = vmax.f32 %v156, 0.0
  %v162 = vld [vmem:[%s3] sm:$0xf]
  %v163 = vld [vmem:[%s3 + $0x4] sm:$0xf]
  %v164 = vld [vmem:[%s3 + $0x8] sm:$0xf]
  %v165 = vld [vmem:[%s3 + $0xc] sm:$0xf]
  %v166 = vld [vmem:[%s4] sm:$0xf]
  %v167 = vld [vmem:[%s4 + $0x4] sm:$0xf]
  %v168 = vld [vmem:[%s4 + $0x8] sm:$0xf]
  %v169 = vld [vmem:[%s4 + $0xc] sm:$0xf]
  %v170 = vpack.c.bf16 %v114, %v114
  %v175 = vunpack.c.l.b16 %v162
  %v176 = vunpack.c.l.b16 %v163
  %v177 = vunpack.c.l.b16 %v164
  %v178 = vunpack.c.l.b16 %v165
  %v179 = vpack.c.b16 %v176, %v175
  %v180 = vpack.c.b16 %v178, %v177
  %v184 = vsel %vm70, %v170, 0
  %186 = vmatprep.subr.bf16.mxu0 0
  %187 = vmatpush1.bf16.msra.mxu0 %v179
  %188 = vmatprep.subr.bf16.mxu0 0
  %189 = vmatpush1.bf16.msra.mxu0 %v180
  %190 = vmatprep.subr.bf16.mxu0 0
  %191 = vmatpush1.bf16.msra.mxu0 0
  %192 = vmatprep.subr.bf16.mxu0 0
  %193 = vmatpush1.bf16.msra.mxu0 0
  %194 = vmatprep.subr.bf16.mxu0 0
  %195 = vmatpush1.bf16.msra.mxu0 0
  %196 = vmatprep.subr.bf16.mxu0 0
  %197 = vmatpush1.bf16.msra.mxu0 0
  %198 = vmatprep.subr.bf16.mxu0 0
  %199 = vmatpush1.bf16.msra.mxu0 0
  %200 = vmatprep.subr.bf16.mxu0 0
  %201 = vmatpush1.bf16.msra.mxu0 0
  %202 = vmatprep.subr.bf16.mxu0 0
  %203 = vmatpush1.bf16.msra.mxu0 0
  %204 = vmatprep.subr.bf16.mxu0 0
  %205 = vmatpush1.bf16.msra.mxu0 0
  %206 = vmatprep.subr.bf16.mxu0 0
  %207 = vmatpush1.bf16.msra.mxu0 0
  %208 = vmatprep.subr.bf16.mxu0 0
  %209 = vmatpush1.bf16.msra.mxu0 0
  %210 = vmatprep.subr.bf16.mxu0 0
  %211 = vmatpush1.bf16.msra.mxu0 0
  %212 = vmatprep.subr.bf16.mxu0 0
  %213 = vmatpush1.bf16.msra.mxu0 0
  %214 = vmatprep.subr.bf16.mxu0 0
  %215 = vmatpush1.bf16.msra.mxu0 0
  %216 = vmatprep.subr.bf16.mxu0 0
  %217 = vmatpush1.bf16.msra.mxu0 0
  %218 = vmatprep.mubr.bf16.mxu0 0
  %219 = vmatmul.mubr.bf16.gmra.mrb[0].mxu0 %v184
  %v220 = vpop.f32.mrb[0].mxu0
  %v221 = vadd.f32 0.0, %v220
  %v222 = vpop.f32.mrb[0].mxu0
  %v223 = vpop.f32.mrb[0].mxu0
  %v224 = vpop.f32.mrb[0].mxu0
  %225 = vdwg.mxu0
  %226 = vst.msk [vmem:[#allocation2 + $0x18] sm:$0xff] %vm70, %v221
  %228 = vrot.lane.b32.xlu0 %v170, 96
  %v229 = vpop.permute.xlu0 %228
  %v234 = vunpack.c.l.b16 %v166
  %v235 = vunpack.c.l.b16 %v167
  %v236 = vunpack.c.l.b16 %v168
  %v237 = vunpack.c.l.b16 %v169
  %v238 = vpack.c.b16 %v235, %v234
  %v239 = vpack.c.b16 %v237, %v236
  %v243 = vsel %vm70, %v229, 0
  %245 = vmatprep.subr.bf16.mxu0 0
  %246 = vmatpush1.bf16.msra.mxu0 %v238
  %247 = vmatprep.subr.bf16.mxu0 0
  %248 = vmatpush1.bf16.msra.mxu0 %v239
  %249 = vmatprep.subr.bf16.mxu0 0
  %250 = vmatpush1.bf16.msra.mxu0 0
  %251 = vmatprep.subr.bf16.mxu0 0
  %252 = vmatpush1.bf16.msra.mxu0 0
  %253 = vmatprep.subr.bf16.mxu0 0
  %254 = vmatpush1.bf16.msra.mxu0 0
  %255 = vmatprep.subr.bf16.mxu0 0
  %256 = vmatpush1.bf16.msra.mxu0 0
  %257 = vmatprep.subr.bf16.mxu0 0
  %258 = vmatpush1.bf16.msra.mxu0 0
  %259 = vmatprep.subr.bf16.mxu0 0
  %260 = vmatpush1.bf16.msra.mxu0 0
  %261 = vmatprep.subr.bf16.mxu0 0
  %262 = vmatpush1.bf16.msra.mxu0 0
  %263 = vmatprep.subr.bf16.mxu0 0
  %264 = vmatpush1.bf16.msra.mxu0 0
  %265 = vmatprep.subr.bf16.mxu0 0
  %266 = vmatpush1.bf16.msra.mxu0 0
  %267 = vmatprep.subr.bf16.mxu0 0
  %268 = vmatpush1.bf16.msra.mxu0 0
  %269 = vmatprep.subr.bf16.mxu0 0
  %270 = vmatpush1.bf16.msra.mxu0 0
  %271 = vmatprep.subr.bf16.mxu0 0
  %272 = vmatpush1.bf16.msra.mxu0 0
  %273 = vmatprep.subr.bf16.mxu0 0
  %274 = vmatpush1.bf16.msra.mxu0 0
  %275 = vmatprep.subr.bf16.mxu0 0
  %276 = vmatpush1.bf16.msra.mxu0 0
  %277 = vmatprep.mubr.bf16.mxu0 0
  %278 = vmatmul.mubr.bf16.gmra.mrb[0].mxu0 %v243
  %v279 = vpop.f32.mrb[0].mxu0
  %v280 = vadd.f32 0.0, %v279
  %v281 = vpop.f32.mrb[0].mxu0
  %v282 = vpop.f32.mrb[0].mxu0
  %v283 = vpop.f32.mrb[0].mxu0
  %284 = vdwg.mxu0
  %286 = vrot.lane.b32.xlu0 %v280, 32
  %v287 = vpop.permute.xlu0 %286
  %vm289 = vcmask 523520
  %290 = vst.msk [vmem:[#allocation2 + $0x18] sm:$0xff] %vm289, %v287
  %v291 = vpack.c.bf16 %v161, %v161
  %v293 = vsel %vm70, %v291, 0
  %295 = vmatprep.subr.bf16.mxu0 0
  %296 = vmatpush1.bf16.msra.mxu0 %v179
  %297 = vmatprep.subr.bf16.mxu0 0
  %298 = vmatpush1.bf16.msra.mxu0 %v180
  %299 = vmatprep.subr.bf16.mxu0 0
  %300 = vmatpush1.bf16.msra.mxu0 0
  %301 = vmatprep.subr.bf16.mxu0 0
  %302 = vmatpush1.bf16.msra.mxu0 0
  %303 = vmatprep.subr.bf16.mxu0 0
  %304 = vmatpush1.bf16.msra.mxu0 0
  %305 = vmatprep.subr.bf16.mxu0 0
  %306 = vmatpush1.bf16.msra.mxu0 0
  %307 = vmatprep.subr.bf16.mxu0 0
  %308 = vmatpush1.bf16.msra.mxu0 0
  %309 = vmatprep.subr.bf16.mxu0 0
  %310 = vmatpush1.bf16.msra.mxu0 0
  %311 = vmatprep.subr.bf16.mxu0 0
  %312 = vmatpush1.bf16.msra.mxu0 0
  %313 = vmatprep.subr.bf16.mxu0 0
  %314 = vmatpush1.bf16.msra.mxu0 0
  %315 = vmatprep.subr.bf16.mxu0 0
  %316 = vmatpush1.bf16.msra.mxu0 0
  %317 = vmatprep.subr.bf16.mxu0 0
  %318 = vmatpush1.bf16.msra.mxu0 0
  %319 = vmatprep.subr.bf16.mxu0 0
  %320 = vmatpush1.bf16.msra.mxu0 0
  %321 = vmatprep.subr.bf16.mxu0 0
  %322 = vmatpush1.bf16.msra.mxu0 0
  %323 = vmatprep.subr.bf16.mxu0 0
  %324 = vmatpush1.bf16.msra.mxu0 0
  %325 = vmatprep.subr.bf16.mxu0 0
  %326 = vmatpush1.bf16.msra.mxu0 0
  %327 = vmatprep.mubr.bf16.mxu0 0
  %328 = vmatmul.mubr.bf16.gmra.mrb[0].mxu0 %v293
  %v329 = vpop.f32.mrb[0].mxu0
  %v330 = vadd.f32 0.0, %v329
  %v331 = vpop.f32.mrb[0].mxu0
  %v332 = vpop.f32.mrb[0].mxu0
  %v333 = vpop.f32.mrb[0].mxu0
  %334 = vdwg.mxu0
  %336 = vrot.lane.b32.xlu0 %v330, 64
  %v337 = vpop.permute.xlu0 %336
  %vm339 = vcmask 785920
  %340 = vst.msk [vmem:[#allocation2 + $0x18] sm:$0xff] %vm339, %v337
  %342 = vrot.lane.b32.xlu0 %v291, 96
  %v343 = vpop.permute.xlu0 %342
  %v345 = vsel %vm70, %v343, 0
  %347 = vmatprep.subr.bf16.mxu0 0
  %348 = vmatpush1.bf16.msra.mxu0 %v238
  %349 = vmatprep.subr.bf16.mxu0 0
  %350 = vmatpush1.bf16.msra.mxu0 %v239
  %351 = vmatprep.subr.bf16.mxu0 0
  %352 = vmatpush1.bf16.msra.mxu0 0
  %353 = vmatprep.subr.bf16.mxu0 0
  %354 = vmatpush1.bf16.msra.mxu0 0
  %355 = vmatprep.subr.bf16.mxu0 0
  %356 = vmatpush1.bf16.msra.mxu0 0
  %357 = vmatprep.subr.bf16.mxu0 0
  %358 = vmatpush1.bf16.msra.mxu0 0
  %359 = vmatprep.subr.bf16.mxu0 0
  %360 = vmatpush1.bf16.msra.mxu0 0
  %361 = vmatprep.subr.bf16.mxu0 0
  %362 = vmatpush1.bf16.msra.mxu0 0
  %363 = vmatprep.subr.bf16.mxu0 0
  %364 = vmatpush1.bf16.msra.mxu0 0
  %365 = vmatprep.subr.bf16.mxu0 0
  %366 = vmatpush1.bf16.msra.mxu0 0
  %367 = vmatprep.subr.bf16.mxu0 0
  %368 = vmatpush1.bf16.msra.mxu0 0
  %369 = vmatprep.subr.bf16.mxu0 0
  %370 = vmatpush1.bf16.msra.mxu0 0
  %371 = vmatprep.subr.bf16.mxu0 0
  %372 = vmatpush1.bf16.msra.mxu0 0
  %373 = vmatprep.subr.bf16.mxu0 0
  %374 = vmatpush1.bf16.msra.mxu0 0
  %375 = vmatprep.subr.bf16.mxu0 0
  %376 = vmatpush1.bf16.msra.mxu0 0
  %377 = vmatprep.subr.bf16.mxu0 0
  %378 = vmatpush1.bf16.msra.mxu0 0
  %379 = vmatprep.mubr.bf16.mxu0 0
  %380 = vmatmul.mubr.bf16.gmra.mrb[0].mxu0 %v345
  %v381 = vpop.f32.mrb[0].mxu0
  %v382 = vadd.f32 0.0, %v381
  %v383 = vpop.f32.mrb[0].mxu0
  %v384 = vpop.f32.mrb[0].mxu0
  %v385 = vpop.f32.mrb[0].mxu0
  %386 = vdwg.mxu0
  %388 = vrot.lane.b32.xlu0 %v382, 96
  %v389 = vpop.permute.xlu0 %388
  %vm391 = vcmask 1048320
  %392 = vst.msk [vmem:[#allocation2 + $0x18] sm:$0xff] %vm391, %v389
  %v393 = vld [vmem:[%s5] sm:$0xff]
  %v394 = vld [vmem:[%s5 + $0x8] sm:$0xff]
  %v395 = vld [vmem:[%s5 + $0x10] sm:$0xf]
  %v396 = vld [vmem:[#allocation2 + $0x5] sm:$0xff]
  %v397 = vlaneseq
  %v398 = vshrl.u32 %v397, 7
  %v399 = vsub.s32 0, %v398
  %v400 = vrot.slane %v393, %v399
  %v401 = vmul.f32 %v400, %v396
  %v402 = vld [vmem:[#allocation2 + $0x9] sm:$0xff]
  %v403 = vlaneseq
  %v404 = vshrl.u32 %v403, 7
  %v405 = vsub.s32 4, %v404
  %v406 = vrot.slane %v393, %v405
  %v407 = vmul.f32 %v406, %v402
  %v408 = vadd.f32 %v401, %v407
  %v409 = vld [vmem:[#allocation2 + $0xd] sm:$0xff]
  %v410 = vlaneseq
  %v411 = vshrl.u32 %v410, 7
  %v412 = vsub.s32 0, %v411
  %v413 = vrot.slane %v394, %v412
  %v414 = vmul.f32 %v413, %v409
  %v415 = vadd.f32 %v408, %v414
  %v416 = vld [vmem:[#allocation2 + $0x11] sm:$0xff]
  %v417 = vlaneseq
  %v418 = vshrl.u32 %v417, 7
  %v419 = vsub.s32 4, %v418
  %v420 = vrot.slane %v394, %v419
  %v421 = vmul.f32 %v420, %v416
  %v422 = vadd.f32 %v415, %v421
  %v423 = vld [vmem:[#allocation2 + $0x15] sm:$0xff]
  %v424 = vlaneseq
  %v425 = vshrl.u32 %v424, 7
  %v426 = vsub.s32 0, %v425
  %v427 = vrot.slane %v395, %v426
  %v428 = vmul.f32 %v427, %v423
  %v429 = vadd.f32 %v422, %v428
  %v430 = vld [vmem:[#allocation2 + $0x6] sm:$0xff]
  %v431 = vlaneseq
  %v432 = vshrl.u32 %v431, 7
  %v433 = vsub.s32 1, %v432
  %v434 = vrot.slane %v393, %v433
  %v435 = vmul.f32 %v434, %v430
  %v436 = vld [vmem:[#allocation2 + $0xa] sm:$0xff]
  %v437 = vlaneseq
  %v438 = vshrl.u32 %v437, 7
  %v439 = vsub.s32 5, %v438
  %v440 = vrot.slane %v393, %v439
  %v441 = vmul.f32 %v440, %v436
  %v442 = vadd.f32 %v435, %v441
  %v443 = vld [vmem:[#allocation2 + $0xe] sm:$0xff]
  %v444 = vlaneseq
  %v445 = vshrl.u32 %v444, 7
  %v446 = vsub.s32 1, %v445
  %v447 = vrot.slane %v394, %v446
  %v448 = vmul.f32 %v447, %v443
  %v449 = vadd.f32 %v442, %v448
  %v450 = vld [vmem:[#allocation2 + $0x12] sm:$0xff]
  %v451 = vlaneseq
  %v452 = vshrl.u32 %v451, 7
  %v453 = vsub.s32 5, %v452
  %v454 = vrot.slane %v394, %v453
  %v455 = vmul.f32 %v454, %v450
  %v456 = vadd.f32 %v449, %v455
  %v457 = vld [vmem:[#allocation2 + $0x16] sm:$0xff]
  %v458 = vlaneseq
  %v459 = vshrl.u32 %v458, 7
  %v460 = vsub.s32 1, %v459
  %v461 = vrot.slane %v395, %v460
  %v462 = vmul.f32 %v461, %v457
  %v463 = vadd.f32 %v456, %v462
  %v464 = vld [vmem:[#allocation2 + $0x7] sm:$0xff]
  %v465 = vlaneseq
  %v466 = vshrl.u32 %v465, 7
  %v467 = vsub.s32 2, %v466
  %v468 = vrot.slane %v393, %v467
  %v469 = vmul.f32 %v468, %v464
  %v470 = vld [vmem:[#allocation2 + $0xb] sm:$0xff]
  %v471 = vlaneseq
  %v472 = vshrl.u32 %v471, 7
  %v473 = vsub.s32 6, %v472
  %v474 = vrot.slane %v393, %v473
  %v475 = vmul.f32 %v474, %v470
  %v476 = vadd.f32 %v469, %v475
  %v477 = vld [vmem:[#allocation2 + $0xf] sm:$0xff]
  %v478 = vlaneseq
  %v479 = vshrl.u32 %v478, 7
  %v480 = vsub.s32 2, %v479
  %v481 = vrot.slane %v394, %v480
  %v482 = vmul.f32 %v481, %v477
  %v483 = vadd.f32 %v476, %v482
  %v484 = vld [vmem:[#allocation2 + $0x13] sm:$0xff]
  %v485 = vlaneseq
  %v486 = vshrl.u32 %v485, 7
  %v487 = vsub.s32 6, %v486
  %v488 = vrot.slane %v394, %v487
  %v489 = vmul.f32 %v488, %v484
  %v490 = vadd.f32 %v483, %v489
  %v491 = vld [vmem:[#allocation2 + $0x17] sm:$0xff]
  %v492 = vlaneseq
  %v493 = vshrl.u32 %v492, 7
  %v494 = vsub.s32 2, %v493
  %v495 = vrot.slane %v395, %v494
  %v496 = vmul.f32 %v495, %v491
  %v497 = vadd.f32 %v490, %v496
  %v498 = vld [vmem:[#allocation2 + $0x8] sm:$0xff]
  %v499 = vlaneseq
  %v500 = vshrl.u32 %v499, 7
  %v501 = vsub.s32 3, %v500
  %v502 = vrot.slane %v393, %v501
  %v503 = vmul.f32 %v502, %v498
  %v504 = vld [vmem:[#allocation2 + $0xc] sm:$0xff]
  %v505 = vlaneseq
  %v506 = vshrl.u32 %v505, 7
  %v507 = vsub.s32 7, %v506
  %v508 = vrot.slane %v393, %v507
  %v509 = vmul.f32 %v508, %v504
  %v510 = vadd.f32 %v503, %v509
  %v511 = vld [vmem:[#allocation2 + $0x10] sm:$0xff]
  %v512 = vlaneseq
  %v513 = vshrl.u32 %v512, 7
  %v514 = vsub.s32 3, %v513
  %v515 = vrot.slane %v394, %v514
  %v516 = vmul.f32 %v515, %v511
  %v517 = vadd.f32 %v510, %v516
  %v518 = vld [vmem:[#allocation2 + $0x14] sm:$0xff]
  %v519 = vlaneseq
  %v520 = vshrl.u32 %v519, 7
  %v521 = vsub.s32 7, %v520
  %v522 = vrot.slane %v394, %v521
  %v523 = vmul.f32 %v522, %v518
  %v524 = vadd.f32 %v517, %v523
  %v525 = vld [vmem:[#allocation2 + $0x18] sm:$0xff]
  %v526 = vlaneseq
  %v527 = vshrl.u32 %v526, 7
  %v528 = vsub.s32 3, %v527
  %v529 = vrot.slane %v395, %v528
  %v530 = vmul.f32 %v529, %v525
  %v531 = vadd.f32 %v524, %v530
  %v532 = vadd.f32 %v429, %v463
  %v533 = vadd.f32 %v497, %v531
  %v534 = vadd.f32 %v532, %v533
  %536 = vrot.lane.b32.xlu0 %v45, 96
  %v537 = vpop.permute.xlu0 %536
  %v539 = vsub.f32 %v45, %v537
  %v540 = vadd.f32 %v539, %v534
  %542 = vrot.lane.b32.xlu0 %v534, 32
  %v543 = vpop.permute.xlu0 %542
  %v545 = vsub.f32 %v540, %v543
  %v546 = vadd.f32 %v45, %v537
  %547 = vrot.lane.b32.xlu0 %v534, 64
  %v548 = vpop.permute.xlu0 %547
  %v550 = vadd.f32 %v546, %v548
  %551 = vrot.lane.b32.xlu0 %v534, 96
  %v552 = vpop.permute.xlu0 %551
  %v554 = vadd.f32 %v550, %v552
  %v555 = vld [vmem:[%s6] sm:$0xf]
  %v556 = vld [vmem:[%s6 + $0x4] sm:$0xf]
  %v557 = vld [vmem:[%s6 + $0x8] sm:$0xf]
  %v558 = vld [vmem:[%s6 + $0xc] sm:$0xf]
  %v559 = vld [vmem:[%s7] sm:$0x1]
  %v560 = vpack.c.bf16 %v545, %v545
  %v562 = vlaneseq
  %v563 = vshrl.u32 %v562, 7
  %v564 = vsub.s32 0, %v563
  %v565 = vrot.slane %v559, %v564
  %v571 = vunpack.c.l.b16 %v555
  %v572 = vunpack.c.l.b16 %v556
  %v573 = vunpack.c.l.b16 %v557
  %v574 = vunpack.c.l.b16 %v558
  %v575 = vpack.c.b16 %v572, %v571
  %v576 = vpack.c.b16 %v574, %v573
  %v580 = vsel %vm70, %v560, 0
  %582 = vmatprep.subr.bf16.mxu0 0
  %583 = vmatpush1.bf16.msra.mxu0 %v575
  %584 = vmatprep.subr.bf16.mxu0 0
  %585 = vmatpush1.bf16.msra.mxu0 %v576
  %586 = vmatprep.subr.bf16.mxu0 0
  %587 = vmatpush1.bf16.msra.mxu0 0
  %588 = vmatprep.subr.bf16.mxu0 0
  %589 = vmatpush1.bf16.msra.mxu0 0
  %590 = vmatprep.subr.bf16.mxu0 0
  %591 = vmatpush1.bf16.msra.mxu0 0
  %592 = vmatprep.subr.bf16.mxu0 0
  %593 = vmatpush1.bf16.msra.mxu0 0
  %594 = vmatprep.subr.bf16.mxu0 0
  %595 = vmatpush1.bf16.msra.mxu0 0
  %596 = vmatprep.subr.bf16.mxu0 0
  %597 = vmatpush1.bf16.msra.mxu0 0
  %598 = vmatprep.subr.bf16.mxu0 0
  %599 = vmatpush1.bf16.msra.mxu0 0
  %600 = vmatprep.subr.bf16.mxu0 0
  %601 = vmatpush1.bf16.msra.mxu0 0
  %602 = vmatprep.subr.bf16.mxu0 0
  %603 = vmatpush1.bf16.msra.mxu0 0
  %604 = vmatprep.subr.bf16.mxu0 0
  %605 = vmatpush1.bf16.msra.mxu0 0
  %606 = vmatprep.subr.bf16.mxu0 0
  %607 = vmatpush1.bf16.msra.mxu0 0
  %608 = vmatprep.subr.bf16.mxu0 0
  %609 = vmatpush1.bf16.msra.mxu0 0
  %610 = vmatprep.subr.bf16.mxu0 0
  %611 = vmatpush1.bf16.msra.mxu0 0
  %612 = vmatprep.subr.bf16.mxu0 0
  %613 = vmatpush1.bf16.msra.mxu0 0
  %614 = vmatprep.mubr.bf16.mxu0 0
  %615 = vmatmul.mubr.bf16.gmra.mrb[0].mxu0 %v580
  %v616 = vpop.f32.mrb[0].mxu0
  %v617 = vadd.f32 %v565, %v616
  %v618 = vpop.f32.mrb[0].mxu0
  %v619 = vpop.f32.mrb[0].mxu0
  %v620 = vpop.f32.mrb[0].mxu0
  %621 = vdwg.mxu0
  %v622 = vmax.f32 %v617, 0.0
  %v623 = vpack.c.bf16 %v554, %v554
  %v625 = vsel %vm70, %v623, 0
  %627 = vmatprep.subr.bf16.mxu0 0
  %628 = vmatpush1.bf16.msra.mxu0 %v575
  %629 = vmatprep.subr.bf16.mxu0 0
  %630 = vmatpush1.bf16.msra.mxu0 %v576
  %631 = vmatprep.subr.bf16.mxu0 0
  %632 = vmatpush1.bf16.msra.mxu0 0
  %633 = vmatprep.subr.bf16.mxu0 0
  %634 = vmatpush1.bf16.msra.mxu0 0
  %635 = vmatprep.subr.bf16.mxu0 0
  %636 = vmatpush1.bf16.msra.mxu0 0
  %637 = vmatprep.subr.bf16.mxu0 0
  %638 = vmatpush1.bf16.msra.mxu0 0
  %639 = vmatprep.subr.bf16.mxu0 0
  %640 = vmatpush1.bf16.msra.mxu0 0
  %641 = vmatprep.subr.bf16.mxu0 0
  %642 = vmatpush1.bf16.msra.mxu0 0
  %643 = vmatprep.subr.bf16.mxu0 0
  %644 = vmatpush1.bf16.msra.mxu0 0
  %645 = vmatprep.subr.bf16.mxu0 0
  %646 = vmatpush1.bf16.msra.mxu0 0
  %647 = vmatprep.subr.bf16.mxu0 0
  %648 = vmatpush1.bf16.msra.mxu0 0
  %649 = vmatprep.subr.bf16.mxu0 0
  %650 = vmatpush1.bf16.msra.mxu0 0
  %651 = vmatprep.subr.bf16.mxu0 0
  %652 = vmatpush1.bf16.msra.mxu0 0
  %653 = vmatprep.subr.bf16.mxu0 0
  %654 = vmatpush1.bf16.msra.mxu0 0
  %655 = vmatprep.subr.bf16.mxu0 0
  %656 = vmatpush1.bf16.msra.mxu0 0
  %657 = vmatprep.subr.bf16.mxu0 0
  %658 = vmatpush1.bf16.msra.mxu0 0
  %659 = vmatprep.mubr.bf16.mxu0 0
  %660 = vmatmul.mubr.bf16.gmra.mrb[0].mxu0 %v625
  %v661 = vpop.f32.mrb[0].mxu0
  %v662 = vadd.f32 %v565, %v661
  %v663 = vpop.f32.mrb[0].mxu0
  %v664 = vpop.f32.mrb[0].mxu0
  %v665 = vpop.f32.mrb[0].mxu0
  %666 = vdwg.mxu0
  %v667 = vmax.f32 %v662, 0.0
  %v668 = vld [vmem:[%s8] sm:$0xf]
  %v669 = vld [vmem:[%s8 + $0x4] sm:$0xf]
  %v670 = vld [vmem:[%s8 + $0x8] sm:$0xf]
  %v671 = vld [vmem:[%s8 + $0xc] sm:$0xf]
  %v672 = vld [vmem:[%s9] sm:$0xf]
  %v673 = vld [vmem:[%s9 + $0x4] sm:$0xf]
  %v674 = vld [vmem:[%s9 + $0x8] sm:$0xf]
  %v675 = vld [vmem:[%s9 + $0xc] sm:$0xf]
  %v676 = vpack.c.bf16 %v622, %v622
  %v681 = vunpack.c.l.b16 %v668
  %v682 = vunpack.c.l.b16 %v669
  %v683 = vunpack.c.l.b16 %v670
  %v684 = vunpack.c.l.b16 %v671
  %v685 = vpack.c.b16 %v682, %v681
  %v686 = vpack.c.b16 %v684, %v683
  %v690 = vsel %vm70, %v676, 0
  %692 = vmatprep.subr.bf16.mxu0 0
  %693 = vmatpush1.bf16.msra.mxu0 %v685
  %694 = vmatprep.subr.bf16.mxu0 0
  %695 = vmatpush1.bf16.msra.mxu0 %v686
  %696 = vmatprep.subr.bf16.mxu0 0
  %697 = vmatpush1.bf16.msra.mxu0 0
  %698 = vmatprep.subr.bf16.mxu0 0
  %699 = vmatpush1.bf16.msra.mxu0 0
  %700 = vmatprep.subr.bf16.mxu0 0
  %701 = vmatpush1.bf16.msra.mxu0 0
  %702 = vmatprep.subr.bf16.mxu0 0
  %703 = vmatpush1.bf16.msra.mxu0 0
  %704 = vmatprep.subr.bf16.mxu0 0
  %705 = vmatpush1.bf16.msra.mxu0 0
  %706 = vmatprep.subr.bf16.mxu0 0
  %707 = vmatpush1.bf16.msra.mxu0 0
  %708 = vmatprep.subr.bf16.mxu0 0
  %709 = vmatpush1.bf16.msra.mxu0 0
  %710 = vmatprep.subr.bf16.mxu0 0
  %711 = vmatpush1.bf16.msra.mxu0 0
  %712 = vmatprep.subr.bf16.mxu0 0
  %713 = vmatpush1.bf16.msra.mxu0 0
  %714 = vmatprep.subr.bf16.mxu0 0
  %715 = vmatpush1.bf16.msra.mxu0 0
  %716 = vmatprep.subr.bf16.mxu0 0
  %717 = vmatpush1.bf16.msra.mxu0 0
  %718 = vmatprep.subr.bf16.mxu0 0
  %719 = vmatpush1.bf16.msra.mxu0 0
  %720 = vmatprep.subr.bf16.mxu0 0
  %721 = vmatpush1.bf16.msra.mxu0 0
  %722 = vmatprep.subr.bf16.mxu0 0
  %723 = vmatpush1.bf16.msra.mxu0 0
  %724 = vmatprep.mubr.bf16.mxu0 0
  %725 = vmatmul.mubr.bf16.gmra.mrb[0].mxu0 %v690
  %v726 = vpop.f32.mrb[0].mxu0
  %v727 = vadd.f32 0.0, %v726
  %v728 = vpop.f32.mrb[0].mxu0
  %v729 = vpop.f32.mrb[0].mxu0
  %v730 = vpop.f32.mrb[0].mxu0
  %731 = vdwg.mxu0
  %732 = vst.msk [vmem:[#allocation2 + $0x18] sm:$0xff] %vm70, %v727
  %734 = vrot.lane.b32.xlu0 %v676, 96
  %v735 = vpop.permute.xlu0 %734
  %v740 = vunpack.c.l.b16 %v672
  %v741 = vunpack.c.l.b16 %v673
  %v742 = vunpack.c.l.b16 %v674
  %v743 = vunpack.c.l.b16 %v675
  %v744 = vpack.c.b16 %v741, %v740
  %v745 = vpack.c.b16 %v743, %v742
  %v749 = vsel %vm70, %v735, 0
  %751 = vmatprep.subr.bf16.mxu0 0
  %752 = vmatpush1.bf16.msra.mxu0 %v744
  %753 = vmatprep.subr.bf16.mxu0 0
  %754 = vmatpush1.bf16.msra.mxu0 %v745
  %755 = vmatprep.subr.bf16.mxu0 0
  %756 = vmatpush1.bf16.msra.mxu0 0
  %757 = vmatprep.subr.bf16.mxu0 0
  %758 = vmatpush1.bf16.msra.mxu0 0
  %759 = vmatprep.subr.bf16.mxu0 0
  %760 = vmatpush1.bf16.msra.mxu0 0
  %761 = vmatprep.subr.bf16.mxu0 0
  %762 = vmatpush1.bf16.msra.mxu0 0
  %763 = vmatprep.subr.bf16.mxu0 0
  %764 = vmatpush1.bf16.msra.mxu0 0
  %765 = vmatprep.subr.bf16.mxu0 0
  %766 = vmatpush1.bf16.msra.mxu0 0
  %767 = vmatprep.subr.bf16.mxu0 0
  %768 = vmatpush1.bf16.msra.mxu0 0
  %769 = vmatprep.subr.bf16.mxu0 0
  %770 = vmatpush1.bf16.msra.mxu0 0
  %771 = vmatprep.subr.bf16.mxu0 0
  %772 = vmatpush1.bf16.msra.mxu0 0
  %773 = vmatprep.subr.bf16.mxu0 0
  %774 = vmatpush1.bf16.msra.mxu0 0
  %775 = vmatprep.subr.bf16.mxu0 0
  %776 = vmatpush1.bf16.msra.mxu0 0
  %777 = vmatprep.subr.bf16.mxu0 0
  %778 = vmatpush1.bf16.msra.mxu0 0
  %779 = vmatprep.subr.bf16.mxu0 0
  %780 = vmatpush1.bf16.msra.mxu0 0
  %781 = vmatprep.subr.bf16.mxu0 0
  %782 = vmatpush1.bf16.msra.mxu0 0
  %783 = vmatprep.mubr.bf16.mxu0 0
  %784 = vmatmul.mubr.bf16.gmra.mrb[0].mxu0 %v749
  %v785 = vpop.f32.mrb[0].mxu0
  %v786 = vadd.f32 0.0, %v785
  %v787 = vpop.f32.mrb[0].mxu0
  %v788 = vpop.f32.mrb[0].mxu0
  %v789 = vpop.f32.mrb[0].mxu0
  %790 = vdwg.mxu0
  %792 = vrot.lane.b32.xlu0 %v786, 32
  %v793 = vpop.permute.xlu0 %792
  %795 = vst.msk [vmem:[#allocation2 + $0x18] sm:$0xff] %vm289, %v793
  %v796 = vpack.c.bf16 %v667, %v667
  %v798 = vsel %vm70, %v796, 0
  %800 = vmatprep.subr.bf16.mxu0 0
  %801 = vmatpush1.bf16.msra.mxu0 %v685
  %802 = vmatprep.subr.bf16.mxu0 0
  %803 = vmatpush1.bf16.msra.mxu0 %v686
  %804 = vmatprep.subr.bf16.mxu0 0
  %805 = vmatpush1.bf16.msra.mxu0 0
  %806 = vmatprep.subr.bf16.mxu0 0
  %807 = vmatpush1.bf16.msra.mxu0 0
  %808 = vmatprep.subr.bf16.mxu0 0
  %809 = vmatpush1.bf16.msra.mxu0 0
  %810 = vmatprep.subr.bf16.mxu0 0
  %811 = vmatpush1.bf16.msra.mxu0 0
  %812 = vmatprep.subr.bf16.mxu0 0
  %813 = vmatpush1.bf16.msra.mxu0 0
  %814 = vmatprep.subr.bf16.mxu0 0
  %815 = vmatpush1.bf16.msra.mxu0 0
  %816 = vmatprep.subr.bf16.mxu0 0
  %817 = vmatpush1.bf16.msra.mxu0 0
  %818 = vmatprep.subr.bf16.mxu0 0
  %819 = vmatpush1.bf16.msra.mxu0 0
  %820 = vmatprep.subr.bf16.mxu0 0
  %821 = vmatpush1.bf16.msra.mxu0 0
  %822 = vmatprep.subr.bf16.mxu0 0
  %823 = vmatpush1.bf16.msra.mxu0 0
  %824 = vmatprep.subr.bf16.mxu0 0
  %825 = vmatpush1.bf16.msra.mxu0 0
  %826 = vmatprep.subr.bf16.mxu0 0
  %827 = vmatpush1.bf16.msra.mxu0 0
  %828 = vmatprep.subr.bf16.mxu0 0
  %829 = vmatpush1.bf16.msra.mxu0 0
  %830 = vmatprep.subr.bf16.mxu0 0
  %831 = vmatpush1.bf16.msra.mxu0 0
  %832 = vmatprep.mubr.bf16.mxu0 0
  %833 = vmatmul.mubr.bf16.gmra.mrb[0].mxu0 %v798
  %v834 = vpop.f32.mrb[0].mxu0
  %v835 = vadd.f32 0.0, %v834
  %v836 = vpop.f32.mrb[0].mxu0
  %v837 = vpop.f32.mrb[0].mxu0
  %v838 = vpop.f32.mrb[0].mxu0
  %839 = vdwg.mxu0
  %841 = vrot.lane.b32.xlu0 %v835, 64
  %v842 = vpop.permute.xlu0 %841
  %844 = vst.msk [vmem:[#allocation2 + $0x18] sm:$0xff] %vm339, %v842
  %846 = vrot.lane.b32.xlu0 %v796, 96
  %v847 = vpop.permute.xlu0 %846
  %v849 = vsel %vm70, %v847, 0
  %851 = vmatprep.subr.bf16.mxu0 0
  %852 = vmatpush1.bf16.msra.mxu0 %v744
  %853 = vmatprep.subr.bf16.mxu0 0
  %854 = vmatpush1.bf16.msra.mxu0 %v745
  %855 = vmatprep.subr.bf16.mxu0 0
  %856 = vmatpush1.bf16.msra.mxu0 0
  %857 = vmatprep.subr.bf16.mxu0 0
  %858 = vmatpush1.bf16.msra.mxu0 0
  %859 = vmatprep.subr.bf16.mxu0 0
  %860 = vmatpush1.bf16.msra.mxu0 0
  %861 = vmatprep.subr.bf16.mxu0 0
  %862 = vmatpush1.bf16.msra.mxu0 0
  %863 = vmatprep.subr.bf16.mxu0 0
  %864 = vmatpush1.bf16.msra.mxu0 0
  %865 = vmatprep.subr.bf16.mxu0 0
  %866 = vmatpush1.bf16.msra.mxu0 0
  %867 = vmatprep.subr.bf16.mxu0 0
  %868 = vmatpush1.bf16.msra.mxu0 0
  %869 = vmatprep.subr.bf16.mxu0 0
  %870 = vmatpush1.bf16.msra.mxu0 0
  %871 = vmatprep.subr.bf16.mxu0 0
  %872 = vmatpush1.bf16.msra.mxu0 0
  %873 = vmatprep.subr.bf16.mxu0 0
  %874 = vmatpush1.bf16.msra.mxu0 0
  %875 = vmatprep.subr.bf16.mxu0 0
  %876 = vmatpush1.bf16.msra.mxu0 0
  %877 = vmatprep.subr.bf16.mxu0 0
  %878 = vmatpush1.bf16.msra.mxu0 0
  %879 = vmatprep.subr.bf16.mxu0 0
  %880 = vmatpush1.bf16.msra.mxu0 0
  %881 = vmatprep.subr.bf16.mxu0 0
  %882 = vmatpush1.bf16.msra.mxu0 0
  %883 = vmatprep.mubr.bf16.mxu0 0
  %884 = vmatmul.mubr.bf16.gmra.mrb[0].mxu0 %v849
  %v885 = vpop.f32.mrb[0].mxu0
  %v886 = vadd.f32 0.0, %v885
  %v887 = vpop.f32.mrb[0].mxu0
  %v888 = vpop.f32.mrb[0].mxu0
  %v889 = vpop.f32.mrb[0].mxu0
  %890 = vdwg.mxu0
  %892 = vrot.lane.b32.xlu0 %v886, 96
  %v893 = vpop.permute.xlu0 %892
  %895 = vst.msk [vmem:[#allocation2 + $0x18] sm:$0xff] %vm391, %v893
  %v896 = vld [vmem:[%s10] sm:$0xff]
  %v897 = vld [vmem:[%s10 + $0x8] sm:$0xff]
  %v898 = vld [vmem:[%s10 + $0x10] sm:$0xf]
  %v899 = vld [vmem:[#allocation2 + $0x5] sm:$0xff]
  %v900 = vlaneseq
  %v901 = vshrl.u32 %v900, 7
  %v902 = vsub.s32 0, %v901
  %v903 = vrot.slane %v896, %v902
  %v904 = vmul.f32 %v903, %v899
  %v905 = vld [vmem:[#allocation2 + $0x9] sm:$0xff]
  %v906 = vlaneseq
  %v907 = vshrl.u32 %v906, 7
  %v908 = vsub.s32 4, %v907
  %v909 = vrot.slane %v896, %v908
  %v910 = vmul.f32 %v909, %v905
  %v911 = vadd.f32 %v904, %v910
  %v912 = vld [vmem:[#allocation2 + $0xd] sm:$0xff]
  %v913 = vlaneseq
  %v914 = vshrl.u32 %v913, 7
  %v915 = vsub.s32 0, %v914
  %v916 = vrot.slane %v897, %v915
  %v917 = vmul.f32 %v916, %v912
  %v918 = vadd.f32 %v911, %v917
  %v919 = vld [vmem:[#allocation2 + $0x11] sm:$0xff]
  %v920 = vlaneseq
  %v921 = vshrl.u32 %v920, 7
  %v922 = vsub.s32 4, %v921
  %v923 = vrot.slane %v897, %v922
  %v924 = vmul.f32 %v923, %v919
  %v925 = vadd.f32 %v918, %v924
  %v926 = vld [vmem:[#allocation2 + $0x15] sm:$0xff]
  %v927 = vlaneseq
  %v928 = vshrl.u32 %v927, 7
  %v929 = vsub.s32 0, %v928
  %v930 = vrot.slane %v898, %v929
  %v931 = vmul.f32 %v930, %v926
  %v932 = vadd.f32 %v925, %v931
  %v933 = vld [vmem:[#allocation2 + $0x6] sm:$0xff]
  %v934 = vlaneseq
  %v935 = vshrl.u32 %v934, 7
  %v936 = vsub.s32 1, %v935
  %v937 = vrot.slane %v896, %v936
  %v938 = vmul.f32 %v937, %v933
  %v939 = vld [vmem:[#allocation2 + $0xa] sm:$0xff]
  %v940 = vlaneseq
  %v941 = vshrl.u32 %v940, 7
  %v942 = vsub.s32 5, %v941
  %v943 = vrot.slane %v896, %v942
  %v944 = vmul.f32 %v943, %v939
  %v945 = vadd.f32 %v938, %v944
  %v946 = vld [vmem:[#allocation2 + $0xe] sm:$0xff]
  %v947 = vlaneseq
  %v948 = vshrl.u32 %v947, 7
  %v949 = vsub.s32 1, %v948
  %v950 = vrot.slane %v897, %v949
  %v951 = vmul.f32 %v950, %v946
  %v952 = vadd.f32 %v945, %v951
  %v953 = vld [vmem:[#allocation2 + $0x12] sm:$0xff]
  %v954 = vlaneseq
  %v955 = vshrl.u32 %v954, 7
  %v956 = vsub.s32 5, %v955
  %v957 = vrot.slane %v897, %v956
  %v958 = vmul.f32 %v957, %v953
  %v959 = vadd.f32 %v952, %v958
  %v960 = vld [vmem:[#allocation2 + $0x16] sm:$0xff]
  %v961 = vlaneseq
  %v962 = vshrl.u32 %v961, 7
  %v963 = vsub.s32 1, %v962
  %v964 = vrot.slane %v898, %v963
  %v965 = vmul.f32 %v964, %v960
  %v966 = vadd.f32 %v959, %v965
  %v967 = vld [vmem:[#allocation2 + $0x7] sm:$0xff]
  %v968 = vlaneseq
  %v969 = vshrl.u32 %v968, 7
  %v970 = vsub.s32 2, %v969
  %v971 = vrot.slane %v896, %v970
  %v972 = vmul.f32 %v971, %v967
  %v973 = vld [vmem:[#allocation2 + $0xb] sm:$0xff]
  %v974 = vlaneseq
  %v975 = vshrl.u32 %v974, 7
  %v976 = vsub.s32 6, %v975
  %v977 = vrot.slane %v896, %v976
  %v978 = vmul.f32 %v977, %v973
  %v979 = vadd.f32 %v972, %v978
  %v980 = vld [vmem:[#allocation2 + $0xf] sm:$0xff]
  %v981 = vlaneseq
  %v982 = vshrl.u32 %v981, 7
  %v983 = vsub.s32 2, %v982
  %v984 = vrot.slane %v897, %v983
  %v985 = vmul.f32 %v984, %v980
  %v986 = vadd.f32 %v979, %v985
  %v987 = vld [vmem:[#allocation2 + $0x13] sm:$0xff]
  %v988 = vlaneseq
  %v989 = vshrl.u32 %v988, 7
  %v990 = vsub.s32 6, %v989
  %v991 = vrot.slane %v897, %v990
  %v992 = vmul.f32 %v991, %v987
  %v993 = vadd.f32 %v986, %v992
  %v994 = vld [vmem:[#allocation2 + $0x17] sm:$0xff]
  %v995 = vlaneseq
  %v996 = vshrl.u32 %v995, 7
  %v997 = vsub.s32 2, %v996
  %v998 = vrot.slane %v898, %v997
  %v999 = vmul.f32 %v998, %v994
  %v1000 = vadd.f32 %v993, %v999
  %v1001 = vld [vmem:[#allocation2 + $0x8] sm:$0xff]
  %v1002 = vlaneseq
  %v1003 = vshrl.u32 %v1002, 7
  %v1004 = vsub.s32 3, %v1003
  %v1005 = vrot.slane %v896, %v1004
  %v1006 = vmul.f32 %v1005, %v1001
  %v1007 = vld [vmem:[#allocation2 + $0xc] sm:$0xff]
  %v1008 = vlaneseq
  %v1009 = vshrl.u32 %v1008, 7
  %v1010 = vsub.s32 7, %v1009
  %v1011 = vrot.slane %v896, %v1010
  %v1012 = vmul.f32 %v1011, %v1007
  %v1013 = vadd.f32 %v1006, %v1012
  %v1014 = vld [vmem:[#allocation2 + $0x10] sm:$0xff]
  %v1015 = vlaneseq
  %v1016 = vshrl.u32 %v1015, 7
  %v1017 = vsub.s32 3, %v1016
  %v1018 = vrot.slane %v897, %v1017
  %v1019 = vmul.f32 %v1018, %v1014
  %v1020 = vadd.f32 %v1013, %v1019
  %v1021 = vld [vmem:[#allocation2 + $0x14] sm:$0xff]
  %v1022 = vlaneseq
  %v1023 = vshrl.u32 %v1022, 7
  %v1024 = vsub.s32 7, %v1023
  %v1025 = vrot.slane %v897, %v1024
  %v1026 = vmul.f32 %v1025, %v1021
  %v1027 = vadd.f32 %v1020, %v1026
  %v1028 = vld [vmem:[#allocation2 + $0x18] sm:$0xff]
  %v1029 = vlaneseq
  %v1030 = vshrl.u32 %v1029, 7
  %v1031 = vsub.s32 3, %v1030
  %v1032 = vrot.slane %v898, %v1031
  %v1033 = vmul.f32 %v1032, %v1028
  %v1034 = vadd.f32 %v1027, %v1033
  %v1035 = vadd.f32 %v932, %v966
  %v1036 = vadd.f32 %v1000, %v1034
  %v1037 = vadd.f32 %v1035, %v1036
  %v1038 = vsub.f32 %v545, %v554
  %v1039 = vadd.f32 %v1038, %v1037
  %1041 = vrot.lane.b32.xlu0 %v1037, 32
  %v1042 = vpop.permute.xlu0 %1041
  %v1044 = vsub.f32 %v1039, %v1042
  %v1045 = vadd.f32 %v545, %v554
  %1046 = vrot.lane.b32.xlu0 %v1037, 64
  %v1047 = vpop.permute.xlu0 %1046
  %v1049 = vadd.f32 %v1045, %v1047
  %1050 = vrot.lane.b32.xlu0 %v1037, 96
  %v1051 = vpop.permute.xlu0 %1050
  %v1053 = vadd.f32 %v1049, %v1051
  %1054 = vst.msk [vmem:[%s11] sm:$0xff] %vm70, %v1044
  %1056 = vrot.lane.b32.xlu0 %v1053, 32
  %v1057 = vpop.permute.xlu0 %1056
  %1059 = vst.msk [vmem:[%s11] sm:$0xff] %vm289, %v1057
  %s1060 = scalar_lea.vmem %s0, 8
  %v1061 = vld [vmem:[%s1060] sm:$0xff]
  %v1062 = vld [vmem:[%s1] sm:$0xf]
  %v1063 = vld [vmem:[%s1 + $0x4] sm:$0xf]
  %v1064 = vld [vmem:[%s1 + $0x8] sm:$0xf]
  %v1065 = vld [vmem:[%s1 + $0xc] sm:$0xf]
  %v1066 = vld [vmem:[%s2] sm:$0x1]
  %v1067 = vpack.c.bf16 %v1061, %v1061
  %v1069 = vlaneseq
  %v1070 = vshrl.u32 %v1069, 7
  %v1071 = vsub.s32 0, %v1070
  %v1072 = vrot.slane %v1066, %v1071
  %v1078 = vunpack.c.l.b16 %v1062
  %v1079 = vunpack.c.l.b16 %v1063
  %v1080 = vunpack.c.l.b16 %v1064
  %v1081 = vunpack.c.l.b16 %v1065
  %v1082 = vpack.c.b16 %v1079, %v1078
  %v1083 = vpack.c.b16 %v1081, %v1080
  %v1087 = vsel %vm70, %v1067, 0
  %1089 = vmatprep.subr.bf16.mxu0 0
  %1090 = vmatpush1.bf16.msra.mxu0 %v1082
  %1091 = vmatprep.subr.bf16.mxu0 0
  %1092 = vmatpush1.bf16.msra.mxu0 %v1083
  %1093 = vmatprep.subr.bf16.mxu0 0
  %1094 = vmatpush1.bf16.msra.mxu0 0
  %1095 = vmatprep.subr.bf16.mxu0 0
  %1096 = vmatpush1.bf16.msra.mxu0 0
  %1097 = vmatprep.subr.bf16.mxu0 0
  %1098 = vmatpush1.bf16.msra.mxu0 0
  %1099 = vmatprep.subr.bf16.mxu0 0
  %1100 = vmatpush1.bf16.msra.mxu0 0
  %1101 = vmatprep.subr.bf16.mxu0 0
  %1102 = vmatpush1.bf16.msra.mxu0 0
  %1103 = vmatprep.subr.bf16.mxu0 0
  %1104 = vmatpush1.bf16.msra.mxu0 0
  %1105 = vmatprep.subr.bf16.mxu0 0
  %1106 = vmatpush1.bf16.msra.mxu0 0
  %1107 = vmatprep.subr.bf16.mxu0 0
  %1108 = vmatpush1.bf16.msra.mxu0 0
  %1109 = vmatprep.subr.bf16.mxu0 0
  %1110 = vmatpush1.bf16.msra.mxu0 0
  %1111 = vmatprep.subr.bf16.mxu0 0
  %1112 = vmatpush1.bf16.msra.mxu0 0
  %1113 = vmatprep.subr.bf16.mxu0 0
  %1114 = vmatpush1.bf16.msra.mxu0 0
  %1115 = vmatprep.subr.bf16.mxu0 0
  %1116 = vmatpush1.bf16.msra.mxu0 0
  %1117 = vmatprep.subr.bf16.mxu0 0
  %1118 = vmatpush1.bf16.msra.mxu0 0
  %1119 = vmatprep.subr.bf16.mxu0 0
  %1120 = vmatpush1.bf16.msra.mxu0 0
  %1121 = vmatprep.mubr.bf16.mxu0 0
  %1122 = vmatmul.mubr.bf16.gmra.mrb[0].mxu0 %v1087
  %v1123 = vpop.f32.mrb[0].mxu0
  %v1124 = vadd.f32 %v1072, %v1123
  %v1125 = vpop.f32.mrb[0].mxu0
  %v1126 = vpop.f32.mrb[0].mxu0
  %v1127 = vpop.f32.mrb[0].mxu0
  %1128 = vdwg.mxu0
  %v1129 = vmax.f32 %v1124, 0.0
  %1131 = vrot.lane.b32.xlu0 %v1067, 96
  %v1132 = vpop.permute.xlu0 %1131
  %v1134 = vsel %vm70, %v1132, 0
  %1136 = vmatprep.subr.bf16.mxu0 0
  %1137 = vmatpush1.bf16.msra.mxu0 %v1082
  %1138 = vmatprep.subr.bf16.mxu0 0
  %1139 = vmatpush1.bf16.msra.mxu0 %v1083
  %1140 = vmatprep.subr.bf16.mxu0 0
  %1141 = vmatpush1.bf16.msra.mxu0 0
  %1142 = vmatprep.subr.bf16.mxu0 0
  %1143 = vmatpush1.bf16.msra.mxu0 0
  %1144 = vmatprep.subr.bf16.mxu0 0
  %1145 = vmatpush1.bf16.msra.mxu0 0
  %1146 = vmatprep.subr.bf16.mxu0 0
  %1147 = vmatpush1.bf16.msra.mxu0 0
  %1148 = vmatprep.subr.bf16.mxu0 0
  %1149 = vmatpush1.bf16.msra.mxu0 0
  %1150 = vmatprep.subr.bf16.mxu0 0
  %1151 = vmatpush1.bf16.msra.mxu0 0
  %1152 = vmatprep.subr.bf16.mxu0 0
  %1153 = vmatpush1.bf16.msra.mxu0 0
  %1154 = vmatprep.subr.bf16.mxu0 0
  %1155 = vmatpush1.bf16.msra.mxu0 0
  %1156 = vmatprep.subr.bf16.mxu0 0
  %1157 = vmatpush1.bf16.msra.mxu0 0
  %1158 = vmatprep.subr.bf16.mxu0 0
  %1159 = vmatpush1.bf16.msra.mxu0 0
  %1160 = vmatprep.subr.bf16.mxu0 0
  %1161 = vmatpush1.bf16.msra.mxu0 0
  %1162 = vmatprep.subr.bf16.mxu0 0
  %1163 = vmatpush1.bf16.msra.mxu0 0
  %1164 = vmatprep.subr.bf16.mxu0 0
  %1165 = vmatpush1.bf16.msra.mxu0 0
  %1166 = vmatprep.subr.bf16.mxu0 0
  %1167 = vmatpush1.bf16.msra.mxu0 0
  %1168 = vmatprep.mubr.bf16.mxu0 0
  %1169 = vmatmul.mubr.bf16.gmra.mrb[0].mxu0 %v1134
  %v1170 = vpop.f32.mrb[0].mxu0
  %v1171 = vadd.f32 %v1072, %v1170
  %v1172 = vpop.f32.mrb[0].mxu0
  %v1173 = vpop.f32.mrb[0].mxu0
  %v1174 = vpop.f32.mrb[0].mxu0
  %1175 = vdwg.mxu0
  %v1176 = vmax.f32 %v1171, 0.0
  %v1177 = vld [vmem:[%s3] sm:$0xf]
  %v1178 = vld [vmem:[%s3 + $0x4] sm:$0xf]
  %v1179 = vld [vmem:[%s3 + $0x8] sm:$0xf]
  %v1180 = vld [vmem:[%s3 + $0xc] sm:$0xf]
  %v1181 = vld [vmem:[%s4] sm:$0xf]
  %v1182 = vld [vmem:[%s4 + $0x4] sm:$0xf]
  %v1183 = vld [vmem:[%s4 + $0x8] sm:$0xf]
  %v1184 = vld [vmem:[%s4 + $0xc] sm:$0xf]
  %v1185 = vpack.c.bf16 %v1129, %v1129
  %v1190 = vunpack.c.l.b16 %v1177
  %v1191 = vunpack.c.l.b16 %v1178
  %v1192 = vunpack.c.l.b16 %v1179
  %v1193 = vunpack.c.l.b16 %v1180
  %v1194 = vpack.c.b16 %v1191, %v1190
  %v1195 = vpack.c.b16 %v1193, %v1192
  %v1199 = vsel %vm70, %v1185, 0
  %1201 = vmatprep.subr.bf16.mxu0 0
  %1202 = vmatpush1.bf16.msra.mxu0 %v1194
  %1203 = vmatprep.subr.bf16.mxu0 0
  %1204 = vmatpush1.bf16.msra.mxu0 %v1195
  %1205 = vmatprep.subr.bf16.mxu0 0
  %1206 = vmatpush1.bf16.msra.mxu0 0
  %1207 = vmatprep.subr.bf16.mxu0 0
  %1208 = vmatpush1.bf16.msra.mxu0 0
  %1209 = vmatprep.subr.bf16.mxu0 0
  %1210 = vmatpush1.bf16.msra.mxu0 0
  %1211 = vmatprep.subr.bf16.mxu0 0
  %1212 = vmatpush1.bf16.msra.mxu0 0
  %1213 = vmatprep.subr.bf16.mxu0 0
  %1214 = vmatpush1.bf16.msra.mxu0 0
  %1215 = vmatprep.subr.bf16.mxu0 0
  %1216 = vmatpush1.bf16.msra.mxu0 0
  %1217 = vmatprep.subr.bf16.mxu0 0
  %1218 = vmatpush1.bf16.msra.mxu0 0
  %1219 = vmatprep.subr.bf16.mxu0 0
  %1220 = vmatpush1.bf16.msra.mxu0 0
  %1221 = vmatprep.subr.bf16.mxu0 0
  %1222 = vmatpush1.bf16.msra.mxu0 0
  %1223 = vmatprep.subr.bf16.mxu0 0
  %1224 = vmatpush1.bf16.msra.mxu0 0
  %1225 = vmatprep.subr.bf16.mxu0 0
  %1226 = vmatpush1.bf16.msra.mxu0 0
  %1227 = vmatprep.subr.bf16.mxu0 0
  %1228 = vmatpush1.bf16.msra.mxu0 0
  %1229 = vmatprep.subr.bf16.mxu0 0
  %1230 = vmatpush1.bf16.msra.mxu0 0
  %1231 = vmatprep.subr.bf16.mxu0 0
  %1232 = vmatpush1.bf16.msra.mxu0 0
  %1233 = vmatprep.mubr.bf16.mxu0 0
  %1234 = vmatmul.mubr.bf16.gmra.mrb[0].mxu0 %v1199
  %v1235 = vpop.f32.mrb[0].mxu0
  %v1236 = vadd.f32 0.0, %v1235
  %v1237 = vpop.f32.mrb[0].mxu0
  %v1238 = vpop.f32.mrb[0].mxu0
  %v1239 = vpop.f32.mrb[0].mxu0
  %1240 = vdwg.mxu0
  %s1241 = scalar_lea.vmem [#allocation2], 32
  %1242 = vst.msk [vmem:[%s1241 + $0x18] sm:$0xff] %vm70, %v1236
  %1244 = vrot.lane.b32.xlu0 %v1185, 96
  %v1245 = vpop.permute.xlu0 %1244
  %v1250 = vunpack.c.l.b16 %v1181
  %v1251 = vunpack.c.l.b16 %v1182
  %v1252 = vunpack.c.l.b16 %v1183
  %v1253 = vunpack.c.l.b16 %v1184
  %v1254 = vpack.c.b16 %v1251, %v1250
  %v1255 = vpack.c.b16 %v1253, %v1252
  %v1259 = vsel %vm70, %v1245, 0
  %1261 = vmatprep.subr.bf16.mxu0 0
  %1262 = vmatpush1.bf16.msra.mxu0 %v1254
  %1263 = vmatprep.subr.bf16.mxu0 0
  %1264 = vmatpush1.bf16.msra.mxu0 %v1255
  %1265 = vmatprep.subr.bf16.mxu0 0
  %1266 = vmatpush1.bf16.msra.mxu0 0
  %1267 = vmatprep.subr.bf16.mxu0 0
  %1268 = vmatpush1.bf16.msra.mxu0 0
  %1269 = vmatprep.subr.bf16.mxu0 0
  %1270 = vmatpush1.bf16.msra.mxu0 0
  %1271 = vmatprep.subr.bf16.mxu0 0
  %1272 = vmatpush1.bf16.msra.mxu0 0
  %1273 = vmatprep.subr.bf16.mxu0 0
  %1274 = vmatpush1.bf16.msra.mxu0 0
  %1275 = vmatprep.subr.bf16.mxu0 0
  %1276 = vmatpush1.bf16.msra.mxu0 0
  %1277 = vmatprep.subr.bf16.mxu0 0
  %1278 = vmatpush1.bf16.msra.mxu0 0
  %1279 = vmatprep.subr.bf16.mxu0 0
  %1280 = vmatpush1.bf16.msra.mxu0 0
  %1281 = vmatprep.subr.bf16.mxu0 0
  %1282 = vmatpush1.bf16.msra.mxu0 0
  %1283 = vmatprep.subr.bf16.mxu0 0
  %1284 = vmatpush1.bf16.msra.mxu0 0
  %1285 = vmatprep.subr.bf16.mxu0 0
  %1286 = vmatpush1.bf16.msra.mxu0 0
  %1287 = vmatprep.subr.bf16.mxu0 0
  %1288 = vmatpush1.bf16.msra.mxu0 0
  %1289 = vmatprep.subr.bf16.mxu0 0
  %1290 = vmatpush1.bf16.msra.mxu0 0
  %1291 = vmatprep.subr.bf16.mxu0 0
  %1292 = vmatpush1.bf16.msra.mxu0 0
  %1293 = vmatprep.mubr.bf16.mxu0 0
  %1294 = vmatmul.mubr.bf16.gmra.mrb[0].mxu0 %v1259
  %v1295 = vpop.f32.mrb[0].mxu0
  %v1296 = vadd.f32 0.0, %v1295
  %v1297 = vpop.f32.mrb[0].mxu0
  %v1298 = vpop.f32.mrb[0].mxu0
  %v1299 = vpop.f32.mrb[0].mxu0
  %1300 = vdwg.mxu0
  %1302 = vrot.lane.b32.xlu0 %v1296, 32
  %v1303 = vpop.permute.xlu0 %1302
  %1305 = vst.msk [vmem:[%s1241 + $0x18] sm:$0xff] %vm289, %v1303
  %v1306 = vpack.c.bf16 %v1176, %v1176
  %v1308 = vsel %vm70, %v1306, 0
  %1310 = vmatprep.subr.bf16.mxu0 0
  %1311 = vmatpush1.bf16.msra.mxu0 %v1194
  %1312 = vmatprep.subr.bf16.mxu0 0
  %1313 = vmatpush1.bf16.msra.mxu0 %v1195
  %1314 = vmatprep.subr.bf16.mxu0 0
  %1315 = vmatpush1.bf16.msra.mxu0 0
  %1316 = vmatprep.subr.bf16.mxu0 0
  %1317 = vmatpush1.bf16.msra.mxu0 0
  %1318 = vmatprep.subr.bf16.mxu0 0
  %1319 = vmatpush1.bf16.msra.mxu0 0
  %1320 = vmatprep.subr.bf16.mxu0 0
  %1321 = vmatpush1.bf16.msra.mxu0 0
  %1322 = vmatprep.subr.bf16.mxu0 0
  %1323 = vmatpush1.bf16.msra.mxu0 0
  %1324 = vmatprep.subr.bf16.mxu0 0
  %1325 = vmatpush1.bf16.msra.mxu0 0
  %1326 = vmatprep.subr.bf16.mxu0 0
  %1327 = vmatpush1.bf16.msra.mxu0 0
  %1328 = vmatprep.subr.bf16.mxu0 0
  %1329 = vmatpush1.bf16.msra.mxu0 0
  %1330 = vmatprep.subr.bf16.mxu0 0
  %1331 = vmatpush1.bf16.msra.mxu0 0
  %1332 = vmatprep.subr.bf16.mxu0 0
  %1333 = vmatpush1.bf16.msra.mxu0 0
  %1334 = vmatprep.subr.bf16.mxu0 0
  %1335 = vmatpush1.bf16.msra.mxu0 0
  %1336 = vmatprep.subr.bf16.mxu0 0
  %1337 = vmatpush1.bf16.msra.mxu0 0
  %1338 = vmatprep.subr.bf16.mxu0 0
  %1339 = vmatpush1.bf16.msra.mxu0 0
  %1340 = vmatprep.subr.bf16.mxu0 0
  %1341 = vmatpush1.bf16.msra.mxu0 0
  %1342 = vmatprep.mubr.bf16.mxu0 0
  %1343 = vmatmul.mubr.bf16.gmra.mrb[0].mxu0 %v1308
  %v1344 = vpop.f32.mrb[0].mxu0
  %v1345 = vadd.f32 0.0, %v1344
  %v1346 = vpop.f32.mrb[0].mxu0
  %v1347 = vpop.f32.mrb[0].mxu0
  %v1348 = vpop.f32.mrb[0].mxu0
  %1349 = vdwg.mxu0
  %1351 = vrot.lane.b32.xlu0 %v1345, 64
  %v1352 = vpop.permute.xlu0 %1351
  %1354 = vst.msk [vmem:[%s1241 + $0x18] sm:$0xff] %vm339, %v1352
  %1356 = vrot.lane.b32.xlu0 %v1306, 96
  %v1357 = vpop.permute.xlu0 %1356
  %v1359 = vsel %vm70, %v1357, 0
  %1361 = vmatprep.subr.bf16.mxu0 0
  %1362 = vmatpush1.bf16.msra.mxu0 %v1254
  %1363 = vmatprep.subr.bf16.mxu0 0
  %1364 = vmatpush1.bf16.msra.mxu0 %v1255
  %1365 = vmatprep.subr.bf16.mxu0 0
  %1366 = vmatpush1.bf16.msra.mxu0 0
  %1367 = vmatprep.subr.bf16.mxu0 0
  %1368 = vmatpush1.bf16.msra.mxu0 0
  %1369 = vmatprep.subr.bf16.mxu0 0
  %1370 = vmatpush1.bf16.msra.mxu0 0
  %1371 = vmatprep.subr.bf16.mxu0 0
  %1372 = vmatpush1.bf16.msra.mxu0 0
  %1373 = vmatprep.subr.bf16.mxu0 0
  %1374 = vmatpush1.bf16.msra.mxu0 0
  %1375 = vmatprep.subr.bf16.mxu0 0
  %1376 = vmatpush1.bf16.msra.mxu0 0
  %1377 = vmatprep.subr.bf16.mxu0 0
  %1378 = vmatpush1.bf16.msra.mxu0 0
  %1379 = vmatprep.subr.bf16.mxu0 0
  %1380 = vmatpush1.bf16.msra.mxu0 0
  %1381 = vmatprep.subr.bf16.mxu0 0
  %1382 = vmatpush1.bf16.msra.mxu0 0
  %1383 = vmatprep.subr.bf16.mxu0 0
  %1384 = vmatpush1.bf16.msra.mxu0 0
  %1385 = vmatprep.subr.bf16.mxu0 0
  %1386 = vmatpush1.bf16.msra.mxu0 0
  %1387 = vmatprep.subr.bf16.mxu0 0
  %1388 = vmatpush1.bf16.msra.mxu0 0
  %1389 = vmatprep.subr.bf16.mxu0 0
  %1390 = vmatpush1.bf16.msra.mxu0 0
  %1391 = vmatprep.subr.bf16.mxu0 0
  %1392 = vmatpush1.bf16.msra.mxu0 0
  %1393 = vmatprep.mubr.bf16.mxu0 0
  %1394 = vmatmul.mubr.bf16.gmra.mrb[0].mxu0 %v1359
  %v1395 = vpop.f32.mrb[0].mxu0
  %v1396 = vadd.f32 0.0, %v1395
  %v1397 = vpop.f32.mrb[0].mxu0
  %v1398 = vpop.f32.mrb[0].mxu0
  %v1399 = vpop.f32.mrb[0].mxu0
  %1400 = vdwg.mxu0
  %1402 = vrot.lane.b32.xlu0 %v1396, 96
  %v1403 = vpop.permute.xlu0 %1402
  %1405 = vst.msk [vmem:[%s1241 + $0x18] sm:$0xff] %vm391, %v1403
  %v1406 = vld [vmem:[%s5] sm:$0xff]
  %v1407 = vld [vmem:[%s5 + $0x8] sm:$0xff]
  %v1408 = vld [vmem:[%s5 + $0x10] sm:$0xf]
  %v1409 = vld [vmem:[%s1241 + $0x5] sm:$0xff]
  %v1410 = vlaneseq
  %v1411 = vshrl.u32 %v1410, 7
  %v1412 = vsub.s32 0, %v1411
  %v1413 = vrot.slane %v1406, %v1412
  %v1414 = vmul.f32 %v1413, %v1409
  %v1415 = vld [vmem:[%s1241 + $0x9] sm:$0xff]
  %v1416 = vlaneseq
  %v1417 = vshrl.u32 %v1416, 7
  %v1418 = vsub.s32 4, %v1417
  %v1419 = vrot.slane %v1406, %v1418
  %v1420 = vmul.f32 %v1419, %v1415
  %v1421 = vadd.f32 %v1414, %v1420
  %v1422 = vld [vmem:[%s1241 + $0xd] sm:$0xff]
  %v1423 = vlaneseq
  %v1424 = vshrl.u32 %v1423, 7
  %v1425 = vsub.s32 0, %v1424
  %v1426 = vrot.slane %v1407, %v1425
  %v1427 = vmul.f32 %v1426, %v1422
  %v1428 = vadd.f32 %v1421, %v1427
  %v1429 = vld [vmem:[%s1241 + $0x11] sm:$0xff]
  %v1430 = vlaneseq
  %v1431 = vshrl.u32 %v1430, 7
  %v1432 = vsub.s32 4, %v1431
  %v1433 = vrot.slane %v1407, %v1432
  %v1434 = vmul.f32 %v1433, %v1429
  %v1435 = vadd.f32 %v1428, %v1434
  %v1436 = vld [vmem:[%s1241 + $0x15] sm:$0xff]
  %v1437 = vlaneseq
  %v1438 = vshrl.u32 %v1437, 7
  %v1439 = vsub.s32 0, %v1438
  %v1440 = vrot.slane %v1408, %v1439
  %v1441 = vmul.f32 %v1440, %v1436
  %v1442 = vadd.f32 %v1435, %v1441
  %v1443 = vld [vmem:[%s1241 + $0x6] sm:$0xff]
  %v1444 = vlaneseq
  %v1445 = vshrl.u32 %v1444, 7
  %v1446 = vsub.s32 1, %v1445
  %v1447 = vrot.slane %v1406, %v1446
  %v1448 = vmul.f32 %v1447, %v1443
  %v1449 = vld [vmem:[%s1241 + $0xa] sm:$0xff]
  %v1450 = vlaneseq
  %v1451 = vshrl.u32 %v1450, 7
  %v1452 = vsub.s32 5, %v1451
  %v1453 = vrot.slane %v1406, %v1452
  %v1454 = vmul.f32 %v1453, %v1449
  %v1455 = vadd.f32 %v1448, %v1454
  %v1456 = vld [vmem:[%s1241 + $0xe] sm:$0xff]
  %v1457 = vlaneseq
  %v1458 = vshrl.u32 %v1457, 7
  %v1459 = vsub.s32 1, %v1458
  %v1460 = vrot.slane %v1407, %v1459
  %v1461 = vmul.f32 %v1460, %v1456
  %v1462 = vadd.f32 %v1455, %v1461
  %v1463 = vld [vmem:[%s1241 + $0x12] sm:$0xff]
  %v1464 = vlaneseq
  %v1465 = vshrl.u32 %v1464, 7
  %v1466 = vsub.s32 5, %v1465
  %v1467 = vrot.slane %v1407, %v1466
  %v1468 = vmul.f32 %v1467, %v1463
  %v1469 = vadd.f32 %v1462, %v1468
  %v1470 = vld [vmem:[%s1241 + $0x16] sm:$0xff]
  %v1471 = vlaneseq
  %v1472 = vshrl.u32 %v1471, 7
  %v1473 = vsub.s32 1, %v1472
  %v1474 = vrot.slane %v1408, %v1473
  %v1475 = vmul.f32 %v1474, %v1470
  %v1476 = vadd.f32 %v1469, %v1475
  %v1477 = vld [vmem:[%s1241 + $0x7] sm:$0xff]
  %v1478 = vlaneseq
  %v1479 = vshrl.u32 %v1478, 7
  %v1480 = vsub.s32 2, %v1479
  %v1481 = vrot.slane %v1406, %v1480
  %v1482 = vmul.f32 %v1481, %v1477
  %v1483 = vld [vmem:[%s1241 + $0xb] sm:$0xff]
  %v1484 = vlaneseq
  %v1485 = vshrl.u32 %v1484, 7
  %v1486 = vsub.s32 6, %v1485
  %v1487 = vrot.slane %v1406, %v1486
  %v1488 = vmul.f32 %v1487, %v1483
  %v1489 = vadd.f32 %v1482, %v1488
  %v1490 = vld [vmem:[%s1241 + $0xf] sm:$0xff]
  %v1491 = vlaneseq
  %v1492 = vshrl.u32 %v1491, 7
  %v1493 = vsub.s32 2, %v1492
  %v1494 = vrot.slane %v1407, %v1493
  %v1495 = vmul.f32 %v1494, %v1490
  %v1496 = vadd.f32 %v1489, %v1495
  %v1497 = vld [vmem:[%s1241 + $0x13] sm:$0xff]
  %v1498 = vlaneseq
  %v1499 = vshrl.u32 %v1498, 7
  %v1500 = vsub.s32 6, %v1499
  %v1501 = vrot.slane %v1407, %v1500
  %v1502 = vmul.f32 %v1501, %v1497
  %v1503 = vadd.f32 %v1496, %v1502
  %v1504 = vld [vmem:[%s1241 + $0x17] sm:$0xff]
  %v1505 = vlaneseq
  %v1506 = vshrl.u32 %v1505, 7
  %v1507 = vsub.s32 2, %v1506
  %v1508 = vrot.slane %v1408, %v1507
  %v1509 = vmul.f32 %v1508, %v1504
  %v1510 = vadd.f32 %v1503, %v1509
  %v1511 = vld [vmem:[%s1241 + $0x8] sm:$0xff]
  %v1512 = vlaneseq
  %v1513 = vshrl.u32 %v1512, 7
  %v1514 = vsub.s32 3, %v1513
  %v1515 = vrot.slane %v1406, %v1514
  %v1516 = vmul.f32 %v1515, %v1511
  %v1517 = vld [vmem:[%s1241 + $0xc] sm:$0xff]
  %v1518 = vlaneseq
  %v1519 = vshrl.u32 %v1518, 7
  %v1520 = vsub.s32 7, %v1519
  %v1521 = vrot.slane %v1406, %v1520
  %v1522 = vmul.f32 %v1521, %v1517
  %v1523 = vadd.f32 %v1516, %v1522
  %v1524 = vld [vmem:[%s1241 + $0x10] sm:$0xff]
  %v1525 = vlaneseq
  %v1526 = vshrl.u32 %v1525, 7
  %v1527 = vsub.s32 3, %v1526
  %v1528 = vrot.slane %v1407, %v1527
  %v1529 = vmul.f32 %v1528, %v1524
  %v1530 = vadd.f32 %v1523, %v1529
  %v1531 = vld [vmem:[%s1241 + $0x14] sm:$0xff]
  %v1532 = vlaneseq
  %v1533 = vshrl.u32 %v1532, 7
  %v1534 = vsub.s32 7, %v1533
  %v1535 = vrot.slane %v1407, %v1534
  %v1536 = vmul.f32 %v1535, %v1531
  %v1537 = vadd.f32 %v1530, %v1536
  %v1538 = vld [vmem:[%s1241 + $0x18] sm:$0xff]
  %v1539 = vlaneseq
  %v1540 = vshrl.u32 %v1539, 7
  %v1541 = vsub.s32 3, %v1540
  %v1542 = vrot.slane %v1408, %v1541
  %v1543 = vmul.f32 %v1542, %v1538
  %v1544 = vadd.f32 %v1537, %v1543
  %v1545 = vadd.f32 %v1442, %v1476
  %v1546 = vadd.f32 %v1510, %v1544
  %v1547 = vadd.f32 %v1545, %v1546
  %1549 = vrot.lane.b32.xlu0 %v1061, 96
  %v1550 = vpop.permute.xlu0 %1549
  %v1552 = vsub.f32 %v1061, %v1550
  %v1553 = vadd.f32 %v1552, %v1547
  %1555 = vrot.lane.b32.xlu0 %v1547, 32
  %v1556 = vpop.permute.xlu0 %1555
  %v1558 = vsub.f32 %v1553, %v1556
  %v1559 = vadd.f32 %v1061, %v1550
  %1560 = vrot.lane.b32.xlu0 %v1547, 64
  %v1561 = vpop.permute.xlu0 %1560
  %v1563 = vadd.f32 %v1559, %v1561
  %1564 = vrot.lane.b32.xlu0 %v1547, 96
  %v1565 = vpop.permute.xlu0 %1564
  %v1567 = vadd.f32 %v1563, %v1565
  %v1568 = vld [vmem:[%s6] sm:$0xf]
  %v1569 = vld [vmem:[%s6 + $0x4] sm:$0xf]
  %v1570 = vld [vmem:[%s6 + $0x8] sm:$0xf]
  %v1571 = vld [vmem:[%s6 + $0xc] sm:$0xf]
  %v1572 = vld [vmem:[%s7] sm:$0x1]
  %v1573 = vpack.c.bf16 %v1558, %v1558
  %v1575 = vlaneseq
  %v1576 = vshrl.u32 %v1575, 7
  %v1577 = vsub.s32 0, %v1576
  %v1578 = vrot.slane %v1572, %v1577
  %v1584 = vunpack.c.l.b16 %v1568
  %v1585 = vunpack.c.l.b16 %v1569
  %v1586 = vunpack.c.l.b16 %v1570
  %v1587 = vunpack.c.l.b16 %v1571
  %v1588 = vpack.c.b16 %v1585, %v1584
  %v1589 = vpack.c.b16 %v1587, %v1586
  %v1593 = vsel %vm70, %v1573, 0
  %1595 = vmatprep.subr.bf16.mxu0 0
  %1596 = vmatpush1.bf16.msra.mxu0 %v1588
  %1597 = vmatprep.subr.bf16.mxu0 0
  %1598 = vmatpush1.bf16.msra.mxu0 %v1589
  %1599 = vmatprep.subr.bf16.mxu0 0
  %1600 = vmatpush1.bf16.msra.mxu0 0
  %1601 = vmatprep.subr.bf16.mxu0 0
  %1602 = vmatpush1.bf16.msra.mxu0 0
  %1603 = vmatprep.subr.bf16.mxu0 0
  %1604 = vmatpush1.bf16.msra.mxu0 0
  %1605 = vmatprep.subr.bf16.mxu0 0
  %1606 = vmatpush1.bf16.msra.mxu0 0
  %1607 = vmatprep.subr.bf16.mxu0 0
  %1608 = vmatpush1.bf16.msra.mxu0 0
  %1609 = vmatprep.subr.bf16.mxu0 0
  %1610 = vmatpush1.bf16.msra.mxu0 0
  %1611 = vmatprep.subr.bf16.mxu0 0
  %1612 = vmatpush1.bf16.msra.mxu0 0
  %1613 = vmatprep.subr.bf16.mxu0 0
  %1614 = vmatpush1.bf16.msra.mxu0 0
  %1615 = vmatprep.subr.bf16.mxu0 0
  %1616 = vmatpush1.bf16.msra.mxu0 0
  %1617 = vmatprep.subr.bf16.mxu0 0
  %1618 = vmatpush1.bf16.msra.mxu0 0
  %1619 = vmatprep.subr.bf16.mxu0 0
  %1620 = vmatpush1.bf16.msra.mxu0 0
  %1621 = vmatprep.subr.bf16.mxu0 0
  %1622 = vmatpush1.bf16.msra.mxu0 0
  %1623 = vmatprep.subr.bf16.mxu0 0
  %1624 = vmatpush1.bf16.msra.mxu0 0
  %1625 = vmatprep.subr.bf16.mxu0 0
  %1626 = vmatpush1.bf16.msra.mxu0 0
  %1627 = vmatprep.mubr.bf16.mxu0 0
  %1628 = vmatmul.mubr.bf16.gmra.mrb[0].mxu0 %v1593
  %v1629 = vpop.f32.mrb[0].mxu0
  %v1630 = vadd.f32 %v1578, %v1629
  %v1631 = vpop.f32.mrb[0].mxu0
  %v1632 = vpop.f32.mrb[0].mxu0
  %v1633 = vpop.f32.mrb[0].mxu0
  %1634 = vdwg.mxu0
  %v1635 = vmax.f32 %v1630, 0.0
  %v1636 = vpack.c.bf16 %v1567, %v1567
  %v1638 = vsel %vm70, %v1636, 0
  %1640 = vmatprep.subr.bf16.mxu0 0
  %1641 = vmatpush1.bf16.msra.mxu0 %v1588
  %1642 = vmatprep.subr.bf16.mxu0 0
  %1643 = vmatpush1.bf16.msra.mxu0 %v1589
  %1644 = vmatprep.subr.bf16.mxu0 0
  %1645 = vmatpush1.bf16.msra.mxu0 0
  %1646 = vmatprep.subr.bf16.mxu0 0
  %1647 = vmatpush1.bf16.msra.mxu0 0
  %1648 = vmatprep.subr.bf16.mxu0 0
  %1649 = vmatpush1.bf16.msra.mxu0 0
  %1650 = vmatprep.subr.bf16.mxu0 0
  %1651 = vmatpush1.bf16.msra.mxu0 0
  %1652 = vmatprep.subr.bf16.mxu0 0
  %1653 = vmatpush1.bf16.msra.mxu0 0
  %1654 = vmatprep.subr.bf16.mxu0 0
  %1655 = vmatpush1.bf16.msra.mxu0 0
  %1656 = vmatprep.subr.bf16.mxu0 0
  %1657 = vmatpush1.bf16.msra.mxu0 0
  %1658 = vmatprep.subr.bf16.mxu0 0
  %1659 = vmatpush1.bf16.msra.mxu0 0
  %1660 = vmatprep.subr.bf16.mxu0 0
  %1661 = vmatpush1.bf16.msra.mxu0 0
  %1662 = vmatprep.subr.bf16.mxu0 0
  %1663 = vmatpush1.bf16.msra.mxu0 0
  %1664 = vmatprep.subr.bf16.mxu0 0
  %1665 = vmatpush1.bf16.msra.mxu0 0
  %1666 = vmatprep.subr.bf16.mxu0 0
  %1667 = vmatpush1.bf16.msra.mxu0 0
  %1668 = vmatprep.subr.bf16.mxu0 0
  %1669 = vmatpush1.bf16.msra.mxu0 0
  %1670 = vmatprep.subr.bf16.mxu0 0
  %1671 = vmatpush1.bf16.msra.mxu0 0
  %1672 = vmatprep.mubr.bf16.mxu0 0
  %1673 = vmatmul.mubr.bf16.gmra.mrb[0].mxu0 %v1638
  %v1674 = vpop.f32.mrb[0].mxu0
  %v1675 = vadd.f32 %v1578, %v1674
  %v1676 = vpop.f32.mrb[0].mxu0
  %v1677 = vpop.f32.mrb[0].mxu0
  %v1678 = vpop.f32.mrb[0].mxu0
  %1679 = vdwg.mxu0
  %v1680 = vmax.f32 %v1675, 0.0
  %v1681 = vld [vmem:[%s8] sm:$0xf]
  %v1682 = vld [vmem:[%s8 + $0x4] sm:$0xf]
  %v1683 = vld [vmem:[%s8 + $0x8] sm:$0xf]
  %v1684 = vld [vmem:[%s8 + $0xc] sm:$0xf]
  %v1685 = vld [vmem:[%s9] sm:$0xf]
  %v1686 = vld [vmem:[%s9 + $0x4] sm:$0xf]
  %v1687 = vld [vmem:[%s9 + $0x8] sm:$0xf]
  %v1688 = vld [vmem:[%s9 + $0xc] sm:$0xf]
  %v1689 = vpack.c.bf16 %v1635, %v1635
  %v1694 = vunpack.c.l.b16 %v1681
  %v1695 = vunpack.c.l.b16 %v1682
  %v1696 = vunpack.c.l.b16 %v1683
  %v1697 = vunpack.c.l.b16 %v1684
  %v1698 = vpack.c.b16 %v1695, %v1694
  %v1699 = vpack.c.b16 %v1697, %v1696
  %v1703 = vsel %vm70, %v1689, 0
  %1705 = vmatprep.subr.bf16.mxu0 0
  %1706 = vmatpush1.bf16.msra.mxu0 %v1698
  %1707 = vmatprep.subr.bf16.mxu0 0
  %1708 = vmatpush1.bf16.msra.mxu0 %v1699
  %1709 = vmatprep.subr.bf16.mxu0 0
  %1710 = vmatpush1.bf16.msra.mxu0 0
  %1711 = vmatprep.subr.bf16.mxu0 0
  %1712 = vmatpush1.bf16.msra.mxu0 0
  %1713 = vmatprep.subr.bf16.mxu0 0
  %1714 = vmatpush1.bf16.msra.mxu0 0
  %1715 = vmatprep.subr.bf16.mxu0 0
  %1716 = vmatpush1.bf16.msra.mxu0 0
  %1717 = vmatprep.subr.bf16.mxu0 0
  %1718 = vmatpush1.bf16.msra.mxu0 0
  %1719 = vmatprep.subr.bf16.mxu0 0
  %1720 = vmatpush1.bf16.msra.mxu0 0
  %1721 = vmatprep.subr.bf16.mxu0 0
  %1722 = vmatpush1.bf16.msra.mxu0 0
  %1723 = vmatprep.subr.bf16.mxu0 0
  %1724 = vmatpush1.bf16.msra.mxu0 0
  %1725 = vmatprep.subr.bf16.mxu0 0
  %1726 = vmatpush1.bf16.msra.mxu0 0
  %1727 = vmatprep.subr.bf16.mxu0 0
  %1728 = vmatpush1.bf16.msra.mxu0 0
  %1729 = vmatprep.subr.bf16.mxu0 0
  %1730 = vmatpush1.bf16.msra.mxu0 0
  %1731 = vmatprep.subr.bf16.mxu0 0
  %1732 = vmatpush1.bf16.msra.mxu0 0
  %1733 = vmatprep.subr.bf16.mxu0 0
  %1734 = vmatpush1.bf16.msra.mxu0 0
  %1735 = vmatprep.subr.bf16.mxu0 0
  %1736 = vmatpush1.bf16.msra.mxu0 0
  %1737 = vmatprep.mubr.bf16.mxu0 0
  %1738 = vmatmul.mubr.bf16.gmra.mrb[0].mxu0 %v1703
  %v1739 = vpop.f32.mrb[0].mxu0
  %v1740 = vadd.f32 0.0, %v1739
  %v1741 = vpop.f32.mrb[0].mxu0
  %v1742 = vpop.f32.mrb[0].mxu0
  %v1743 = vpop.f32.mrb[0].mxu0
  %1744 = vdwg.mxu0
  %1745 = vst.msk [vmem:[%s1241 + $0x18] sm:$0xff] %vm70, %v1740
  %1747 = vrot.lane.b32.xlu0 %v1689, 96
  %v1748 = vpop.permute.xlu0 %1747
  %v1753 = vunpack.c.l.b16 %v1685
  %v1754 = vunpack.c.l.b16 %v1686
  %v1755 = vunpack.c.l.b16 %v1687
  %v1756 = vunpack.c.l.b16 %v1688
  %v1757 = vpack.c.b16 %v1754, %v1753
  %v1758 = vpack.c.b16 %v1756, %v1755
  %v1762 = vsel %vm70, %v1748, 0
  %1764 = vmatprep.subr.bf16.mxu0 0
  %1765 = vmatpush1.bf16.msra.mxu0 %v1757
  %1766 = vmatprep.subr.bf16.mxu0 0
  %1767 = vmatpush1.bf16.msra.mxu0 %v1758
  %1768 = vmatprep.subr.bf16.mxu0 0
  %1769 = vmatpush1.bf16.msra.mxu0 0
  %1770 = vmatprep.subr.bf16.mxu0 0
  %1771 = vmatpush1.bf16.msra.mxu0 0
  %1772 = vmatprep.subr.bf16.mxu0 0
  %1773 = vmatpush1.bf16.msra.mxu0 0
  %1774 = vmatprep.subr.bf16.mxu0 0
  %1775 = vmatpush1.bf16.msra.mxu0 0
  %1776 = vmatprep.subr.bf16.mxu0 0
  %1777 = vmatpush1.bf16.msra.mxu0 0
  %1778 = vmatprep.subr.bf16.mxu0 0
  %1779 = vmatpush1.bf16.msra.mxu0 0
  %1780 = vmatprep.subr.bf16.mxu0 0
  %1781 = vmatpush1.bf16.msra.mxu0 0
  %1782 = vmatprep.subr.bf16.mxu0 0
  %1783 = vmatpush1.bf16.msra.mxu0 0
  %1784 = vmatprep.subr.bf16.mxu0 0
  %1785 = vmatpush1.bf16.msra.mxu0 0
  %1786 = vmatprep.subr.bf16.mxu0 0
  %1787 = vmatpush1.bf16.msra.mxu0 0
  %1788 = vmatprep.subr.bf16.mxu0 0
  %1789 = vmatpush1.bf16.msra.mxu0 0
  %1790 = vmatprep.subr.bf16.mxu0 0
  %1791 = vmatpush1.bf16.msra.mxu0 0
  %1792 = vmatprep.subr.bf16.mxu0 0
  %1793 = vmatpush1.bf16.msra.mxu0 0
  %1794 = vmatprep.subr.bf16.mxu0 0
  %1795 = vmatpush1.bf16.msra.mxu0 0
  %1796 = vmatprep.mubr.bf16.mxu0 0
  %1797 = vmatmul.mubr.bf16.gmra.mrb[0].mxu0 %v1762
  %v1798 = vpop.f32.mrb[0].mxu0
  %v1799 = vadd.f32 0.0, %v1798
  %v1800 = vpop.f32.mrb[0].mxu0
  %v1801 = vpop.f32.mrb[0].mxu0
  %v1802 = vpop.f32.mrb[0].mxu0
  %1803 = vdwg.mxu0
  %1805 = vrot.lane.b32.xlu0 %v1799, 32
  %v1806 = vpop.permute.xlu0 %1805
  %1808 = vst.msk [vmem:[%s1241 + $0x18] sm:$0xff] %vm289, %v1806
  %v1809 = vpack.c.bf16 %v1680, %v1680
  %v1811 = vsel %vm70, %v1809, 0
  %1813 = vmatprep.subr.bf16.mxu0 0
  %1814 = vmatpush1.bf16.msra.mxu0 %v1698
  %1815 = vmatprep.subr.bf16.mxu0 0
  %1816 = vmatpush1.bf16.msra.mxu0 %v1699
  %1817 = vmatprep.subr.bf16.mxu0 0
  %1818 = vmatpush1.bf16.msra.mxu0 0
  %1819 = vmatprep.subr.bf16.mxu0 0
  %1820 = vmatpush1.bf16.msra.mxu0 0
  %1821 = vmatprep.subr.bf16.mxu0 0
  %1822 = vmatpush1.bf16.msra.mxu0 0
  %1823 = vmatprep.subr.bf16.mxu0 0
  %1824 = vmatpush1.bf16.msra.mxu0 0
  %1825 = vmatprep.subr.bf16.mxu0 0
  %1826 = vmatpush1.bf16.msra.mxu0 0
  %1827 = vmatprep.subr.bf16.mxu0 0
  %1828 = vmatpush1.bf16.msra.mxu0 0
  %1829 = vmatprep.subr.bf16.mxu0 0
  %1830 = vmatpush1.bf16.msra.mxu0 0
  %1831 = vmatprep.subr.bf16.mxu0 0
  %1832 = vmatpush1.bf16.msra.mxu0 0
  %1833 = vmatprep.subr.bf16.mxu0 0
  %1834 = vmatpush1.bf16.msra.mxu0 0
  %1835 = vmatprep.subr.bf16.mxu0 0
  %1836 = vmatpush1.bf16.msra.mxu0 0
  %1837 = vmatprep.subr.bf16.mxu0 0
  %1838 = vmatpush1.bf16.msra.mxu0 0
  %1839 = vmatprep.subr.bf16.mxu0 0
  %1840 = vmatpush1.bf16.msra.mxu0 0
  %1841 = vmatprep.subr.bf16.mxu0 0
  %1842 = vmatpush1.bf16.msra.mxu0 0
  %1843 = vmatprep.subr.bf16.mxu0 0
  %1844 = vmatpush1.bf16.msra.mxu0 0
  %1845 = vmatprep.mubr.bf16.mxu0 0
  %1846 = vmatmul.mubr.bf16.gmra.mrb[0].mxu0 %v1811
  %v1847 = vpop.f32.mrb[0].mxu0
  %v1848 = vadd.f32 0.0, %v1847
  %v1849 = vpop.f32.mrb[0].mxu0
  %v1850 = vpop.f32.mrb[0].mxu0
  %v1851 = vpop.f32.mrb[0].mxu0
  %1852 = vdwg.mxu0
  %1854 = vrot.lane.b32.xlu0 %v1848, 64
  %v1855 = vpop.permute.xlu0 %1854
  %1857 = vst.msk [vmem:[%s1241 + $0x18] sm:$0xff] %vm339, %v1855
  %1859 = vrot.lane.b32.xlu0 %v1809, 96
  %v1860 = vpop.permute.xlu0 %1859
  %v1862 = vsel %vm70, %v1860, 0
  %1864 = vmatprep.subr.bf16.mxu0 0
  %1865 = vmatpush1.bf16.msra.mxu0 %v1757
  %1866 = vmatprep.subr.bf16.mxu0 0
  %1867 = vmatpush1.bf16.msra.mxu0 %v1758
  %1868 = vmatprep.subr.bf16.mxu0 0
  %1869 = vmatpush1.bf16.msra.mxu0 0
  %1870 = vmatprep.subr.bf16.mxu0 0
  %1871 = vmatpush1.bf16.msra.mxu0 0
  %1872 = vmatprep.subr.bf16.mxu0 0
  %1873 = vmatpush1.bf16.msra.mxu0 0
  %1874 = vmatprep.subr.bf16.mxu0 0
  %1875 = vmatpush1.bf16.msra.mxu0 0
  %1876 = vmatprep.subr.bf16.mxu0 0
  %1877 = vmatpush1.bf16.msra.mxu0 0
  %1878 = vmatprep.subr.bf16.mxu0 0
  %1879 = vmatpush1.bf16.msra.mxu0 0
  %1880 = vmatprep.subr.bf16.mxu0 0
  %1881 = vmatpush1.bf16.msra.mxu0 0
  %1882 = vmatprep.subr.bf16.mxu0 0
  %1883 = vmatpush1.bf16.msra.mxu0 0
  %1884 = vmatprep.subr.bf16.mxu0 0
  %1885 = vmatpush1.bf16.msra.mxu0 0
  %1886 = vmatprep.subr.bf16.mxu0 0
  %1887 = vmatpush1.bf16.msra.mxu0 0
  %1888 = vmatprep.subr.bf16.mxu0 0
  %1889 = vmatpush1.bf16.msra.mxu0 0
  %1890 = vmatprep.subr.bf16.mxu0 0
  %1891 = vmatpush1.bf16.msra.mxu0 0
  %1892 = vmatprep.subr.bf16.mxu0 0
  %1893 = vmatpush1.bf16.msra.mxu0 0
  %1894 = vmatprep.subr.bf16.mxu0 0
  %1895 = vmatpush1.bf16.msra.mxu0 0
  %1896 = vmatprep.mubr.bf16.mxu0 0
  %1897 = vmatmul.mubr.bf16.gmra.mrb[0].mxu0 %v1862
  %v1898 = vpop.f32.mrb[0].mxu0
  %v1899 = vadd.f32 0.0, %v1898
  %v1900 = vpop.f32.mrb[0].mxu0
  %v1901 = vpop.f32.mrb[0].mxu0
  %v1902 = vpop.f32.mrb[0].mxu0
  %1903 = vdwg.mxu0
  %1905 = vrot.lane.b32.xlu0 %v1899, 96
  %v1906 = vpop.permute.xlu0 %1905
  %1908 = vst.msk [vmem:[%s1241 + $0x18] sm:$0xff] %vm391, %v1906
  %v1909 = vld [vmem:[%s10] sm:$0xff]
  %v1910 = vld [vmem:[%s10 + $0x8] sm:$0xff]
  %v1911 = vld [vmem:[%s10 + $0x10] sm:$0xf]
  %v1912 = vld [vmem:[%s1241 + $0x5] sm:$0xff]
  %v1913 = vlaneseq
  %v1914 = vshrl.u32 %v1913, 7
  %v1915 = vsub.s32 0, %v1914
  %v1916 = vrot.slane %v1909, %v1915
  %v1917 = vmul.f32 %v1916, %v1912
  %v1918 = vld [vmem:[%s1241 + $0x9] sm:$0xff]
  %v1919 = vlaneseq
  %v1920 = vshrl.u32 %v1919, 7
  %v1921 = vsub.s32 4, %v1920
  %v1922 = vrot.slane %v1909, %v1921
  %v1923 = vmul.f32 %v1922, %v1918
  %v1924 = vadd.f32 %v1917, %v1923
  %v1925 = vld [vmem:[%s1241 + $0xd] sm:$0xff]
  %v1926 = vlaneseq
  %v1927 = vshrl.u32 %v1926, 7
  %v1928 = vsub.s32 0, %v1927
  %v1929 = vrot.slane %v1910, %v1928
  %v1930 = vmul.f32 %v1929, %v1925
  %v1931 = vadd.f32 %v1924, %v1930
  %v1932 = vld [vmem:[%s1241 + $0x11] sm:$0xff]
  %v1933 = vlaneseq
  %v1934 = vshrl.u32 %v1933, 7
  %v1935 = vsub.s32 4, %v1934
  %v1936 = vrot.slane %v1910, %v1935
  %v1937 = vmul.f32 %v1936, %v1932
  %v1938 = vadd.f32 %v1931, %v1937
  %v1939 = vld [vmem:[%s1241 + $0x15] sm:$0xff]
  %v1940 = vlaneseq
  %v1941 = vshrl.u32 %v1940, 7
  %v1942 = vsub.s32 0, %v1941
  %v1943 = vrot.slane %v1911, %v1942
  %v1944 = vmul.f32 %v1943, %v1939
  %v1945 = vadd.f32 %v1938, %v1944
  %v1946 = vld [vmem:[%s1241 + $0x6] sm:$0xff]
  %v1947 = vlaneseq
  %v1948 = vshrl.u32 %v1947, 7
  %v1949 = vsub.s32 1, %v1948
  %v1950 = vrot.slane %v1909, %v1949
  %v1951 = vmul.f32 %v1950, %v1946
  %v1952 = vld [vmem:[%s1241 + $0xa] sm:$0xff]
  %v1953 = vlaneseq
  %v1954 = vshrl.u32 %v1953, 7
  %v1955 = vsub.s32 5, %v1954
  %v1956 = vrot.slane %v1909, %v1955
  %v1957 = vmul.f32 %v1956, %v1952
  %v1958 = vadd.f32 %v1951, %v1957
  %v1959 = vld [vmem:[%s1241 + $0xe] sm:$0xff]
  %v1960 = vlaneseq
  %v1961 = vshrl.u32 %v1960, 7
  %v1962 = vsub.s32 1, %v1961
  %v1963 = vrot.slane %v1910, %v1962
  %v1964 = vmul.f32 %v1963, %v1959
  %v1965 = vadd.f32 %v1958, %v1964
  %v1966 = vld [vmem:[%s1241 + $0x12] sm:$0xff]
  %v1967 = vlaneseq
  %v1968 = vshrl.u32 %v1967, 7
  %v1969 = vsub.s32 5, %v1968
  %v1970 = vrot.slane %v1910, %v1969
  %v1971 = vmul.f32 %v1970, %v1966
  %v1972 = vadd.f32 %v1965, %v1971
  %v1973 = vld [vmem:[%s1241 + $0x16] sm:$0xff]
  %v1974 = vlaneseq
  %v1975 = vshrl.u32 %v1974, 7
  %v1976 = vsub.s32 1, %v1975
  %v1977 = vrot.slane %v1911, %v1976
  %v1978 = vmul.f32 %v1977, %v1973
  %v1979 = vadd.f32 %v1972, %v1978
  %v1980 = vld [vmem:[%s1241 + $0x7] sm:$0xff]
  %v1981 = vlaneseq
  %v1982 = vshrl.u32 %v1981, 7
  %v1983 = vsub.s32 2, %v1982
  %v1984 = vrot.slane %v1909, %v1983
  %v1985 = vmul.f32 %v1984, %v1980
  %v1986 = vld [vmem:[%s1241 + $0xb] sm:$0xff]
  %v1987 = vlaneseq
  %v1988 = vshrl.u32 %v1987, 7
  %v1989 = vsub.s32 6, %v1988
  %v1990 = vrot.slane %v1909, %v1989
  %v1991 = vmul.f32 %v1990, %v1986
  %v1992 = vadd.f32 %v1985, %v1991
  %v1993 = vld [vmem:[%s1241 + $0xf] sm:$0xff]
  %v1994 = vlaneseq
  %v1995 = vshrl.u32 %v1994, 7
  %v1996 = vsub.s32 2, %v1995
  %v1997 = vrot.slane %v1910, %v1996
  %v1998 = vmul.f32 %v1997, %v1993
  %v1999 = vadd.f32 %v1992, %v1998
  %v2000 = vld [vmem:[%s1241 + $0x13] sm:$0xff]
  %v2001 = vlaneseq
  %v2002 = vshrl.u32 %v2001, 7
  %v2003 = vsub.s32 6, %v2002
  %v2004 = vrot.slane %v1910, %v2003
  %v2005 = vmul.f32 %v2004, %v2000
  %v2006 = vadd.f32 %v1999, %v2005
  %v2007 = vld [vmem:[%s1241 + $0x17] sm:$0xff]
  %v2008 = vlaneseq
  %v2009 = vshrl.u32 %v2008, 7
  %v2010 = vsub.s32 2, %v2009
  %v2011 = vrot.slane %v1911, %v2010
  %v2012 = vmul.f32 %v2011, %v2007
  %v2013 = vadd.f32 %v2006, %v2012
  %v2014 = vld [vmem:[%s1241 + $0x8] sm:$0xff]
  %v2015 = vlaneseq
  %v2016 = vshrl.u32 %v2015, 7
  %v2017 = vsub.s32 3, %v2016
  %v2018 = vrot.slane %v1909, %v2017
  %v2019 = vmul.f32 %v2018, %v2014
  %v2020 = vld [vmem:[%s1241 + $0xc] sm:$0xff]
  %v2021 = vlaneseq
  %v2022 = vshrl.u32 %v2021, 7
  %v2023 = vsub.s32 7, %v2022
  %v2024 = vrot.slane %v1909, %v2023
  %v2025 = vmul.f32 %v2024, %v2020
  %v2026 = vadd.f32 %v2019, %v2025
  %v2027 = vld [vmem:[%s1241 + $0x10] sm:$0xff]
  %v2028 = vlaneseq
  %v2029 = vshrl.u32 %v2028, 7
  %v2030 = vsub.s32 3, %v2029
  %v2031 = vrot.slane %v1910, %v2030
  %v2032 = vmul.f32 %v2031, %v2027
  %v2033 = vadd.f32 %v2026, %v2032
  %v2034 = vld [vmem:[%s1241 + $0x14] sm:$0xff]
  %v2035 = vlaneseq
  %v2036 = vshrl.u32 %v2035, 7
  %v2037 = vsub.s32 7, %v2036
  %v2038 = vrot.slane %v1910, %v2037
  %v2039 = vmul.f32 %v2038, %v2034
  %v2040 = vadd.f32 %v2033, %v2039
  %v2041 = vld [vmem:[%s1241 + $0x18] sm:$0xff]
  %v2042 = vlaneseq
  %v2043 = vshrl.u32 %v2042, 7
  %v2044 = vsub.s32 3, %v2043
  %v2045 = vrot.slane %v1911, %v2044
  %v2046 = vmul.f32 %v2045, %v2041
  %v2047 = vadd.f32 %v2040, %v2046
  %v2048 = vadd.f32 %v1945, %v1979
  %v2049 = vadd.f32 %v2013, %v2047
  %v2050 = vadd.f32 %v2048, %v2049
  %v2051 = vsub.f32 %v1558, %v1567
  %v2052 = vadd.f32 %v2051, %v2050
  %2054 = vrot.lane.b32.xlu0 %v2050, 32
  %v2055 = vpop.permute.xlu0 %2054
  %v2057 = vsub.f32 %v2052, %v2055
  %v2058 = vadd.f32 %v1558, %v1567
  %2059 = vrot.lane.b32.xlu0 %v2050, 64
  %v2060 = vpop.permute.xlu0 %2059
  %v2062 = vadd.f32 %v2058, %v2060
  %2063 = vrot.lane.b32.xlu0 %v2050, 96
  %v2064 = vpop.permute.xlu0 %2063
  %v2066 = vadd.f32 %v2062, %v2064
  %s2067 = scalar_lea.vmem %s11, 8
  %2068 = vst.msk [vmem:[%s2067] sm:$0xff] %vm70, %v2057
  %2070 = vrot.lane.b32.xlu0 %v2066, 32
  %v2071 = vpop.permute.xlu0 %2070
  %2073 = vst.msk [vmem:[%s2067] sm:$0xff] %vm289, %v2071
  // Predicated region
  $region46: #{complex_uni_deep_fsmn.1} parent=0 // pred_check
    _
  $region47: #{complex_uni_deep_fsmn.1} parent=0 // pred_check_branch
    %2075 = sbr.rel (0) target = $region49
  $region48: #{complex_uni_deep_fsmn.1} parent=0 // pred_region
    _
  $region49: #{complex_uni_deep_fsmn.1} parent=0 // pred_fallthru
    _
  // Predicated region
  $region50: #{complex_uni_deep_fsmn.1} parent=0 // pred_check
    _
  $region51: #{complex_uni_deep_fsmn.1} parent=0 // pred_check_branch
    %2077 = sbr.rel (0) target = $region53
  $region52: #{complex_uni_deep_fsmn.1} parent=0 // pred_region
    _
  $region53: #{complex_uni_deep_fsmn.1} parent=0 // pred_fallthru
    _

</llo_original>
